<compile_context>
chip_gen: v5e
topology: v5e:2x2
jax: 0.10.0
libtpu: 0.0.40
codegen_flags: <defaults>
</compile_context>

<pallas_src>
import functools

import jax
import jax.numpy as jnp
from jax.experimental import pallas as pl
from jax.experimental.pallas import tpu as pltpu


def _upsample_conv_kernel(x_ref, w_ref, b_ref, rcols_ref, o_ref,
                          xpad_ref, col_ref, *,
                          KH, KW, stride, pad, up, TR, Wo, Wph):
    """Grid = (batch, output-row tile).

    x_ref     : (1, Cin, H, W)          original input (resident per batch elem)
    w_ref     : (Cout, KH*KW*Cin)       weights, (kh, kw, cin) minor order
    b_ref     : (Cout, 1)               bias (f32)
    rcols_ref : (W, stride*Wph)         one-hot column upsample+reflect(+phase)
    o_ref     : (1, Cout, TR*Wo)        output row tile (lane-dense)
    xpad_ref  : (Cin, Hp, stride*Wph)   scratch: upsampled + padded image
    col_ref   : (KH*KW*Cin, TR*Wo)      scratch: per-tile im2col matrix
    """
    Cin, H, W = x_ref.shape[1], x_ref.shape[2], x_ref.shape[3]
    Hup = H * up
    sWph = rcols_ref.shape[1]
    cdt = xpad_ref.dtype

    # ---- build the upsampled + reflection-padded image once per batch element.
    @pl.when(pl.program_id(1) == 0)
    def _build_padded():
        x = x_ref[0].astype(cdt)                                   # (Cin, H, W)
        # columns: nearest upsample + reflect pad (+ stride phase split) via one
        # small MXU matmul against the host-built one-hot matrix (exact copy).
        xcol = jnp.dot(x.reshape(Cin * H, W), rcols_ref[...],
                       preferred_element_type=jnp.float32)
        xcol = xcol.astype(cdt).reshape(Cin, H, sWph)
        # rows: nearest upsample (duplicate sublanes), once per batch element.
        if up > 1:
            xcol = jnp.concatenate([xcol[:, :, None, :]] * up, axis=2)
            xcol = xcol.reshape(Cin, Hup, sWph)
        # rows: reflection pad (no edge repeat), small static concat.
        top = [xcol[:, p:p + 1, :] for p in range(pad, 0, -1)]
        bot = [xcol[:, Hup - 2 - t:Hup - 1 - t, :] for t in range(pad)]
        pieces = top + [xcol] + bot
        xpad_ref[...] = (jnp.concatenate(pieces, axis=1)
                         if len(pieces) > 1 else xcol)

    # ---- conv for this output-row tile: im2col into VMEM scratch, one MXU dot.
    r = pl.program_id(1)
    row0 = pl.multiple_of(r * (TR * stride), TR * stride)
    Hs = (TR - 1) * stride + KH                  # padded rows needed by the tile

    if stride == 1:
        # Hoist the (unaligned) lane slice out of the kh loop: one lane-offset
        # load per kw over all Hs halo rows, then cheap sublane windows per kh.
        for kw in range(KW):
            slab_kw = xpad_ref[:, pl.ds(row0, Hs), kw:kw + Wo]   # (Cin, Hs, Wo)
            for kh in range(KH):
                patch = slab_kw[:, kh:kh + TR, :]                # (Cin, TR, Wo)
                base = (kh * KW + kw) * Cin
                col_ref[base:base + Cin, :] = patch.reshape(Cin, TR * Wo)
    else:
        # One strided-sublane Ref read per (kh, kw); the host-built phase-split
        # column layout keeps every lane slice contiguous for any stride.
        for kh in range(KH):
            for kw in range(KW):
                c0 = (kw % stride) * Wph + (kw // stride)
                patch = xpad_ref[:, pl.ds(row0 + kh, TR, stride=stride),
                                 c0:c0 + Wo]                      # (Cin, TR, Wo)
                base = (kh * KW + kw) * Cin
                col_ref[base:base + Cin, :] = patch.reshape(Cin, TR * Wo)

    acc = jnp.dot(w_ref[...], col_ref[...],
                  preferred_element_type=jnp.float32)             # (Cout, TR*Wo)
    o_ref[0] = (acc + b_ref[...]).astype(o_ref.dtype)


def _reflect(u, n):
    """Reflection without edge repeat (ReflectionPad2d), single fold."""
    if u < 0:
        u = -u
    if u >= n:
        u = 2 * n - 2 - u
    return u


def _pick_row_tile(Ho, Wo, out_row_bytes, work_row_bytes, target_bytes,
                   max_work_bytes):
    """Row-tile height TR among divisors of Ho whose output block is lane dense
    (TR*Wo % 128 == 0, or the full output).  Prefer the smallest candidate
    whose output block reaches `target_bytes`; never exceed the per-tile VMEM
    budget `max_work_bytes` if any candidate fits it."""
    cands = [d for d in range(1, Ho + 1)
             if Ho % d == 0 and ((d * Wo) % 128 == 0 or d == Ho)]
    if not cands:
        return Ho
    fitting = [d for d in cands if d * work_row_bytes <= max_work_bytes]
    if not fitting:
        return cands[0]
    for d in fitting:
        if d * out_row_bytes >= target_bytes:
            return d
    return fitting[-1]


def upsample_conv_layer(x_nchw, w_oihw, bias, *, kernel_size, stride,
                        upsample=None, compute_dtype=None):
    """Pallas TPU implementation of UpsampleConvLayer.forward (NCHW in/out).

    compute_dtype=None (default) -> bfloat16 MXU compute with f32 accumulation;
    pass jnp.float32 for bit-accurate f32 compute.
    """
    N, Cin, H, W = x_nchw.shape
    Cout = w_oihw.shape[0]
    KH = KW = int(kernel_size)
    stride = int(stride)
    up = int(upsample) if upsample else 1
    pad = KH // 2

    Hup, Wup = H * up, W * up
    Hp, Wp = Hup + 2 * pad, Wup + 2 * pad
    Ho = (Hp - KH) // stride + 1
    Wo = (Wp - KW) // stride + 1
    assert pad < Hup and pad < Wup, "reflection pad must be < (upsampled) input"

    if compute_dtype is not None:
        cdt = jnp.dtype(compute_dtype)
    elif x_nchw.dtype == jnp.float32:
        cdt = jnp.dtype(jnp.bfloat16)   # default: fast bf16 MXU, f32 accumulate
    else:
        cdt = jnp.dtype(x_nchw.dtype)
    out_dtype = x_nchw.dtype
    out_isz = jnp.dtype(out_dtype).itemsize
    in_isz = jnp.dtype(x_nchw.dtype).itemsize
    csz = cdt.itemsize
    K = KH * KW * Cin

    # column map: padded column -> source input column, folding nearest
    # upsample, reflection pad and the stride phase split (phase pw occupies
    # lanes [pw*Wph, (pw+1)*Wph)); built host-side as a one-hot matrix.
    Wph = Wo + (KW - 1) // stride
    src_cols = []
    for pw in range(stride):
        for b_ in range(Wph):
            c = b_ * stride + pw
            src_cols.append(_reflect(c - pad, Wup) // up if c < Wp else 0)
    rcols = jax.nn.one_hot(jnp.asarray(src_cols, jnp.int32), W, dtype=cdt).T
    sWph = stride * Wph                                  # rcols: (W, sWph)

    # weights in (kh, kw, cin) minor order; bias as a column vector (f32).
    w2d = jnp.transpose(w_oihw, (0, 2, 3, 1)).reshape(Cout, K).astype(cdt)
    b2d = bias.reshape(Cout, 1).astype(jnp.float32)

    # ---- generation-aware VMEM budget (v5e/v6e: 128 MiB, v7x: 64 MiB).
    try:
        vmem_cap = int(getattr(pltpu.get_tpu_info(), "vmem_capacity_bytes",
                               128 * 2 ** 20))
    except Exception:
        vmem_cap = 128 * 2 ** 20
    vmem_limit = max(32 * 2 ** 20, int(0.85 * vmem_cap))

    # VMEM that does not scale with the row tile.
    fixed_bytes = (2 * Cin * H * W * in_isz          # double-buffered input
                   + Cin * Hp * sWph * csz           # padded-image scratch
                   + 2 * Cout * K * csz              # weights
                   + 2 * W * sWph * csz              # column one-hot map
                   + 2 * Cout * 4)                   # bias
    # VMEM per output row inside a tile (im2col scratch, double-buffered output,
    # f32 accumulator, transient patch values) with slack for compiler temps.
    work_row_bytes = int(1.5 * Wo * (K * csz + 2 * Cout * out_isz + Cout * 4
                                     + 2 * stride * Cin * csz))
    out_row_bytes = Wo * Cout * out_isz
    target_bytes = (1 << 20) if vmem_cap >= 96 * 2 ** 20 else (384 << 10)
    max_work_bytes = max(work_row_bytes,
                         int(0.7 * vmem_limit) - fixed_bytes)
    TR = _pick_row_tile(Ho, Wo, out_row_bytes, work_row_bytes, target_bytes,
                        max_work_bytes)
    R = Ho // TR

    kernel = functools.partial(
        _upsample_conv_kernel,
        KH=KH, KW=KW, stride=stride, pad=pad, up=up, TR=TR, Wo=Wo, Wph=Wph)

    cost = pl.CostEstimate(
        flops=2 * N * (Ho * Wo * Cout * K + Cin * H * W * sWph),
        transcendentals=0,
        bytes_accessed=int(x_nchw.size * in_isz + Cout * K * csz
                           + W * sWph * csz + Cout * 4
                           + N * Cout * Ho * Wo * out_isz),
    )

    out3 = pl.pallas_call(
        kernel,
        out_shape=jax.ShapeDtypeStruct((N, Cout, Ho * Wo), out_dtype),
        grid_spec=pltpu.PrefetchScalarGridSpec(
            num_scalar_prefetch=0,
            grid=(N, R),
            in_specs=[
                pl.BlockSpec((1, Cin, H, W), lambda n, r: (n, 0, 0, 0)),
                pl.BlockSpec((Cout, K), lambda n, r: (0, 0)),
                pl.BlockSpec((Cout, 1), lambda n, r: (0, 0)),
                pl.BlockSpec((W, sWph), lambda n, r: (0, 0)),
            ],
            out_specs=pl.BlockSpec((1, Cout, TR * Wo), lambda n, r: (n, 0, r)),
            scratch_shapes=[
                pltpu.VMEM((Cin, Hp, sWph), cdt),     # padded image (per batch)
                pltpu.VMEM((K, TR * Wo), cdt),        # per-tile im2col matrix
            ],
        ),
        compiler_params=pltpu.CompilerParams(
            # row tiles of one batch element share the padded-image scratch
            # (built at r == 0), so that axis must stay "arbitrary".
            dimension_semantics=("parallel", "arbitrary"),
            vmem_limit_bytes=vmem_limit,
        ),
        cost_estimate=cost,
    )(x_nchw, w2d, b2d, rcols)

    # (N, Cout, Ho*Wo) -> (N, Cout, Ho, Wo): free trailing-dim split, NCHW out.
    return out3.reshape(N, Cout, Ho, Wo)


def _reference(x_nchw, w_oihw, bias, *, kernel_size, stride, upsample=None):
    """Pure-JAX reference (lax conv) for correctness checking."""
    x = x_nchw
    if upsample:
        x = jnp.repeat(jnp.repeat(x, upsample, axis=2), upsample, axis=3)
    pad = int(kernel_size) // 2
    if pad:
        x = jnp.pad(x, ((0, 0), (0, 0), (pad, pad), (pad, pad)), mode="reflect")
    out = jax.lax.conv_general_dilated(
        x, w_oihw, window_strides=(stride, stride), padding="VALID",
        dimension_numbers=("NCHW", "OIHW", "NCHW"))
    return out + bias.reshape(1, -1, 1, 1)


if __name__ == "__main__":
    key = jax.random.PRNGKey(0)
    # (in_c, out_c, kernel, stride, upsample, compute_dtype, tol)
    configs = [
        (4, 8, 3, 1, 2, jnp.float32, 5e-4),     # canonical use, exact f32 path
        (4, 8, 3, 1, None, jnp.float32, 5e-4),  # no upsample
        (4, 8, 3, 2, None, jnp.float32, 5e-4),  # strided conv path
        (4, 8, 3, 1, 2, None, 5e-2),            # default path: bf16 MXU compute
    ]
    for (cin, cout, k, s, up, cdt, tol) in configs:
        kx, kw_, kb, key = jax.random.split(key, 4)
        x = jax.random.normal(kx, (2, cin, 16, 16), dtype=jnp.float32)
        w = 0.1 * jax.random.normal(kw_, (cout, cin, k, k), dtype=jnp.float32)
        b = 0.1 * jax.random.normal(kb, (cout,), dtype=jnp.float32)

        out = upsample_conv_layer(x, w, b, kernel_size=k, stride=s,
                                  upsample=up, compute_dtype=cdt)
        out = jax.block_until_ready(out)

        ref = _reference(x, w, b, kernel_size=k, stride=s, upsample=up)
        assert out.shape == ref.shape, (out.shape, ref.shape)
        err = float(jnp.max(jnp.abs(out.astype(jnp.float32) - ref)))
        assert err <= tol, ("config", cin, cout, k, s, up, str(cdt), "err", err)

    print("KERNEL_OK")
</pallas_src>

<mosaic_0001>
module attributes {stable_mosaic.version = 11 : i64} {
  func.func @_upsample_conv_kernel(%arg0: i32, %arg1: i32, %arg2: memref<1x4x16x16xf32, #tpu.memory_space<vmem>>, %arg3: memref<8x36xf32, #tpu.memory_space<vmem>>, %arg4: memref<8x1xf32, #tpu.memory_space<vmem>>, %arg5: memref<16x34xf32, #tpu.memory_space<vmem>>, %arg6: memref<1x8x1024xf32, #tpu.memory_space<vmem>>, %arg7: memref<4x34x34xf32, #tpu.memory_space<vmem>>, %arg8: memref<36x1024xf32, #tpu.memory_space<vmem>>) attributes {dimension_semantics = [#tpu.dimension_semantics<parallel>, #tpu.dimension_semantics<arbitrary>], iteration_bounds = array<i64: 2, 1>, scalar_prefetch = 0 : i64, scratch_operands = 2 : i64, tpu.core_type = #tpu.core_type<tc>, window_params = [{transform_indices = @transform_0, window_bounds = array<i64: 1, 4, 16, 16>}, {pipeline_mode = #tpu.pipeline_mode<synchronous>, transform_indices = @transform_1, window_bounds = array<i64: 8, 36>}, {pipeline_mode = #tpu.pipeline_mode<synchronous>, transform_indices = @transform_2, window_bounds = array<i64: 8, 1>}, {pipeline_mode = #tpu.pipeline_mode<synchronous>, transform_indices = @transform_3, window_bounds = array<i64: 16, 34>}, {transform_indices = @transform_4, window_bounds = array<i64: 1, 8, 1024>}]} {
    %c0_i32 = arith.constant 0 : i32
    %0 = arith.cmpi eq, %arg1, %c0_i32 : i32
    %1 = arith.extui %0 : i1 to i32
    %c0_i32_0 = arith.constant 0 : i32
    %2 = arith.cmpi ne, %1, %c0_i32_0 : i32
    scf.if %2 {
      %c0_23 = arith.constant 0 : index
      %c0_24 = arith.constant 0 : index
      %c0_25 = arith.constant 0 : index
      %c0_26 = arith.constant 0 : index
      %47 = vector.load %arg2[%c0_23, %c0_24, %c0_25, %c0_26] : memref<1x4x16x16xf32, #tpu.memory_space<vmem>>, vector<1x4x16x16xf32>
      %48 = vector.shape_cast %47 : vector<1x4x16x16xf32> to vector<4x16x16xf32>
      %49 = vector.shape_cast %48 : vector<4x16x16xf32> to vector<64x16xf32>
      %c0_27 = arith.constant 0 : index
      %c0_28 = arith.constant 0 : index
      %50 = vector.load %arg5[%c0_27, %c0_28] : memref<16x34xf32, #tpu.memory_space<vmem>>, vector<16x34xf32>
      %cst_29 = arith.constant dense<0.000000e+00> : vector<64x34xf32>
      %51 = tpu.matmul %49, %50, %cst_29 {dimension_numbers = #tpu.dot_dimension_numbers<[1], [0], [0], [1], [0, 0, 1, 1], [], []>} : vector<64x16xf32>, vector<16x34xf32>, vector<64x34xf32> -> vector<64x34xf32>
      %52 = vector.shape_cast %51 : vector<64x34xf32> to vector<4x16x34xf32>
      %53 = vector.shape_cast %52 : vector<4x16x34xf32> to vector<4x16x1x34xf32>
      %54 = tpu.concatenate %53, %53 in 2 : vector<4x16x1x34xf32>, vector<4x16x1x34xf32> -> vector<4x16x2x34xf32>
      %55 = vector.shape_cast %54 : vector<4x16x2x34xf32> to vector<4x32x34xf32>
      %56 = vector.extract_strided_slice %55 {offsets = [0, 1, 0], sizes = [4, 1, 34], strides = [1, 1, 1]} : vector<4x32x34xf32> to vector<4x1x34xf32>
      %57 = vector.extract_strided_slice %55 {offsets = [0, 30, 0], sizes = [4, 1, 34], strides = [1, 1, 1]} : vector<4x32x34xf32> to vector<4x1x34xf32>
      %58 = tpu.concatenate %56, %55, %57 in 1 : vector<4x1x34xf32>, vector<4x32x34xf32>, vector<4x1x34xf32> -> vector<4x34x34xf32>
      %c0_30 = arith.constant 0 : index
      %c0_31 = arith.constant 0 : index
      %c0_32 = arith.constant 0 : index
      %59 = vector.load %arg7[%c0_30, %c0_31, %c0_32] : memref<4x34x34xf32, #tpu.memory_space<vmem>>, vector<4x34x34xf32>
      tpu.vector_store %arg7[%c0_30, %c0_31, %c0_32], %58 {strides = array<i32>} : memref<4x34x34xf32, #tpu.memory_space<vmem>>, vector<4x34x34xf32>,
    } else {
    }
    %c32_i32 = arith.constant 32 : i32
    %3 = arith.muli %arg1, %c32_i32 : i32
    %4 = tpu.assume_multiple %3, 32 : i32
    %c0 = arith.constant 0 : index
    %5 = arith.index_cast %4 : i32 to index
    %c0_1 = arith.constant 0 : index
    %6 = vector.load %arg7[%c0, %5, %c0_1] : memref<4x34x34xf32, #tpu.memory_space<vmem>>, vector<4x34x32xf32>
    %7 = vector.extract_strided_slice %6 {offsets = [0, 0, 0], sizes = [4, 32, 32], strides = [1, 1, 1]} : vector<4x34x32xf32> to vector<4x32x32xf32>
    %8 = vector.shape_cast %7 : vector<4x32x32xf32> to vector<4x1024xf32>
    %c0_2 = arith.constant 0 : index
    %c0_3 = arith.constant 0 : index
    %9 = vector.load %arg8[%c0_2, %c0_3] : memref<36x1024xf32, #tpu.memory_space<vmem>>, vector<4x1024xf32>
    tpu.vector_store %arg8[%c0_2, %c0_3], %8 {strides = array<i32>} : memref<36x1024xf32, #tpu.memory_space<vmem>>, vector<4x1024xf32>,
    %10 = vector.extract_strided_slice %6 {offsets = [0, 1, 0], sizes = [4, 32, 32], strides = [1, 1, 1]} : vector<4x34x32xf32> to vector<4x32x32xf32>
    %11 = vector.shape_cast %10 : vector<4x32x32xf32> to vector<4x1024xf32>
    %c12 = arith.constant 12 : index
    %c0_4 = arith.constant 0 : index
    %12 = vector.load %arg8[%c12, %c0_4] : memref<36x1024xf32, #tpu.memory_space<vmem>>, vector<4x1024xf32>
    tpu.vector_store %arg8[%c12, %c0_4], %11 {strides = array<i32>} : memref<36x1024xf32, #tpu.memory_space<vmem>>, vector<4x1024xf32>,
    %13 = vector.extract_strided_slice %6 {offsets = [0, 2, 0], sizes = [4, 32, 32], strides = [1, 1, 1]} : vector<4x34x32xf32> to vector<4x32x32xf32>
    %14 = vector.shape_cast %13 : vector<4x32x32xf32> to vector<4x1024xf32>
    %c24 = arith.constant 24 : index
    %c0_5 = arith.constant 0 : index
    %15 = vector.load %arg8[%c24, %c0_5] : memref<36x1024xf32, #tpu.memory_space<vmem>>, vector<4x1024xf32>
    tpu.vector_store %arg8[%c24, %c0_5], %14 {strides = array<i32>} : memref<36x1024xf32, #tpu.memory_space<vmem>>, vector<4x1024xf32>,
    %c0_6 = arith.constant 0 : index
    %16 = arith.index_cast %4 : i32 to index
    %c1 = arith.constant 1 : index
    %17 = vector.load %arg7[%c0_6, %16, %c1] : memref<4x34x34xf32, #tpu.memory_space<vmem>>, vector<4x34x32xf32>
    %18 = vector.extract_strided_slice %17 {offsets = [0, 0, 0], sizes = [4, 32, 32], strides = [1, 1, 1]} : vector<4x34x32xf32> to vector<4x32x32xf32>
    %19 = vector.shape_cast %18 : vector<4x32x32xf32> to vector<4x1024xf32>
    %c4 = arith.constant 4 : index
    %c0_7 = arith.constant 0 : index
    %20 = vector.load %arg8[%c4, %c0_7] : memref<36x1024xf32, #tpu.memory_space<vmem>>, vector<4x1024xf32>
    tpu.vector_store %arg8[%c4, %c0_7], %19 {strides = array<i32>} : memref<36x1024xf32, #tpu.memory_space<vmem>>, vector<4x1024xf32>,
    %21 = vector.extract_strided_slice %17 {offsets = [0, 1, 0], sizes = [4, 32, 32], strides = [1, 1, 1]} : vector<4x34x32xf32> to vector<4x32x32xf32>
    %22 = vector.shape_cast %21 : vector<4x32x32xf32> to vector<4x1024xf32>
    %c16 = arith.constant 16 : index
    %c0_8 = arith.constant 0 : index
    %23 = vector.load %arg8[%c16, %c0_8] : memref<36x1024xf32, #tpu.memory_space<vmem>>, vector<4x1024xf32>
    tpu.vector_store %arg8[%c16, %c0_8], %22 {strides = array<i32>} : memref<36x1024xf32, #tpu.memory_space<vmem>>, vector<4x1024xf32>,
    %24 = vector.extract_strided_slice %17 {offsets = [0, 2, 0], sizes = [4, 32, 32], strides = [1, 1, 1]} : vector<4x34x32xf32> to vector<4x32x32xf32>
    %25 = vector.shape_cast %24 : vector<4x32x32xf32> to vector<4x1024xf32>
    %c28 = arith.constant 28 : index
    %c0_9 = arith.constant 0 : index
    %26 = vector.load %arg8[%c28, %c0_9] : memref<36x1024xf32, #tpu.memory_space<vmem>>, vector<4x1024xf32>
    tpu.vector_store %arg8[%c28, %c0_9], %25 {strides = array<i32>} : memref<36x1024xf32, #tpu.memory_space<vmem>>, vector<4x1024xf32>,
    %c0_10 = arith.constant 0 : index
    %27 = arith.index_cast %4 : i32 to index
    %c2 = arith.constant 2 : index
    %28 = vector.load %arg7[%c0_10, %27, %c2] : memref<4x34x34xf32, #tpu.memory_space<vmem>>, vector<4x34x32xf32>
    %29 = vector.extract_strided_slice %28 {offsets = [0, 0, 0], sizes = [4, 32, 32], strides = [1, 1, 1]} : vector<4x34x32xf32> to vector<4x32x32xf32>
    %30 = vector.shape_cast %29 : vector<4x32x32xf32> to vector<4x1024xf32>
    %c8 = arith.constant 8 : index
    %c0_11 = arith.constant 0 : index
    %31 = vector.load %arg8[%c8, %c0_11] : memref<36x1024xf32, #tpu.memory_space<vmem>>, vector<4x1024xf32>
    tpu.vector_store %arg8[%c8, %c0_11], %30 {strides = array<i32>} : memref<36x1024xf32, #tpu.memory_space<vmem>>, vector<4x1024xf32>,
    %32 = vector.extract_strided_slice %28 {offsets = [0, 1, 0], sizes = [4, 32, 32], strides = [1, 1, 1]} : vector<4x34x32xf32> to vector<4x32x32xf32>
    %33 = vector.shape_cast %32 : vector<4x32x32xf32> to vector<4x1024xf32>
    %c20 = arith.constant 20 : index
    %c0_12 = arith.constant 0 : index
    %34 = vector.load %arg8[%c20, %c0_12] : memref<36x1024xf32, #tpu.memory_space<vmem>>, vector<4x1024xf32>
    tpu.vector_store %arg8[%c20, %c0_12], %33 {strides = array<i32>} : memref<36x1024xf32, #tpu.memory_space<vmem>>, vector<4x1024xf32>,
    %35 = vector.extract_strided_slice %28 {offsets = [0, 2, 0], sizes = [4, 32, 32], strides = [1, 1, 1]} : vector<4x34x32xf32> to vector<4x32x32xf32>
    %36 = vector.shape_cast %35 : vector<4x32x32xf32> to vector<4x1024xf32>
    %c32 = arith.constant 32 : index
    %c0_13 = arith.constant 0 : index
    %37 = vector.load %arg8[%c32, %c0_13] : memref<36x1024xf32, #tpu.memory_space<vmem>>, vector<4x1024xf32>
    tpu.vector_store %arg8[%c32, %c0_13], %36 {strides = array<i32>} : memref<36x1024xf32, #tpu.memory_space<vmem>>, vector<4x1024xf32>,
    %c0_14 = arith.constant 0 : index
    %c0_15 = arith.constant 0 : index
    %38 = vector.load %arg3[%c0_14, %c0_15] : memref<8x36xf32, #tpu.memory_space<vmem>>, vector<8x36xf32>
    %c0_16 = arith.constant 0 : index
    %c0_17 = arith.constant 0 : index
    %39 = vector.load %arg8[%c0_16, %c0_17] : memref<36x1024xf32, #tpu.memory_space<vmem>>, vector<36x1024xf32>
    %cst = arith.constant dense<0.000000e+00> : vector<8x1024xf32>
    %40 = tpu.matmul %38, %39, %cst {dimension_numbers = #tpu.dot_dimension_numbers<[1], [0], [0], [1], [0, 0, 1, 1], [], []>} : vector<8x36xf32>, vector<36x1024xf32>, vector<8x1024xf32> -> vector<8x1024xf32>
    %c0_18 = arith.constant 0 : index
    %c0_19 = arith.constant 0 : index
    %41 = vector.load %arg4[%c0_18, %c0_19] : memref<8x1xf32, #tpu.memory_space<vmem>>, vector<8x1xf32>
    %42 = vector.broadcast %41 : vector<8x1xf32> to vector<8x1024xf32>
    %43 = arith.addf %40, %42 : vector<8x1024xf32>
    %c0_20 = arith.constant 0 : index
    %c0_21 = arith.constant 0 : index
    %c0_22 = arith.constant 0 : index
    %44 = vector.load %arg6[%c0_20, %c0_21, %c0_22] : memref<1x8x1024xf32, #tpu.memory_space<vmem>>, vector<1x8x1024xf32>
    %45 = vector.shape_cast %44 : vector<1x8x1024xf32> to vector<8x1024xf32>
    %46 = vector.shape_cast %43 : vector<8x1024xf32> to vector<1x8x1024xf32>
    tpu.vector_store %arg6[%c0_20, %c0_21, %c0_22], %46 {strides = array<i32>} : memref<1x8x1024xf32, #tpu.memory_space<vmem>>, vector<1x8x1024xf32>,
    return
  }
  func.func @transform_0(%arg0: i32, %arg1: i32) -> (i32, i32, i32, i32) {
    %c0_i32 = arith.constant 0 : i32
    %c0_i32_0 = arith.constant 0 : i32
    %c0_i32_1 = arith.constant 0 : i32
    %c0_i32_2 = arith.constant 0 : i32
    return %arg0, %c0_i32, %c0_i32_0, %c0_i32_1 : i32, i32, i32, i32
  }
  func.func @transform_1(%arg0: i32, %arg1: i32) -> (i32, i32) {
    %c0_i32 = arith.constant 0 : i32
    %c0_i32_0 = arith.constant 0 : i32
    %c0_i32_1 = arith.constant 0 : i32
    return %c0_i32, %c0_i32_0 : i32, i32
  }
  func.func @transform_2(%arg0: i32, %arg1: i32) -> (i32, i32) {
    %c0_i32 = arith.constant 0 : i32
    %c0_i32_0 = arith.constant 0 : i32
    %c0_i32_1 = arith.constant 0 : i32
    return %c0_i32, %c0_i32_0 : i32, i32
  }
  func.func @transform_3(%arg0: i32, %arg1: i32) -> (i32, i32) {
    %c0_i32 = arith.constant 0 : i32
    %c0_i32_0 = arith.constant 0 : i32
    %c0_i32_1 = arith.constant 0 : i32
    return %c0_i32, %c0_i32_0 : i32, i32
  }
  func.func @transform_4(%arg0: i32, %arg1: i32) -> (i32, i32, i32) {
    %c0_i32 = arith.constant 0 : i32
    %c0_i32_0 = arith.constant 0 : i32
    return %arg0, %c0_i32, %arg1 : i32, i32, i32
  }
}

</mosaic_0001>

<llo_original>
// kernel: tpu_custom_call.1
$region0: #{tpu_custom_call.1}
  #allocation0 [shape = 'u32[]', space=smem, size = 0x4, offset = 0x4, fixed_abs, tag = 'smem constant byte address 0x4 - core index']
  #allocation1 [shape = 'u32[72,128]{1,0:T(1,128)}', space=vmem, size = 0x9000, scoped, tag = 'internal scratch']
  #allocation2 [shape = 'f32[4,34,34]{2,1,0:T(8,128)}', space=vmem, size = 0x14000, scoped, tag = 'scratch operand']
  #allocation3 [shape = 'f32[36,1024]{1,0:T(8,128)}', space=vmem, size = 0x28000, scoped, tag = 'scratch operand']
  %s0 = inlined_call_operand.hbm [shape: f32[2,4,16,16], index: 0, kind: input, shape index: {}]
  %s1 = inlined_call_operand.vmem [shape: f32[8,36], index: 1, kind: input, shape index: {}]
  %s2 = inlined_call_operand.vmem [shape: f32[8,1], index: 2, kind: input, shape index: {}]
  %s3 = inlined_call_operand.hbm [shape: f32[16,34], index: 3, kind: input, shape index: {}]
  %s4 = inlined_call_operand.hbm [shape: f32[2,8,1024], index: 4, kind: output, shape index: {}]
  %s5 = sld [smem:[#allocation0]]
  $region61: #{tpu_custom_call.1} parent=0
    _
  %s7 = ssub.s32 1, %s5
  %s8 = scalar_select 0, %s7, %s5
  $region1: #{tpu_custom_call.1} parent=0
    #allocation4 [shape = 'u8[65536]{0}', space=vmem, size = 0x10000, scoped, tag = 'input window, operand 0']
    #allocation5 [shape = 's32[2]{0}', space=sflag, size = 0x8, scoped, tag = 'scoped memory for tpu_custom_call.1']
    #allocation6 [shape = 's32[2]{0}', space=sflag, size = 0x8, scoped, tag = 'scoped memory for tpu_custom_call.1']
    #allocation7 [shape = 'u8[8192]{0}', space=vmem, size = 0x2000, scoped, tag = 'input window, operand 3, single buffered']
    #allocation8 [shape = 's32[1]{0}', space=sflag, size = 0x4, scoped, tag = 'scoped memory for tpu_custom_call.1']
    #allocation9 [shape = 'u8[65536]{0}', space=vmem, size = 0x10000, scoped, tag = 'output window, operand 0']
    %9 = vsyncpa [#allocation5], 0
    %s10 = scalar_lea.sflag [#allocation5], 1
    %11 = vsyncpa %s10, 0
    %12 = vsyncpa [#allocation8], 0
    %13 = vsyncpa [#allocation6], 0
    %s14 = scalar_lea.sflag [#allocation6], 1
    %15 = vsyncpa %s14, 0
    loop: start=0, step=1, limit=4
    $region2: #{tpu_custom_call.1} parent=1 // loop_pre_header
      _
    $region3: #{tpu_custom_call.1} parent=1 // loop_header
      %s17 = sphi 0, %s21
      %p18 = scmp.ge.s32.totalorder %s17, 4
      %s24 = sphi 0, %s36
      %s25 = sphi 0, %s32
      %s26 = sphi 0, %s24
      %s27 = sphi 0, %s25
      %s28 = sphi 0, %s26
      %s29 = sphi 0, %s27
      %s39 = sphi 0, %s41
      %s42 = sphi 0, %s39
      %s43 = sphi 0, %s42
      %s59 = sphi 0, %s43
      %s63 = sphi 0, %s63
      %s65 = sphi 0, %s63
      %s66 = sphi 0, %s65
      %s80 = sphi 0, %s66
      %s84 = sphi 0, %s84
      %s86 = sphi 0, %s84
      %s87 = sphi 0, %s86
      %s101 = sphi 0, %s87
      %s105 = sphi 0, %s105
      %s107 = sphi 0, %s105
      %s108 = sphi 0, %s107
      %s122 = sphi 0, %s108
      %s130 = sphi 0, %s132
      %s133 = sphi 0, %s130
      %s134 = sphi 0, %s133
      %s150 = sphi 0, %s134
    $region4: #{tpu_custom_call.1} parent=1 // loop_header_branch
      %20 = sbr.rel (%p18) target = $region8
    $region5: #{tpu_custom_call.1} parent=1 // loop_body
      %s22 = ssub.s32 %s17, 1
      %s23 = ssub.s32 %s17, 2
      %s30 = sadd.s32 1, %s25
      %p31 = scmp.ge.s32.totalorder %s30, 1
      %s32 = scalar_select %p31, 0, %s30
      %s33 = sadd.s32 1, %s24
      %s34 = scalar_select %p31, %s33, %s24
      %p35 = scmp.ge.s32.totalorder %s34, 2
      %s36 = scalar_select %p35, 0, %s34
      %s37 = ssub.s32 %s24, %s36
      %p38 = scmp.eq.s32.totalorder %s37, 0
      %s40 = sadd.s32 %s39, 1
      %s41 = scalar_select %p38, %s39, %s40
      %p44 = pneg %p38
      %p45 = scmp.eq.s32.totalorder %s17, 1
      %p46 = por %p44, %p45
      %p47 = scmp.ne.s32.totalorder %s39, %s42
      %p48 = scmp.eq.s32.totalorder %s17, 0
      %p49 = por %p47, %p48
      %p50 = scmp.ne.s32.totalorder %s39, %s42
      %p51 = scmp.eq.s32.totalorder %s22, 1
      %p52 = por %p50, %p51
      %p53 = scmp.ne.s32.totalorder %s42, %s43
      %p54 = scmp.eq.s32.totalorder %s22, 0
      %p55 = por %p53, %p54
      %p56 = scmp.ne.s32.totalorder %s42, %s43
      %p57 = scmp.eq.s32.totalorder %s23, 1
      %p58 = por %p56, %p57
      %p60 = scmp.ne.s32.totalorder %s43, %s59
      %p61 = scmp.eq.s32.totalorder %s23, 0
      %p62 = por %p60, %p61
      %s64 = sadd.s32 %s63, 1
      %p67 = scmp.eq.s32.totalorder %s17, 1
      %p68 = scmp.ne.s32.totalorder %s63, %s65
      %p69 = scmp.eq.s32.totalorder %s17, 0
      %p70 = por %p68, %p69
      %p71 = scmp.ne.s32.totalorder %s63, %s65
      %p72 = scmp.eq.s32.totalorder %s22, 1
      %p73 = por %p71, %p72
      %p74 = scmp.ne.s32.totalorder %s65, %s66
      %p75 = scmp.eq.s32.totalorder %s22, 0
      %p76 = por %p74, %p75
      %p77 = scmp.ne.s32.totalorder %s65, %s66
      %p78 = scmp.eq.s32.totalorder %s23, 1
      %p79 = por %p77, %p78
      %p81 = scmp.ne.s32.totalorder %s66, %s80
      %p82 = scmp.eq.s32.totalorder %s23, 0
      %p83 = por %p81, %p82
      %s85 = sadd.s32 %s84, 1
      %p88 = scmp.eq.s32.totalorder %s17, 1
      %p89 = scmp.ne.s32.totalorder %s84, %s86
      %p90 = scmp.eq.s32.totalorder %s17, 0
      %p91 = por %p89, %p90
      %p92 = scmp.ne.s32.totalorder %s84, %s86
      %p93 = scmp.eq.s32.totalorder %s22, 1
      %p94 = por %p92, %p93
      %p95 = scmp.ne.s32.totalorder %s86, %s87
      %p96 = scmp.eq.s32.totalorder %s22, 0
      %p97 = por %p95, %p96
      %p98 = scmp.ne.s32.totalorder %s86, %s87
      %p99 = scmp.eq.s32.totalorder %s23, 1
      %p100 = por %p98, %p99
      %p102 = scmp.ne.s32.totalorder %s87, %s101
      %p103 = scmp.eq.s32.totalorder %s23, 0
      %p104 = por %p102, %p103
      %s106 = sadd.s32 %s105, 1
      %p109 = scmp.eq.s32.totalorder %s17, 1
      %p110 = scmp.ne.s32.totalorder %s105, %s107
      %p111 = scmp.eq.s32.totalorder %s17, 0
      %p112 = por %p110, %p111
      %p113 = scmp.ne.s32.totalorder %s105, %s107
      %p114 = scmp.eq.s32.totalorder %s22, 1
      %p115 = por %p113, %p114
      %p116 = scmp.ne.s32.totalorder %s107, %s108
      %p117 = scmp.eq.s32.totalorder %s22, 0
      %p118 = por %p116, %p117
      %p119 = scmp.ne.s32.totalorder %s107, %s108
      %p120 = scmp.eq.s32.totalorder %s23, 1
      %p121 = por %p119, %p120
      %p123 = scmp.ne.s32.totalorder %s108, %s122
      %p124 = scmp.eq.s32.totalorder %s23, 0
      %p125 = por %p123, %p124
      %s126 = ssub.s32 %s24, %s36
      %s127 = ssub.s32 %s25, %s32
      %s128 = sor.u32 %s126, %s127
      %p129 = scmp.eq.s32.totalorder %s128, 0
      %s131 = sadd.s32 %s130, 1
      %s132 = scalar_select %p129, %s130, %s131
      %p135 = pneg %p129
      %p136 = scmp.eq.s32.totalorder %s17, 1
      %p137 = por %p135, %p136
      %p138 = scmp.ne.s32.totalorder %s130, %s133
      %p139 = scmp.eq.s32.totalorder %s17, 0
      %p140 = por %p138, %p139
      %p141 = scmp.ne.s32.totalorder %s130, %s133
      %p142 = scmp.eq.s32.totalorder %s22, 1
      %p143 = por %p141, %p142
      %p144 = scmp.ne.s32.totalorder %s133, %s134
      %p145 = scmp.eq.s32.totalorder %s22, 0
      %p146 = por %p144, %p145
      %p147 = scmp.ne.s32.totalorder %s133, %s134
      %p148 = scmp.eq.s32.totalorder %s23, 1
      %p149 = por %p147, %p148
      %p151 = scmp.ne.s32.totalorder %s134, %s150
      %p152 = scmp.eq.s32.totalorder %s23, 0
      %p153 = por %p151, %p152
      %p154 = scmp.le.s32.totalorder 1, %s17
      %p155 = scmp.lt.s32.totalorder %s17, 3
      %p156 = pnand %p154, %p155
      %p157 = pneg %p156
      // Predicated region
      $region9: #{tpu_custom_call.1} parent=5 // pred_check
        _
      $region10: #{tpu_custom_call.1} parent=5 // pred_check_branch
        %159 = sbr.rel (%p156) target = $region12
      $region11: #{tpu_custom_call.1} parent=5 // pred_region
        %s160 = ssub.s32 %s17, 1
        // Predicated region
        $region13: #{tpu_custom_call.1} parent=11 // pred_check
          %p161 = pneg %p76
        $region14: #{tpu_custom_call.1} parent=11 // pred_check_branch
          %163 = sbr.rel (%p161) target = $region16
        $region15: #{tpu_custom_call.1} parent=11 // pred_region
          _
        $region16: #{tpu_custom_call.1} parent=11 // pred_fallthru
          _
        // Predicated region
        $region17: #{tpu_custom_call.1} parent=11 // pred_check
          %p164 = pneg %p97
        $region18: #{tpu_custom_call.1} parent=11 // pred_check_branch
          %166 = sbr.rel (%p164) target = $region20
        $region19: #{tpu_custom_call.1} parent=11 // pred_region
          _
        $region20: #{tpu_custom_call.1} parent=11 // pred_fallthru
          _
        // Predicated region
        $region21: #{tpu_custom_call.1} parent=11 // pred_check
          %p167 = pneg %p118
        $region22: #{tpu_custom_call.1} parent=11 // pred_check_branch
          %169 = sbr.rel (%p167) target = $region24
        $region23: #{tpu_custom_call.1} parent=11 // pred_region
          %171 = vsyncadd [#allocation8], 0
          %s172 = sshll.u32 %s3, 4
          %s173 = int_to_ptr.hbm [resolvable:$true] %s172
          %s174 = sshll.u32 [#allocation7], 4
          %s175 = int_to_ptr.vmem [resolvable:$true] %s174
          %180 = dma.hbm_to_vmem [thread:$0]  %s173, 256, %s175, [#allocation8], 128, 128, 8
        $region24: #{tpu_custom_call.1} parent=11 // pred_fallthru
          _
      $region12: #{tpu_custom_call.1} parent=5 // pred_fallthru
        _
      %p181 = scmp.lt.s32.totalorder %s17, 2
      // Predicated region
      $region25: #{tpu_custom_call.1} parent=5 // pred_check
        %p182 = pneg %p181
      $region26: #{tpu_custom_call.1} parent=5 // pred_check_branch
        %184 = sbr.rel (%p182) target = $region28
      $region27: #{tpu_custom_call.1} parent=5 // pred_region
        // Predicated region
        $region29: #{tpu_custom_call.1} parent=27 // pred_check
          %p185 = pneg %p49
        $region30: #{tpu_custom_call.1} parent=27 // pred_check_branch
          %187 = sbr.rel (%p185) target = $region32
        $region31: #{tpu_custom_call.1} parent=27 // pred_region
          %s188 = sand.u32 %s39, 1
          %s189 = scalar_lea.sflag [#allocation5], %s188
          %s190 = sand.u32 %s39, 1
          %s191 = smul.addr %s190, 64
          %s192 = scalar_lea.vmem [#allocation4], %s191
          %194 = vsyncadd %s189, 0
          %s195 = smul.addr %s24, 8
          %s196 = smul.addr %s195, 8
          %s197 = scalar_lea.hbm %s0, %s196
          %s198 = sshll.u32 %s197, 4
          %s199 = int_to_ptr.hbm [resolvable:$true] %s198
          %s200 = sshll.u32 %s192, 4
          %s201 = int_to_ptr.vmem [resolvable:$true] %s200
          %206 = dma.hbm_to_vmem [thread:$0]  %s199, 1024, %s201, %s189, 128, 128, 8
        $region32: #{tpu_custom_call.1} parent=27 // pred_fallthru
          _
      $region28: #{tpu_custom_call.1} parent=5 // pred_fallthru
        _
      %p207 = scmp.le.s32.totalorder 1, %s17
      %p208 = scmp.lt.s32.totalorder %s17, 3
      %p209 = pnand %p207, %p208
      %p210 = pneg %p209
      // Predicated region
      $region33: #{tpu_custom_call.1} parent=5 // pred_check
        _
      $region34: #{tpu_custom_call.1} parent=5 // pred_check_branch
        %212 = sbr.rel (%p209) target = $region36
      $region35: #{tpu_custom_call.1} parent=5 // pred_region
        %s213 = ssub.s32 %s17, 1
        %s214 = sand.u32 %s42, 1
        %s215 = scalar_lea.sflag [#allocation5], %s214
        %s216 = sand.u32 %s42, 1
        %s217 = smul.addr %s216, 64
        %s218 = scalar_lea.vmem [#allocation4], %s217
        // Predicated region
        $region37: #{tpu_custom_call.1} parent=35 // pred_check
          %p219 = pneg %p55
        $region38: #{tpu_custom_call.1} parent=35 // pred_check_branch
          %221 = sbr.rel (%p219) target = $region40
        $region39: #{tpu_custom_call.1} parent=35 // pred_region
          %223 = dma.done %s215, 1024
        $region40: #{tpu_custom_call.1} parent=35 // pred_fallthru
          _
        // Predicated region
        $region41: #{tpu_custom_call.1} parent=35 // pred_check
          %p224 = pneg %p118
        $region42: #{tpu_custom_call.1} parent=35 // pred_check_branch
          %226 = sbr.rel (%p224) target = $region44
        $region43: #{tpu_custom_call.1} parent=35 // pred_region
          %228 = dma.done [#allocation8], 256
        $region44: #{tpu_custom_call.1} parent=35 // pred_fallthru
          _
        %s229 = sand.u32 %s42, 1
        %s230 = scalar_lea.sflag [#allocation5], %s229
        %s231 = sand.u32 %s42, 1
        %s232 = smul.addr %s231, 64
        %s233 = scalar_lea.vmem [#allocation4], %s232
        %p234 = pneg %p55
        %p235 = pneg %p52
        %p236 = pneg %p76
        %p237 = pneg %p73
        %p238 = pneg %p97
        %p239 = pneg %p94
        %p240 = pneg %p118
        %p241 = pneg %p115
        %p242 = pneg %p146
        %p243 = pneg %p143
        %s244 = sand.u32 %s133, 1
        %s245 = scalar_lea.sflag [#allocation6], %s244
        %s246 = sand.u32 %s133, 1
        %s247 = smul.addr %s246, 64
        %s248 = scalar_lea.vmem [#allocation9], %s247
        %s249 = smul.u32 8, %s27
        %p250 = scmp.eq.s32.totalorder %s27, 0
        // Predicated region
        $region45: #{tpu_custom_call.1} parent=35 // pred_check
          %p251 = pneg %p250
        $region46: #{tpu_custom_call.1} parent=35 // pred_check_branch
          %253 = sbr.rel (%p251) target = $region48
        $region47: #{tpu_custom_call.1} parent=35 // pred_region
          %v254 = vld [vmem:[%s218] sm:$0xff]
          %v255 = vld [vmem:[%s218 + $0x8] sm:$0xff]
          %v256 = vld [vmem:[%s218 + $0x10] sm:$0xff]
          %v257 = vld [vmem:[%s218 + $0x18] sm:$0xff]
          %v258 = vld [vmem:[%s218 + $0x20] sm:$0xff]
          %v259 = vld [vmem:[%s218 + $0x28] sm:$0xff]
          %v260 = vld [vmem:[%s218 + $0x30] sm:$0xff]
          %v261 = vld [vmem:[%s218 + $0x38] sm:$0xff]
          %v262 = vld [vmem:[#allocation7] sm:$0xff]
          %v263 = vld [vmem:[#allocation7 + $0x8] sm:$0xff]
          %vm264 = vcmask 130048
          %v266 = vsel %vm264, %v254, 0
          %v269 = vsel %vm264, %v255, 0
          %v272 = vsel %vm264, %v256, 0
          %v275 = vsel %vm264, %v257, 0
          %v278 = vsel %vm264, %v258, 0
          %v281 = vsel %vm264, %v259, 0
          %v284 = vsel %vm264, %v260, 0
          %v287 = vsel %vm264, %v261, 0
          %289 = vmatpush.msra.mxu0 0.0
          %290 = vmatpush.msra.mxu0 0.0
          %291 = vmatpush.msra.mxu0 0.0
          %292 = vmatpush.msra.mxu0 0.0
          %293 = vmatpush.msra.mxu0 0.0
          %294 = vmatpush.msra.mxu0 0.0
          %295 = vmatpush.msra.mxu0 0.0
          %296 = vmatpush.msra.mxu0 0.0
          %297 = vmatpush.msra.mxu0 0.0
          %298 = vmatpush.msra.mxu0 0.0
          %299 = vmatpush.msra.mxu0 0.0
          %300 = vmatpush.msra.mxu0 0.0
          %301 = vmatpush.msra.mxu0 0.0
          %302 = vmatpush.msra.mxu0 0.0
          %303 = vmatpush.msra.mxu0 %v263
          %304 = vmatpush.msra.mxu0 %v262
          %305 = vmatmul.f32.gmra.mxu0 %v266
          %v306 = vpop.f32.mrf.mxu0
          %v307 = vadd.f32 0.0, %v306
          %308 = vmatmul.f32.gmra.mxu0 %v269
          %v309 = vpop.f32.mrf.mxu0
          %v310 = vadd.f32 0.0, %v309
          %311 = vmatmul.f32.gmra.mxu0 %v272
          %v312 = vpop.f32.mrf.mxu0
          %v313 = vadd.f32 0.0, %v312
          %314 = vmatmul.f32.gmra.mxu0 %v275
          %v315 = vpop.f32.mrf.mxu0
          %v316 = vadd.f32 0.0, %v315
          %317 = vmatmul.f32.gmra.mxu0 %v278
          %v318 = vpop.f32.mrf.mxu0
          %v319 = vadd.f32 0.0, %v318
          %320 = vmatmul.f32.gmra.mxu0 %v281
          %v321 = vpop.f32.mrf.mxu0
          %v322 = vadd.f32 0.0, %v321
          %323 = vmatmul.f32.gmra.mxu0 %v284
          %v324 = vpop.f32.mrf.mxu0
          %v325 = vadd.f32 0.0, %v324
          %326 = vmatmul.f32.gmra.mxu0 %v287
          %v327 = vpop.f32.mrf.mxu0
          %v328 = vadd.f32 0.0, %v327
          %329 = vdwg.mxu0
          %v338 = vrot.slane %v307, 1
          %v339 = vrot.slane %v307, 2
          %v340 = vrot.slane %v307, 3
          %v341 = vrot.slane %v307, 4
          %v342 = vrot.slane %v307, 5
          %v343 = vrot.slane %v307, 6
          %v344 = vrot.slane %v307, 7
          %v345 = vrot.slane %v310, 1
          %v346 = vrot.slane %v310, 2
          %v347 = vrot.slane %v310, 3
          %v348 = vrot.slane %v310, 4
          %v349 = vrot.slane %v310, 5
          %v350 = vrot.slane %v310, 6
          %v351 = vrot.slane %v310, 7
          %v352 = vrot.slane %v313, 1
          %v353 = vrot.slane %v313, 2
          %v354 = vrot.slane %v313, 3
          %v355 = vrot.slane %v313, 4
          %v356 = vrot.slane %v313, 5
          %v357 = vrot.slane %v313, 6
          %v358 = vrot.slane %v313, 7
          %v359 = vrot.slane %v316, 1
          %v360 = vrot.slane %v316, 2
          %v361 = vrot.slane %v316, 3
          %v362 = vrot.slane %v316, 4
          %v363 = vrot.slane %v316, 5
          %v364 = vrot.slane %v316, 6
          %v365 = vrot.slane %v316, 7
          %v366 = vrot.slane %v319, 1
          %v367 = vrot.slane %v319, 2
          %v368 = vrot.slane %v319, 3
          %v369 = vrot.slane %v319, 4
          %v370 = vrot.slane %v319, 5
          %v371 = vrot.slane %v319, 6
          %v372 = vrot.slane %v319, 7
          %v373 = vrot.slane %v322, 1
          %v374 = vrot.slane %v322, 2
          %v375 = vrot.slane %v322, 3
          %v376 = vrot.slane %v322, 4
          %v377 = vrot.slane %v322, 5
          %v378 = vrot.slane %v322, 6
          %v379 = vrot.slane %v322, 7
          %v380 = vrot.slane %v325, 1
          %v381 = vrot.slane %v325, 2
          %v382 = vrot.slane %v325, 3
          %v383 = vrot.slane %v325, 4
          %v384 = vrot.slane %v325, 5
          %v385 = vrot.slane %v325, 6
          %v386 = vrot.slane %v325, 7
          %v387 = vrot.slane %v328, 1
          %v388 = vrot.slane %v328, 2
          %v389 = vrot.slane %v328, 3
          %v390 = vrot.slane %v328, 4
          %v391 = vrot.slane %v328, 5
          %v392 = vrot.slane %v328, 6
          %v393 = vrot.slane %v328, 7
          %v450 = vperm.slane %v307, 0
          %v451 = vperm.slane %v338, 0
          %v452 = vperm.slane %v339, 0
          %v453 = vperm.slane %v340, 0
          %v454 = vperm.slane %v341, 0
          %v455 = vperm.slane %v342, 0
          %v456 = vperm.slane %v343, 0
          %v457 = vperm.slane %v344, 0
          %v458 = vperm.slane %v310, 0
          %v459 = vperm.slane %v345, 0
          %v460 = vperm.slane %v346, 0
          %v461 = vperm.slane %v347, 0
          %v462 = vperm.slane %v348, 0
          %v463 = vperm.slane %v349, 0
          %v464 = vperm.slane %v350, 0
          %v465 = vperm.slane %v351, 0
          %v466 = vperm.slane %v313, 0
          %v467 = vperm.slane %v352, 0
          %v468 = vperm.slane %v353, 0
          %v469 = vperm.slane %v354, 0
          %v470 = vperm.slane %v355, 0
          %v471 = vperm.slane %v356, 0
          %v472 = vperm.slane %v357, 0
          %v473 = vperm.slane %v358, 0
          %v474 = vperm.slane %v316, 0
          %v475 = vperm.slane %v359, 0
          %v476 = vperm.slane %v360, 0
          %v477 = vperm.slane %v361, 0
          %v478 = vperm.slane %v362, 0
          %v479 = vperm.slane %v363, 0
          %v480 = vperm.slane %v364, 0
          %v481 = vperm.slane %v365, 0
          %v482 = vperm.slane %v319, 0
          %v483 = vperm.slane %v366, 0
          %v484 = vperm.slane %v367, 0
          %v485 = vperm.slane %v368, 0
          %v486 = vperm.slane %v369, 0
          %v487 = vperm.slane %v370, 0
          %v488 = vperm.slane %v371, 0
          %v489 = vperm.slane %v372, 0
          %v490 = vperm.slane %v322, 0
          %v491 = vperm.slane %v373, 0
          %v492 = vperm.slane %v374, 0
          %v493 = vperm.slane %v375, 0
          %v494 = vperm.slane %v376, 0
          %v495 = vperm.slane %v377, 0
          %v496 = vperm.slane %v378, 0
          %v497 = vperm.slane %v379, 0
          %v498 = vperm.slane %v325, 0
          %v499 = vperm.slane %v380, 0
          %v500 = vperm.slane %v381, 0
          %v501 = vperm.slane %v382, 0
          %v502 = vperm.slane %v383, 0
          %v503 = vperm.slane %v384, 0
          %v504 = vperm.slane %v385, 0
          %v505 = vperm.slane %v386, 0
          %v506 = vperm.slane %v328, 0
          %v507 = vperm.slane %v387, 0
          %v508 = vperm.slane %v388, 0
          %v509 = vperm.slane %v389, 0
          %v510 = vperm.slane %v390, 0
          %v511 = vperm.slane %v391, 0
          %v512 = vperm.slane %v392, 0
          %v513 = vperm.slane %v393, 0
          %vm578 = vcmask 1040384
          %v579 = vsel %vm578, %v307, %v450
          %v580 = vsel %vm578, %v338, %v451
          %v581 = vsel %vm578, %v339, %v452
          %v582 = vsel %vm578, %v340, %v453
          %v583 = vsel %vm578, %v341, %v454
          %v584 = vsel %vm578, %v342, %v455
          %v585 = vsel %vm578, %v343, %v456
          %v586 = vsel %vm578, %v344, %v457
          %v587 = vsel %vm578, %v310, %v458
          %v588 = vsel %vm578, %v345, %v459
          %v589 = vsel %vm578, %v346, %v460
          %v590 = vsel %vm578, %v347, %v461
          %v591 = vsel %vm578, %v348, %v462
          %v592 = vsel %vm578, %v349, %v463
          %v593 = vsel %vm578, %v350, %v464
          %v594 = vsel %vm578, %v351, %v465
          %v595 = vsel %vm578, %v313, %v466
          %v596 = vsel %vm578, %v352, %v467
          %v597 = vsel %vm578, %v353, %v468
          %v598 = vsel %vm578, %v354, %v469
          %v599 = vsel %vm578, %v355, %v470
          %v600 = vsel %vm578, %v356, %v471
          %v601 = vsel %vm578, %v357, %v472
          %v602 = vsel %vm578, %v358, %v473
          %v603 = vsel %vm578, %v316, %v474
          %v604 = vsel %vm578, %v359, %v475
          %v605 = vsel %vm578, %v360, %v476
          %v606 = vsel %vm578, %v361, %v477
          %v607 = vsel %vm578, %v362, %v478
          %v608 = vsel %vm578, %v363, %v479
          %v609 = vsel %vm578, %v364, %v480
          %v610 = vsel %vm578, %v365, %v481
          %v611 = vsel %vm578, %v319, %v482
          %v612 = vsel %vm578, %v366, %v483
          %v613 = vsel %vm578, %v367, %v484
          %v614 = vsel %vm578, %v368, %v485
          %v615 = vsel %vm578, %v369, %v486
          %v616 = vsel %vm578, %v370, %v487
          %v617 = vsel %vm578, %v371, %v488
          %v618 = vsel %vm578, %v372, %v489
          %v619 = vsel %vm578, %v322, %v490
          %v620 = vsel %vm578, %v373, %v491
          %v621 = vsel %vm578, %v374, %v492
          %v622 = vsel %vm578, %v375, %v493
          %v623 = vsel %vm578, %v376, %v494
          %v624 = vsel %vm578, %v377, %v495
          %v625 = vsel %vm578, %v378, %v496
          %v626 = vsel %vm578, %v379, %v497
          %v627 = vsel %vm578, %v325, %v498
          %v628 = vsel %vm578, %v380, %v499
          %v629 = vsel %vm578, %v381, %v500
          %v630 = vsel %vm578, %v382, %v501
          %v631 = vsel %vm578, %v383, %v502
          %v632 = vsel %vm578, %v384, %v503
          %v633 = vsel %vm578, %v385, %v504
          %v634 = vsel %vm578, %v386, %v505
          %v635 = vsel %vm578, %v328, %v506
          %v636 = vsel %vm578, %v387, %v507
          %v637 = vsel %vm578, %v388, %v508
          %v638 = vsel %vm578, %v389, %v509
          %v639 = vsel %vm578, %v390, %v510
          %v640 = vsel %vm578, %v391, %v511
          %v641 = vsel %vm578, %v392, %v512
          %v642 = vsel %vm578, %v393, %v513
          %v647 = vperm.slane %v579, 1
          %v648 = vperm.slane %v595, 1
          %v649 = vperm.slane %v611, 1
          %v650 = vperm.slane %v627, 1
          %715 = vst [vmem:[#allocation1] ss:$4 sm:$0xff] %v579
          %s716 = scalar_lea.vmem [#allocation1], 1
          %717 = vst [vmem:[%s716] ss:$4 sm:$0xff] %v580
          %s718 = scalar_lea.vmem [#allocation1], 2
          %719 = vst [vmem:[%s718] ss:$4 sm:$0xff] %v581
          %s720 = scalar_lea.vmem [#allocation1], 3
          %721 = vst [vmem:[%s720] ss:$4 sm:$0xff] %v582
          %s722 = scalar_lea.vmem [#allocation1], 32
          %723 = vst [vmem:[%s722] ss:$4 sm:$0xff] %v583
          %s724 = scalar_lea.vmem [#allocation1], 33
          %725 = vst [vmem:[%s724] ss:$4 sm:$0xff] %v584
          %s726 = scalar_lea.vmem [#allocation1], 34
          %727 = vst [vmem:[%s726] ss:$4 sm:$0xff] %v585
          %s728 = scalar_lea.vmem [#allocation1], 35
          %729 = vst [vmem:[%s728] ss:$4 sm:$0xff] %v586
          %v730 = vld.sshfl [vmem:[#allocation1] sm:$0xff pattern:$0x73625140]
          %v731 = vld.sshfl [vmem:[#allocation1 + $0x20] sm:$0xff pattern:$0x73625140]
          %732 = vst [vmem:[#allocation1] ss:$4 sm:$0xff] %v587
          %733 = vst [vmem:[%s716] ss:$4 sm:$0xff] %v588
          %734 = vst [vmem:[%s718] ss:$4 sm:$0xff] %v589
          %735 = vst [vmem:[%s720] ss:$4 sm:$0xff] %v590
          %736 = vst [vmem:[%s722] ss:$4 sm:$0xff] %v591
          %737 = vst [vmem:[%s724] ss:$4 sm:$0xff] %v592
          %738 = vst [vmem:[%s726] ss:$4 sm:$0xff] %v593
          %739 = vst [vmem:[%s728] ss:$4 sm:$0xff] %v594
          %v740 = vld.sshfl [vmem:[#allocation1] sm:$0xff pattern:$0x73625140]
          %v741 = vld.sshfl [vmem:[#allocation1 + $0x20] sm:$0xff pattern:$0x73625140]
          %742 = vst [vmem:[#allocation1] ss:$4 sm:$0xff] %v595
          %743 = vst [vmem:[%s716] ss:$4 sm:$0xff] %v596
          %744 = vst [vmem:[%s718] ss:$4 sm:$0xff] %v597
          %745 = vst [vmem:[%s720] ss:$4 sm:$0xff] %v598
          %746 = vst [vmem:[%s722] ss:$4 sm:$0xff] %v599
          %747 = vst [vmem:[%s724] ss:$4 sm:$0xff] %v600
          %748 = vst [vmem:[%s726] ss:$4 sm:$0xff] %v601
          %749 = vst [vmem:[%s728] ss:$4 sm:$0xff] %v602
          %v750 = vld.sshfl [vmem:[#allocation1] sm:$0xff pattern:$0x73625140]
          %v751 = vld.sshfl [vmem:[#allocation1 + $0x20] sm:$0xff pattern:$0x73625140]
          %752 = vst [vmem:[#allocation1] ss:$4 sm:$0xff] %v603
          %753 = vst [vmem:[%s716] ss:$4 sm:$0xff] %v604
          %754 = vst [vmem:[%s718] ss:$4 sm:$0xff] %v605
          %755 = vst [vmem:[%s720] ss:$4 sm:$0xff] %v606
          %756 = vst [vmem:[%s722] ss:$4 sm:$0xff] %v607
          %757 = vst [vmem:[%s724] ss:$4 sm:$0xff] %v608
          %758 = vst [vmem:[%s726] ss:$4 sm:$0xff] %v609
          %759 = vst [vmem:[%s728] ss:$4 sm:$0xff] %v610
          %v760 = vld.sshfl [vmem:[#allocation1] sm:$0xff pattern:$0x73625140]
          %v761 = vld.sshfl [vmem:[#allocation1 + $0x20] sm:$0xff pattern:$0x73625140]
          %762 = vst [vmem:[#allocation1] ss:$4 sm:$0xff] %v611
          %763 = vst [vmem:[%s716] ss:$4 sm:$0xff] %v612
          %764 = vst [vmem:[%s718] ss:$4 sm:$0xff] %v613
          %765 = vst [vmem:[%s720] ss:$4 sm:$0xff] %v614
          %766 = vst [vmem:[%s722] ss:$4 sm:$0xff] %v615
          %767 = vst [vmem:[%s724] ss:$4 sm:$0xff] %v616
          %768 = vst [vmem:[%s726] ss:$4 sm:$0xff] %v617
          %769 = vst [vmem:[%s728] ss:$4 sm:$0xff] %v618
          %v770 = vld.sshfl [vmem:[#allocation1] sm:$0xff pattern:$0x73625140]
          %v771 = vld.sshfl [vmem:[#allocation1 + $0x20] sm:$0xff pattern:$0x73625140]
          %772 = vst [vmem:[#allocation1] ss:$4 sm:$0xff] %v619
          %773 = vst [vmem:[%s716] ss:$4 sm:$0xff] %v620
          %774 = vst [vmem:[%s718] ss:$4 sm:$0xff] %v621
          %775 = vst [vmem:[%s720] ss:$4 sm:$0xff] %v622
          %776 = vst [vmem:[%s722] ss:$4 sm:$0xff] %v623
          %777 = vst [vmem:[%s724] ss:$4 sm:$0xff] %v624
          %778 = vst [vmem:[%s726] ss:$4 sm:$0xff] %v625
          %779 = vst [vmem:[%s728] ss:$4 sm:$0xff] %v626
          %v780 = vld.sshfl [vmem:[#allocation1] sm:$0xff pattern:$0x73625140]
          %v781 = vld.sshfl [vmem:[#allocation1 + $0x20] sm:$0xff pattern:$0x73625140]
          %782 = vst [vmem:[#allocation1] ss:$4 sm:$0xff] %v627
          %783 = vst [vmem:[%s716] ss:$4 sm:$0xff] %v628
          %784 = vst [vmem:[%s718] ss:$4 sm:$0xff] %v629
          %785 = vst [vmem:[%s720] ss:$4 sm:$0xff] %v630
          %786 = vst [vmem:[%s722] ss:$4 sm:$0xff] %v631
          %787 = vst [vmem:[%s724] ss:$4 sm:$0xff] %v632
          %788 = vst [vmem:[%s726] ss:$4 sm:$0xff] %v633
          %789 = vst [vmem:[%s728] ss:$4 sm:$0xff] %v634
          %v790 = vld.sshfl [vmem:[#allocation1] sm:$0xff pattern:$0x73625140]
          %v791 = vld.sshfl [vmem:[#allocation1 + $0x20] sm:$0xff pattern:$0x73625140]
          %792 = vst [vmem:[#allocation1] ss:$4 sm:$0xff] %v635
          %793 = vst [vmem:[%s716] ss:$4 sm:$0xff] %v636
          %794 = vst [vmem:[%s718] ss:$4 sm:$0xff] %v637
          %795 = vst [vmem:[%s720] ss:$4 sm:$0xff] %v638
          %796 = vst [vmem:[%s722] ss:$4 sm:$0xff] %v639
          %797 = vst [vmem:[%s724] ss:$4 sm:$0xff] %v640
          %798 = vst [vmem:[%s726] ss:$4 sm:$0xff] %v641
          %799 = vst [vmem:[%s728] ss:$4 sm:$0xff] %v642
          %v800 = vld.sshfl [vmem:[#allocation1] sm:$0xff pattern:$0x73625140]
          %v801 = vld.sshfl [vmem:[#allocation1 + $0x20] sm:$0xff pattern:$0x73625140]
          %v802 = vrot.slane %v730, 7
          %v803 = vrot.slane %v731, 7
          %v804 = vsel %vm578, %v802, %v803
          %v805 = vrot.slane %v740, 7
          %v806 = vsel %vm578, %v803, %v805
          %v807 = vrot.slane %v741, 7
          %v808 = vsel %vm578, %v805, %v807
          %v809 = vrot.slane %v750, 7
          %v810 = vrot.slane %v751, 7
          %v811 = vsel %vm578, %v809, %v810
          %v812 = vrot.slane %v760, 7
          %v813 = vsel %vm578, %v810, %v812
          %v814 = vrot.slane %v761, 7
          %v815 = vsel %vm578, %v812, %v814
          %v816 = vrot.slane %v770, 7
          %v817 = vrot.slane %v771, 7
          %v818 = vsel %vm578, %v816, %v817
          %v819 = vrot.slane %v780, 7
          %v820 = vsel %vm578, %v817, %v819
          %v821 = vrot.slane %v781, 7
          %v822 = vsel %vm578, %v819, %v821
          %v823 = vrot.slane %v790, 7
          %v824 = vrot.slane %v791, 7
          %v825 = vsel %vm578, %v823, %v824
          %v826 = vrot.slane %v800, 7
          %v827 = vsel %vm578, %v824, %v826
          %v828 = vrot.slane %v801, 7
          %v829 = vsel %vm578, %v826, %v828
          %v850 = vperm.slane %v594, 0
          %v851 = vperm.slane %v610, 0
          %v852 = vperm.slane %v626, 0
          %v853 = vperm.slane %v642, 0
          %v858 = vsel %vm578, %v647, %v802
          %v859 = vsel %vm578, %v648, %v809
          %v860 = vsel %vm578, %v649, %v816
          %v861 = vsel %vm578, %v650, %v823
          %v862 = vsel %vm578, %v807, %v850
          %v863 = vsel %vm578, %v814, %v851
          %v864 = vsel %vm578, %v821, %v852
          %v865 = vsel %vm578, %v828, %v853
          %vm866 = vcmask 277504
          %867 = vst.msk [vmem:[#allocation2] sm:$0xff] %vm866, %v858
          %868 = vst.msk [vmem:[#allocation2 + $0x8] sm:$0xff] %vm866, %v804
          %869 = vst.msk [vmem:[#allocation2 + $0x10] sm:$0xff] %vm866, %v806
          %870 = vst.msk [vmem:[#allocation2 + $0x18] sm:$0xff] %vm866, %v808
          %vm871 = vcmask 271360
          %872 = vst.msk [vmem:[#allocation2 + $0x20] sm:$0x3] %vm871, %v862
          %873 = vst.msk [vmem:[#allocation2 + $0x28] sm:$0xff] %vm866, %v859
          %874 = vst.msk [vmem:[#allocation2 + $0x30] sm:$0xff] %vm866, %v811
          %875 = vst.msk [vmem:[#allocation2 + $0x38] sm:$0xff] %vm866, %v813
          %876 = vst.msk [vmem:[#allocation2 + $0x40] sm:$0xff] %vm866, %v815
          %877 = vst.msk [vmem:[#allocation2 + $0x48] sm:$0x3] %vm871, %v863
          %878 = vst.msk [vmem:[#allocation2 + $0x50] sm:$0xff] %vm866, %v860
          %879 = vst.msk [vmem:[#allocation2 + $0x58] sm:$0xff] %vm866, %v818
          %880 = vst.msk [vmem:[#allocation2 + $0x60] sm:$0xff] %vm866, %v820
          %881 = vst.msk [vmem:[#allocation2 + $0x68] sm:$0xff] %vm866, %v822
          %882 = vst.msk [vmem:[#allocation2 + $0x70] sm:$0x3] %vm871, %v864
          %883 = vst.msk [vmem:[#allocation2 + $0x78] sm:$0xff] %vm866, %v861
          %884 = vst.msk [vmem:[#allocation2 + $0x80] sm:$0xff] %vm866, %v825
          %885 = vst.msk [vmem:[#allocation2 + $0x88] sm:$0xff] %vm866, %v827
          %886 = vst.msk [vmem:[#allocation2 + $0x90] sm:$0xff] %vm866, %v829
          %887 = vst.msk [vmem:[#allocation2 + $0x98] sm:$0x3] %vm871, %v865
        $region48: #{tpu_custom_call.1} parent=35 // pred_fallthru
          _
        %s888 = smul.u32 %s27, 32
        %s889 = scalar_lea.vmem [#allocation2], %s888
        %v890 = vld [vmem:[%s889] sm:$0xff]
        %v891 = vld [vmem:[%s889 + $0x8] sm:$0xff]
        %v892 = vld [vmem:[%s889 + $0x10] sm:$0xff]
        %v893 = vld [vmem:[%s889 + $0x18] sm:$0xff]
        %v894 = vld [vmem:[%s889 + $0x20] sm:$0x3]
        %v895 = vld [vmem:[%s889 + $0x28] sm:$0xff]
        %v896 = vld [vmem:[%s889 + $0x30] sm:$0xff]
        %v897 = vld [vmem:[%s889 + $0x38] sm:$0xff]
        %v898 = vld [vmem:[%s889 + $0x40] sm:$0xff]
        %v899 = vld [vmem:[%s889 + $0x48] sm:$0x3]
        %v900 = vld [vmem:[%s889 + $0x50] sm:$0xff]
        %v901 = vld [vmem:[%s889 + $0x58] sm:$0xff]
        %v902 = vld [vmem:[%s889 + $0x60] sm:$0xff]
        %v903 = vld [vmem:[%s889 + $0x68] sm:$0xff]
        %v904 = vld [vmem:[%s889 + $0x70] sm:$0x3]
        %v905 = vld [vmem:[%s889 + $0x78] sm:$0xff]
        %v906 = vld [vmem:[%s889 + $0x80] sm:$0xff]
        %v907 = vld [vmem:[%s889 + $0x88] sm:$0xff]
        %v908 = vld [vmem:[%s889 + $0x90] sm:$0xff]
        %v909 = vld [vmem:[%s889 + $0x98] sm:$0x3]
        %v910 = vrot.slane %v900, 4
        %vm911 = vcmask 1047556
        %v912 = vsel %vm911, %v910, %v890
        %v913 = vrot.slane %v890, 4
        %v914 = vsel %vm911, %v900, %v913
        %v916 = vunpack.c.l.s4 1983009808
        %v917 = vunpack.c.0.s8 %v916
        %v918 = vperm.slane %v912, %v917
        %v920 = vunpack.c.l.s4 1983009808
        %v921 = vunpack.c.0.s8 %v920
        %v922 = vperm.slane %v914, %v921
        %v923 = vrot.slane %v905, 4
        %v924 = vsel %vm911, %v923, %v895
        %v925 = vrot.slane %v895, 4
        %v926 = vsel %vm911, %v905, %v925
        %v928 = vunpack.c.l.s4 1983009808
        %v929 = vunpack.c.0.s8 %v928
        %v930 = vperm.slane %v924, %v929
        %v932 = vunpack.c.l.s4 1983009808
        %v933 = vunpack.c.0.s8 %v932
        %v934 = vperm.slane %v926, %v933
        %v935 = vrot.slane %v930, 4
        %v936 = vsel %vm911, %v935, %v918
        %v937 = vrot.slane %v918, 4
        %v938 = vsel %vm911, %v930, %v937
        %v940 = vunpack.c.l.s4 1934713408
        %v941 = vunpack.c.0.s8 %v940
        %v942 = vperm.slane %v936, %v941
        %v944 = vunpack.c.l.s4 1934713408
        %v945 = vunpack.c.0.s8 %v944
        %v946 = vperm.slane %v938, %v945
        %v947 = vrot.slane %v934, 4
        %v948 = vsel %vm911, %v947, %v922
        %v949 = vrot.slane %v922, 4
        %v950 = vsel %vm911, %v934, %v949
        %v952 = vunpack.c.l.s4 1934713408
        %v953 = vunpack.c.0.s8 %v952
        %v954 = vperm.slane %v948, %v953
        %v956 = vunpack.c.l.s4 1934713408
        %v957 = vunpack.c.0.s8 %v956
        %v958 = vperm.slane %v950, %v957
        %v959 = vrot.slane %v942, 4
        %v960 = vsel %vm911, 0.0, %v959
        %v961 = vrot.slane %v946, 4
        %v962 = vsel %vm911, 0.0, %v961
        %v963 = vrot.slane %v954, 4
        %v964 = vsel %vm911, 0.0, %v963
        %v965 = vrot.slane %v958, 4
        %v966 = vsel %vm911, 0.0, %v965
        %v967 = vrot.slane %v901, 4
        %v968 = vsel %vm911, %v967, %v891
        %v969 = vrot.slane %v891, 4
        %v970 = vsel %vm911, %v901, %v969
        %v972 = vunpack.c.l.s4 1983009808
        %v973 = vunpack.c.0.s8 %v972
        %v974 = vperm.slane %v968, %v973
        %v976 = vunpack.c.l.s4 1983009808
        %v977 = vunpack.c.0.s8 %v976
        %v978 = vperm.slane %v970, %v977
        %v979 = vrot.slane %v906, 4
        %v980 = vsel %vm911, %v979, %v896
        %v981 = vrot.slane %v896, 4
        %v982 = vsel %vm911, %v906, %v981
        %v984 = vunpack.c.l.s4 1983009808
        %v985 = vunpack.c.0.s8 %v984
        %v986 = vperm.slane %v980, %v985
        %v988 = vunpack.c.l.s4 1983009808
        %v989 = vunpack.c.0.s8 %v988
        %v990 = vperm.slane %v982, %v989
        %v991 = vrot.slane %v986, 4
        %v992 = vsel %vm911, %v991, %v974
        %v993 = vrot.slane %v974, 4
        %v994 = vsel %vm911, %v986, %v993
        %v996 = vunpack.c.l.s4 1934713408
        %v997 = vunpack.c.0.s8 %v996
        %v998 = vperm.slane %v992, %v997
        %v1000 = vunpack.c.l.s4 1934713408
        %v1001 = vunpack.c.0.s8 %v1000
        %v1002 = vperm.slane %v994, %v1001
        %v1003 = vrot.slane %v990, 4
        %v1004 = vsel %vm911, %v1003, %v978
        %v1005 = vrot.slane %v978, 4
        %v1006 = vsel %vm911, %v990, %v1005
        %v1008 = vunpack.c.l.s4 1934713408
        %v1009 = vunpack.c.0.s8 %v1008
        %v1010 = vperm.slane %v1004, %v1009
        %v1012 = vunpack.c.l.s4 1934713408
        %v1013 = vunpack.c.0.s8 %v1012
        %v1014 = vperm.slane %v1006, %v1013
        %v1015 = vrot.slane %v998, 4
        %v1016 = vsel %vm911, 0.0, %v1015
        %v1017 = vrot.slane %v1002, 4
        %v1018 = vsel %vm911, 0.0, %v1017
        %v1019 = vrot.slane %v1010, 4
        %v1020 = vsel %vm911, 0.0, %v1019
        %v1021 = vrot.slane %v1014, 4
        %v1022 = vsel %vm911, 0.0, %v1021
        %v1023 = vrot.slane %v902, 4
        %v1024 = vsel %vm911, %v1023, %v892
        %v1025 = vrot.slane %v892, 4
        %v1026 = vsel %vm911, %v902, %v1025
        %v1028 = vunpack.c.l.s4 1983009808
        %v1029 = vunpack.c.0.s8 %v1028
        %v1030 = vperm.slane %v1024, %v1029
        %v1032 = vunpack.c.l.s4 1983009808
        %v1033 = vunpack.c.0.s8 %v1032
        %v1034 = vperm.slane %v1026, %v1033
        %v1035 = vrot.slane %v907, 4
        %v1036 = vsel %vm911, %v1035, %v897
        %v1037 = vrot.slane %v897, 4
        %v1038 = vsel %vm911, %v907, %v1037
        %v1040 = vunpack.c.l.s4 1983009808
        %v1041 = vunpack.c.0.s8 %v1040
        %v1042 = vperm.slane %v1036, %v1041
        %v1044 = vunpack.c.l.s4 1983009808
        %v1045 = vunpack.c.0.s8 %v1044
        %v1046 = vperm.slane %v1038, %v1045
        %v1047 = vrot.slane %v1042, 4
        %v1048 = vsel %vm911, %v1047, %v1030
        %v1049 = vrot.slane %v1030, 4
        %v1050 = vsel %vm911, %v1042, %v1049
        %v1052 = vunpack.c.l.s4 1934713408
        %v1053 = vunpack.c.0.s8 %v1052
        %v1054 = vperm.slane %v1048, %v1053
        %v1056 = vunpack.c.l.s4 1934713408
        %v1057 = vunpack.c.0.s8 %v1056
        %v1058 = vperm.slane %v1050, %v1057
        %v1059 = vrot.slane %v1046, 4
        %v1060 = vsel %vm911, %v1059, %v1034
        %v1061 = vrot.slane %v1034, 4
        %v1062 = vsel %vm911, %v1046, %v1061
        %v1064 = vunpack.c.l.s4 1934713408
        %v1065 = vunpack.c.0.s8 %v1064
        %v1066 = vperm.slane %v1060, %v1065
        %v1068 = vunpack.c.l.s4 1934713408
        %v1069 = vunpack.c.0.s8 %v1068
        %v1070 = vperm.slane %v1062, %v1069
        %v1071 = vrot.slane %v1054, 4
        %v1072 = vsel %vm911, 0.0, %v1071
        %v1073 = vrot.slane %v1058, 4
        %v1074 = vsel %vm911, 0.0, %v1073
        %v1075 = vrot.slane %v1066, 4
        %v1076 = vsel %vm911, 0.0, %v1075
        %v1077 = vrot.slane %v1070, 4
        %v1078 = vsel %vm911, 0.0, %v1077
        %v1079 = vrot.slane %v903, 4
        %v1080 = vsel %vm911, %v1079, %v893
        %v1081 = vrot.slane %v893, 4
        %v1082 = vsel %vm911, %v903, %v1081
        %v1084 = vunpack.c.l.s4 1983009808
        %v1085 = vunpack.c.0.s8 %v1084
        %v1086 = vperm.slane %v1080, %v1085
        %v1088 = vunpack.c.l.s4 1983009808
        %v1089 = vunpack.c.0.s8 %v1088
        %v1090 = vperm.slane %v1082, %v1089
        %v1091 = vrot.slane %v908, 4
        %v1092 = vsel %vm911, %v1091, %v898
        %v1093 = vrot.slane %v898, 4
        %v1094 = vsel %vm911, %v908, %v1093
        %v1096 = vunpack.c.l.s4 1983009808
        %v1097 = vunpack.c.0.s8 %v1096
        %v1098 = vperm.slane %v1092, %v1097
        %v1100 = vunpack.c.l.s4 1983009808
        %v1101 = vunpack.c.0.s8 %v1100
        %v1102 = vperm.slane %v1094, %v1101
        %v1103 = vrot.slane %v1098, 4
        %v1104 = vsel %vm911, %v1103, %v1086
        %v1105 = vrot.slane %v1086, 4
        %v1106 = vsel %vm911, %v1098, %v1105
        %v1108 = vunpack.c.l.s4 1934713408
        %v1109 = vunpack.c.0.s8 %v1108
        %v1110 = vperm.slane %v1104, %v1109
        %v1112 = vunpack.c.l.s4 1934713408
        %v1113 = vunpack.c.0.s8 %v1112
        %v1114 = vperm.slane %v1106, %v1113
        %v1115 = vrot.slane %v1102, 4
        %v1116 = vsel %vm911, %v1115, %v1090
        %v1117 = vrot.slane %v1090, 4
        %v1118 = vsel %vm911, %v1102, %v1117
        %v1120 = vunpack.c.l.s4 1934713408
        %v1121 = vunpack.c.0.s8 %v1120
        %v1122 = vperm.slane %v1116, %v1121
        %v1124 = vunpack.c.l.s4 1934713408
        %v1125 = vunpack.c.0.s8 %v1124
        %v1126 = vperm.slane %v1118, %v1125
        %v1127 = vrot.slane %v1110, 4
        %v1128 = vsel %vm911, 0.0, %v1127
        %v1129 = vrot.slane %v1114, 4
        %v1130 = vsel %vm911, 0.0, %v1129
        %v1131 = vrot.slane %v1122, 4
        %v1132 = vsel %vm911, 0.0, %v1131
        %v1133 = vrot.slane %v1126, 4
        %v1134 = vsel %vm911, 0.0, %v1133
        %1136 = vrot.lane.b32.xlu0 %v960, 32
        %v1137 = vpop.permute.xlu0 %1136
        %1140 = vrot.lane.b32.xlu0 %v946, 64
        %v1141 = vpop.permute.xlu0 %1140
        %1144 = vrot.lane.b32.xlu0 %v962, 96
        %v1145 = vpop.permute.xlu0 %1144
        %1148 = vrot.lane.b32.xlu0 %v964, 32
        %v1149 = vpop.permute.xlu0 %1148
        %1152 = vrot.lane.b32.xlu0 %v958, 64
        %v1153 = vpop.permute.xlu0 %1152
        %1156 = vrot.lane.b32.xlu0 %v966, 96
        %v1157 = vpop.permute.xlu0 %1156
        %1160 = vrot.lane.b32.xlu0 %v1016, 32
        %v1161 = vpop.permute.xlu0 %1160
        %1164 = vrot.lane.b32.xlu0 %v1002, 64
        %v1165 = vpop.permute.xlu0 %1164
        %1168 = vrot.lane.b32.xlu0 %v1018, 96
        %v1169 = vpop.permute.xlu0 %1168
        %1172 = vrot.lane.b32.xlu0 %v1020, 32
        %v1173 = vpop.permute.xlu0 %1172
        %1176 = vrot.lane.b32.xlu0 %v1014, 64
        %v1177 = vpop.permute.xlu0 %1176
        %1180 = vrot.lane.b32.xlu0 %v1022, 96
        %v1181 = vpop.permute.xlu0 %1180
        %1184 = vrot.lane.b32.xlu0 %v1072, 32
        %v1185 = vpop.permute.xlu0 %1184
        %1188 = vrot.lane.b32.xlu0 %v1058, 64
        %v1189 = vpop.permute.xlu0 %1188
        %1192 = vrot.lane.b32.xlu0 %v1074, 96
        %v1193 = vpop.permute.xlu0 %1192
        %1196 = vrot.lane.b32.xlu0 %v1076, 32
        %v1197 = vpop.permute.xlu0 %1196
        %1200 = vrot.lane.b32.xlu0 %v1070, 64
        %v1201 = vpop.permute.xlu0 %1200
        %1204 = vrot.lane.b32.xlu0 %v1078, 96
        %v1205 = vpop.permute.xlu0 %1204
        %1208 = vrot.lane.b32.xlu0 %v1128, 32
        %v1209 = vpop.permute.xlu0 %1208
        %1212 = vrot.lane.b32.xlu0 %v1114, 64
        %v1213 = vpop.permute.xlu0 %1212
        %1216 = vrot.lane.b32.xlu0 %v1130, 96
        %v1217 = vpop.permute.xlu0 %1216
        %1220 = vrot.lane.b32.xlu0 %v1132, 32
        %v1221 = vpop.permute.xlu0 %1220
        %1224 = vrot.lane.b32.xlu0 %v1126, 64
        %v1225 = vpop.permute.xlu0 %1224
        %1228 = vrot.lane.b32.xlu0 %v1134, 96
        %v1229 = vpop.permute.xlu0 %1228
        %vm1231 = vcmask 261120
        %v1232 = vsel %vm1231, %v942, %v1137
        %vm1233 = vcmask 523264
        %v1234 = vsel %vm1233, %v1232, %v1141
        %vm1235 = vcmask 785408
        %v1236 = vsel %vm1235, %v1234, %v1145
        %v1237 = vsel %vm1231, %v954, %v1149
        %v1238 = vsel %vm1233, %v1237, %v1153
        %v1239 = vsel %vm1235, %v1238, %v1157
        %v1240 = vsel %vm1231, %v998, %v1161
        %v1241 = vsel %vm1233, %v1240, %v1165
        %v1242 = vsel %vm1235, %v1241, %v1169
        %v1243 = vsel %vm1231, %v1010, %v1173
        %v1244 = vsel %vm1233, %v1243, %v1177
        %v1245 = vsel %vm1235, %v1244, %v1181
        %v1246 = vsel %vm1231, %v1054, %v1185
        %v1247 = vsel %vm1233, %v1246, %v1189
        %v1248 = vsel %vm1235, %v1247, %v1193
        %v1249 = vsel %vm1231, %v1066, %v1197
        %v1250 = vsel %vm1233, %v1249, %v1201
        %v1251 = vsel %vm1235, %v1250, %v1205
        %v1252 = vsel %vm1231, %v1110, %v1209
        %v1253 = vsel %vm1233, %v1252, %v1213
        %v1254 = vsel %vm1235, %v1253, %v1217
        %v1255 = vsel %vm1231, %v1122, %v1221
        %v1256 = vsel %vm1233, %v1255, %v1225
        %v1257 = vsel %vm1235, %v1256, %v1229
        %1258 = vst [vmem:[#allocation3] sm:$0xf] %v1236
        %1259 = vst [vmem:[#allocation3 + $0x8] sm:$0xf] %v1239
        %1260 = vst [vmem:[#allocation3 + $0x10] sm:$0xf] %v1242
        %1261 = vst [vmem:[#allocation3 + $0x18] sm:$0xf] %v1245
        %1262 = vst [vmem:[#allocation3 + $0x20] sm:$0xf] %v1248
        %1263 = vst [vmem:[#allocation3 + $0x28] sm:$0xf] %v1251
        %1264 = vst [vmem:[#allocation3 + $0x30] sm:$0xf] %v1254
        %1265 = vst [vmem:[#allocation3 + $0x38] sm:$0xf] %v1257
        %vm1286 = vcmask 1046528
        %v1287 = vrot.slane %v890, 1
        %v1288 = vrot.slane %v891, 1
        %v1289 = vsel %vm1286, %v1287, %v1288
        %v1290 = vrot.slane %v892, 1
        %v1291 = vsel %vm1286, %v1288, %v1290
        %v1292 = vrot.slane %v893, 1
        %v1293 = vsel %vm1286, %v1290, %v1292
        %v1294 = vrot.slane %v894, 1
        %v1295 = vsel %vm1286, %v1292, %v1294
        %v1296 = vrot.slane %v895, 1
        %v1297 = vrot.slane %v896, 1
        %v1298 = vsel %vm1286, %v1296, %v1297
        %v1299 = vrot.slane %v897, 1
        %v1300 = vsel %vm1286, %v1297, %v1299
        %v1301 = vrot.slane %v898, 1
        %v1302 = vsel %vm1286, %v1299, %v1301
        %v1303 = vrot.slane %v899, 1
        %v1304 = vsel %vm1286, %v1301, %v1303
        %v1305 = vrot.slane %v900, 1
        %v1306 = vrot.slane %v901, 1
        %v1307 = vsel %vm1286, %v1305, %v1306
        %v1308 = vrot.slane %v902, 1
        %v1309 = vsel %vm1286, %v1306, %v1308
        %v1310 = vrot.slane %v903, 1
        %v1311 = vsel %vm1286, %v1308, %v1310
        %v1312 = vrot.slane %v904, 1
        %v1313 = vsel %vm1286, %v1310, %v1312
        %v1314 = vrot.slane %v905, 1
        %v1315 = vrot.slane %v906, 1
        %v1316 = vsel %vm1286, %v1314, %v1315
        %v1317 = vrot.slane %v907, 1
        %v1318 = vsel %vm1286, %v1315, %v1317
        %v1319 = vrot.slane %v908, 1
        %v1320 = vsel %vm1286, %v1317, %v1319
        %v1321 = vrot.slane %v909, 1
        %v1322 = vsel %vm1286, %v1319, %v1321
        %v1339 = vrot.slane %v1307, 4
        %v1340 = vsel %vm911, %v1339, %v1289
        %v1341 = vrot.slane %v1289, 4
        %v1342 = vsel %vm911, %v1307, %v1341
        %v1344 = vunpack.c.l.s4 1983009808
        %v1345 = vunpack.c.0.s8 %v1344
        %v1346 = vperm.slane %v1340, %v1345
        %v1348 = vunpack.c.l.s4 1983009808
        %v1349 = vunpack.c.0.s8 %v1348
        %v1350 = vperm.slane %v1342, %v1349
        %v1351 = vrot.slane %v1316, 4
        %v1352 = vsel %vm911, %v1351, %v1298
        %v1353 = vrot.slane %v1298, 4
        %v1354 = vsel %vm911, %v1316, %v1353
        %v1356 = vunpack.c.l.s4 1983009808
        %v1357 = vunpack.c.0.s8 %v1356
        %v1358 = vperm.slane %v1352, %v1357
        %v1360 = vunpack.c.l.s4 1983009808
        %v1361 = vunpack.c.0.s8 %v1360
        %v1362 = vperm.slane %v1354, %v1361
        %v1363 = vrot.slane %v1358, 4
        %v1364 = vsel %vm911, %v1363, %v1346
        %v1365 = vrot.slane %v1346, 4
        %v1366 = vsel %vm911, %v1358, %v1365
        %v1368 = vunpack.c.l.s4 1934713408
        %v1369 = vunpack.c.0.s8 %v1368
        %v1370 = vperm.slane %v1364, %v1369
        %v1372 = vunpack.c.l.s4 1934713408
        %v1373 = vunpack.c.0.s8 %v1372
        %v1374 = vperm.slane %v1366, %v1373
        %v1375 = vrot.slane %v1362, 4
        %v1376 = vsel %vm911, %v1375, %v1350
        %v1377 = vrot.slane %v1350, 4
        %v1378 = vsel %vm911, %v1362, %v1377
        %v1380 = vunpack.c.l.s4 1934713408
        %v1381 = vunpack.c.0.s8 %v1380
        %v1382 = vperm.slane %v1376, %v1381
        %v1384 = vunpack.c.l.s4 1934713408
        %v1385 = vunpack.c.0.s8 %v1384
        %v1386 = vperm.slane %v1378, %v1385
        %v1387 = vrot.slane %v1370, 4
        %v1388 = vsel %vm911, 0.0, %v1387
        %v1389 = vrot.slane %v1374, 4
        %v1390 = vsel %vm911, 0.0, %v1389
        %v1391 = vrot.slane %v1382, 4
        %v1392 = vsel %vm911, 0.0, %v1391
        %v1393 = vrot.slane %v1386, 4
        %v1394 = vsel %vm911, 0.0, %v1393
        %v1395 = vrot.slane %v1309, 4
        %v1396 = vsel %vm911, %v1395, %v1291
        %v1397 = vrot.slane %v1291, 4
        %v1398 = vsel %vm911, %v1309, %v1397
        %v1400 = vunpack.c.l.s4 1983009808
        %v1401 = vunpack.c.0.s8 %v1400
        %v1402 = vperm.slane %v1396, %v1401
        %v1404 = vunpack.c.l.s4 1983009808
        %v1405 = vunpack.c.0.s8 %v1404
        %v1406 = vperm.slane %v1398, %v1405
        %v1407 = vrot.slane %v1318, 4
        %v1408 = vsel %vm911, %v1407, %v1300
        %v1409 = vrot.slane %v1300, 4
        %v1410 = vsel %vm911, %v1318, %v1409
        %v1412 = vunpack.c.l.s4 1983009808
        %v1413 = vunpack.c.0.s8 %v1412
        %v1414 = vperm.slane %v1408, %v1413
        %v1416 = vunpack.c.l.s4 1983009808
        %v1417 = vunpack.c.0.s8 %v1416
        %v1418 = vperm.slane %v1410, %v1417
        %v1419 = vrot.slane %v1414, 4
        %v1420 = vsel %vm911, %v1419, %v1402
        %v1421 = vrot.slane %v1402, 4
        %v1422 = vsel %vm911, %v1414, %v1421
        %v1424 = vunpack.c.l.s4 1934713408
        %v1425 = vunpack.c.0.s8 %v1424
        %v1426 = vperm.slane %v1420, %v1425
        %v1428 = vunpack.c.l.s4 1934713408
        %v1429 = vunpack.c.0.s8 %v1428
        %v1430 = vperm.slane %v1422, %v1429
        %v1431 = vrot.slane %v1418, 4
        %v1432 = vsel %vm911, %v1431, %v1406
        %v1433 = vrot.slane %v1406, 4
        %v1434 = vsel %vm911, %v1418, %v1433
        %v1436 = vunpack.c.l.s4 1934713408
        %v1437 = vunpack.c.0.s8 %v1436
        %v1438 = vperm.slane %v1432, %v1437
        %v1440 = vunpack.c.l.s4 1934713408
        %v1441 = vunpack.c.0.s8 %v1440
        %v1442 = vperm.slane %v1434, %v1441
        %v1443 = vrot.slane %v1426, 4
        %v1444 = vsel %vm911, 0.0, %v1443
        %v1445 = vrot.slane %v1430, 4
        %v1446 = vsel %vm911, 0.0, %v1445
        %v1447 = vrot.slane %v1438, 4
        %v1448 = vsel %vm911, 0.0, %v1447
        %v1449 = vrot.slane %v1442, 4
        %v1450 = vsel %vm911, 0.0, %v1449
        %v1451 = vrot.slane %v1311, 4
        %v1452 = vsel %vm911, %v1451, %v1293
        %v1453 = vrot.slane %v1293, 4
        %v1454 = vsel %vm911, %v1311, %v1453
        %v1456 = vunpack.c.l.s4 1983009808
        %v1457 = vunpack.c.0.s8 %v1456
        %v1458 = vperm.slane %v1452, %v1457
        %v1460 = vunpack.c.l.s4 1983009808
        %v1461 = vunpack.c.0.s8 %v1460
        %v1462 = vperm.slane %v1454, %v1461
        %v1463 = vrot.slane %v1320, 4
        %v1464 = vsel %vm911, %v1463, %v1302
        %v1465 = vrot.slane %v1302, 4
        %v1466 = vsel %vm911, %v1320, %v1465
        %v1468 = vunpack.c.l.s4 1983009808
        %v1469 = vunpack.c.0.s8 %v1468
        %v1470 = vperm.slane %v1464, %v1469
        %v1472 = vunpack.c.l.s4 1983009808
        %v1473 = vunpack.c.0.s8 %v1472
        %v1474 = vperm.slane %v1466, %v1473
        %v1475 = vrot.slane %v1470, 4
        %v1476 = vsel %vm911, %v1475, %v1458
        %v1477 = vrot.slane %v1458, 4
        %v1478 = vsel %vm911, %v1470, %v1477
        %v1480 = vunpack.c.l.s4 1934713408
        %v1481 = vunpack.c.0.s8 %v1480
        %v1482 = vperm.slane %v1476, %v1481
        %v1484 = vunpack.c.l.s4 1934713408
        %v1485 = vunpack.c.0.s8 %v1484
        %v1486 = vperm.slane %v1478, %v1485
        %v1487 = vrot.slane %v1474, 4
        %v1488 = vsel %vm911, %v1487, %v1462
        %v1489 = vrot.slane %v1462, 4
        %v1490 = vsel %vm911, %v1474, %v1489
        %v1492 = vunpack.c.l.s4 1934713408
        %v1493 = vunpack.c.0.s8 %v1492
        %v1494 = vperm.slane %v1488, %v1493
        %v1496 = vunpack.c.l.s4 1934713408
        %v1497 = vunpack.c.0.s8 %v1496
        %v1498 = vperm.slane %v1490, %v1497
        %v1499 = vrot.slane %v1482, 4
        %v1500 = vsel %vm911, 0.0, %v1499
        %v1501 = vrot.slane %v1486, 4
        %v1502 = vsel %vm911, 0.0, %v1501
        %v1503 = vrot.slane %v1494, 4
        %v1504 = vsel %vm911, 0.0, %v1503
        %v1505 = vrot.slane %v1498, 4
        %v1506 = vsel %vm911, 0.0, %v1505
        %v1507 = vrot.slane %v1313, 4
        %v1508 = vsel %vm911, %v1507, %v1295
        %v1509 = vrot.slane %v1295, 4
        %v1510 = vsel %vm911, %v1313, %v1509
        %v1512 = vunpack.c.l.s4 1983009808
        %v1513 = vunpack.c.0.s8 %v1512
        %v1514 = vperm.slane %v1508, %v1513
        %v1516 = vunpack.c.l.s4 1983009808
        %v1517 = vunpack.c.0.s8 %v1516
        %v1518 = vperm.slane %v1510, %v1517
        %v1519 = vrot.slane %v1322, 4
        %v1520 = vsel %vm911, %v1519, %v1304
        %v1521 = vrot.slane %v1304, 4
        %v1522 = vsel %vm911, %v1322, %v1521
        %v1524 = vunpack.c.l.s4 1983009808
        %v1525 = vunpack.c.0.s8 %v1524
        %v1526 = vperm.slane %v1520, %v1525
        %v1528 = vunpack.c.l.s4 1983009808
        %v1529 = vunpack.c.0.s8 %v1528
        %v1530 = vperm.slane %v1522, %v1529
        %v1531 = vrot.slane %v1526, 4
        %v1532 = vsel %vm911, %v1531, %v1514
        %v1533 = vrot.slane %v1514, 4
        %v1534 = vsel %vm911, %v1526, %v1533
        %v1536 = vunpack.c.l.s4 1934713408
        %v1537 = vunpack.c.0.s8 %v1536
        %v1538 = vperm.slane %v1532, %v1537
        %v1540 = vunpack.c.l.s4 1934713408
        %v1541 = vunpack.c.0.s8 %v1540
        %v1542 = vperm.slane %v1534, %v1541
        %v1543 = vrot.slane %v1530, 4
        %v1544 = vsel %vm911, %v1543, %v1518
        %v1545 = vrot.slane %v1518, 4
        %v1546 = vsel %vm911, %v1530, %v1545
        %v1548 = vunpack.c.l.s4 1934713408
        %v1549 = vunpack.c.0.s8 %v1548
        %v1550 = vperm.slane %v1544, %v1549
        %v1552 = vunpack.c.l.s4 1934713408
        %v1553 = vunpack.c.0.s8 %v1552
        %v1554 = vperm.slane %v1546, %v1553
        %v1555 = vrot.slane %v1538, 4
        %v1556 = vsel %vm911, 0.0, %v1555
        %v1557 = vrot.slane %v1542, 4
        %v1558 = vsel %vm911, 0.0, %v1557
        %v1559 = vrot.slane %v1550, 4
        %v1560 = vsel %vm911, 0.0, %v1559
        %v1561 = vrot.slane %v1554, 4
        %v1562 = vsel %vm911, 0.0, %v1561
        %1564 = vrot.lane.b32.xlu0 %v1388, 32
        %v1565 = vpop.permute.xlu0 %1564
        %1568 = vrot.lane.b32.xlu0 %v1374, 64
        %v1569 = vpop.permute.xlu0 %1568
        %1572 = vrot.lane.b32.xlu0 %v1390, 96
        %v1573 = vpop.permute.xlu0 %1572
        %1576 = vrot.lane.b32.xlu0 %v1392, 32
        %v1577 = vpop.permute.xlu0 %1576
        %1580 = vrot.lane.b32.xlu0 %v1386, 64
        %v1581 = vpop.permute.xlu0 %1580
        %1584 = vrot.lane.b32.xlu0 %v1394, 96
        %v1585 = vpop.permute.xlu0 %1584
        %1588 = vrot.lane.b32.xlu0 %v1444, 32
        %v1589 = vpop.permute.xlu0 %1588
        %1592 = vrot.lane.b32.xlu0 %v1430, 64
        %v1593 = vpop.permute.xlu0 %1592
        %1596 = vrot.lane.b32.xlu0 %v1446, 96
        %v1597 = vpop.permute.xlu0 %1596
        %1600 = vrot.lane.b32.xlu0 %v1448, 32
        %v1601 = vpop.permute.xlu0 %1600
        %1604 = vrot.lane.b32.xlu0 %v1442, 64
        %v1605 = vpop.permute.xlu0 %1604
        %1608 = vrot.lane.b32.xlu0 %v1450, 96
        %v1609 = vpop.permute.xlu0 %1608
        %1612 = vrot.lane.b32.xlu0 %v1500, 32
        %v1613 = vpop.permute.xlu0 %1612
        %1616 = vrot.lane.b32.xlu0 %v1486, 64
        %v1617 = vpop.permute.xlu0 %1616
        %1620 = vrot.lane.b32.xlu0 %v1502, 96
        %v1621 = vpop.permute.xlu0 %1620
        %1624 = vrot.lane.b32.xlu0 %v1504, 32
        %v1625 = vpop.permute.xlu0 %1624
        %1628 = vrot.lane.b32.xlu0 %v1498, 64
        %v1629 = vpop.permute.xlu0 %1628
        %1632 = vrot.lane.b32.xlu0 %v1506, 96
        %v1633 = vpop.permute.xlu0 %1632
        %1636 = vrot.lane.b32.xlu0 %v1556, 32
        %v1637 = vpop.permute.xlu0 %1636
        %1640 = vrot.lane.b32.xlu0 %v1542, 64
        %v1641 = vpop.permute.xlu0 %1640
        %1644 = vrot.lane.b32.xlu0 %v1558, 96
        %v1645 = vpop.permute.xlu0 %1644
        %1648 = vrot.lane.b32.xlu0 %v1560, 32
        %v1649 = vpop.permute.xlu0 %1648
        %1652 = vrot.lane.b32.xlu0 %v1554, 64
        %v1653 = vpop.permute.xlu0 %1652
        %1656 = vrot.lane.b32.xlu0 %v1562, 96
        %v1657 = vpop.permute.xlu0 %1656
        %v1659 = vsel %vm1231, %v1370, %v1565
        %v1660 = vsel %vm1233, %v1659, %v1569
        %v1661 = vsel %vm1235, %v1660, %v1573
        %v1662 = vsel %vm1231, %v1382, %v1577
        %v1663 = vsel %vm1233, %v1662, %v1581
        %v1664 = vsel %vm1235, %v1663, %v1585
        %v1665 = vsel %vm1231, %v1426, %v1589
        %v1666 = vsel %vm1233, %v1665, %v1593
        %v1667 = vsel %vm1235, %v1666, %v1597
        %v1668 = vsel %vm1231, %v1438, %v1601
        %v1669 = vsel %vm1233, %v1668, %v1605
        %v1670 = vsel %vm1235, %v1669, %v1609
        %v1671 = vsel %vm1231, %v1482, %v1613
        %v1672 = vsel %vm1233, %v1671, %v1617
        %v1673 = vsel %vm1235, %v1672, %v1621
        %v1674 = vsel %vm1231, %v1494, %v1625
        %v1675 = vsel %vm1233, %v1674, %v1629
        %v1676 = vsel %vm1235, %v1675, %v1633
        %v1677 = vsel %vm1231, %v1538, %v1637
        %v1678 = vsel %vm1233, %v1677, %v1641
        %v1679 = vsel %vm1235, %v1678, %v1645
        %v1680 = vsel %vm1231, %v1550, %v1649
        %v1681 = vsel %vm1233, %v1680, %v1653
        %v1682 = vsel %vm1235, %v1681, %v1657
        %v1691 = vrot.slane %v1661, 4
        %v1692 = vrot.slane %v1664, 4
        %v1693 = vrot.slane %v1667, 4
        %v1694 = vrot.slane %v1670, 4
        %v1695 = vrot.slane %v1673, 4
        %v1696 = vrot.slane %v1676, 4
        %v1697 = vrot.slane %v1679, 4
        %v1698 = vrot.slane %v1682, 4
        %1707 = vst [vmem:[#allocation3 + $0x40] sm:$0xf0] %v1691
        %1708 = vst [vmem:[#allocation3 + $0x48] sm:$0xf0] %v1692
        %1709 = vst [vmem:[#allocation3 + $0x50] sm:$0xf0] %v1693
        %1710 = vst [vmem:[#allocation3 + $0x58] sm:$0xf0] %v1694
        %1711 = vst [vmem:[#allocation3 + $0x60] sm:$0xf0] %v1695
        %1712 = vst [vmem:[#allocation3 + $0x68] sm:$0xf0] %v1696
        %1713 = vst [vmem:[#allocation3 + $0x70] sm:$0xf0] %v1697
        %1714 = vst [vmem:[#allocation3 + $0x78] sm:$0xf0] %v1698
        %vm1715 = vcmask 1045504
        %v1716 = vrot.slane %v890, 2
        %v1717 = vrot.slane %v891, 2
        %v1718 = vsel %vm1715, %v1716, %v1717
        %v1719 = vrot.slane %v892, 2
        %v1720 = vsel %vm1715, %v1717, %v1719
        %v1721 = vrot.slane %v893, 2
        %v1722 = vsel %vm1715, %v1719, %v1721
        %v1723 = vrot.slane %v894, 2
        %v1724 = vsel %vm1715, %v1721, %v1723
        %v1725 = vrot.slane %v895, 2
        %v1726 = vrot.slane %v896, 2
        %v1727 = vsel %vm1715, %v1725, %v1726
        %v1728 = vrot.slane %v897, 2
        %v1729 = vsel %vm1715, %v1726, %v1728
        %v1730 = vrot.slane %v898, 2
        %v1731 = vsel %vm1715, %v1728, %v1730
        %v1732 = vrot.slane %v899, 2
        %v1733 = vsel %vm1715, %v1730, %v1732
        %v1734 = vrot.slane %v900, 2
        %v1735 = vrot.slane %v901, 2
        %v1736 = vsel %vm1715, %v1734, %v1735
        %v1737 = vrot.slane %v902, 2
        %v1738 = vsel %vm1715, %v1735, %v1737
        %v1739 = vrot.slane %v903, 2
        %v1740 = vsel %vm1715, %v1737, %v1739
        %v1741 = vrot.slane %v904, 2
        %v1742 = vsel %vm1715, %v1739, %v1741
        %v1743 = vrot.slane %v905, 2
        %v1744 = vrot.slane %v906, 2
        %v1745 = vsel %vm1715, %v1743, %v1744
        %v1746 = vrot.slane %v907, 2
        %v1747 = vsel %vm1715, %v1744, %v1746
        %v1748 = vrot.slane %v908, 2
        %v1749 = vsel %vm1715, %v1746, %v1748
        %v1750 = vrot.slane %v909, 2
        %v1751 = vsel %vm1715, %v1748, %v1750
        %v1768 = vrot.slane %v1736, 4
        %v1769 = vsel %vm911, %v1768, %v1718
        %v1770 = vrot.slane %v1718, 4
        %v1771 = vsel %vm911, %v1736, %v1770
        %v1773 = vunpack.c.l.s4 1983009808
        %v1774 = vunpack.c.0.s8 %v1773
        %v1775 = vperm.slane %v1769, %v1774
        %v1777 = vunpack.c.l.s4 1983009808
        %v1778 = vunpack.c.0.s8 %v1777
        %v1779 = vperm.slane %v1771, %v1778
        %v1780 = vrot.slane %v1745, 4
        %v1781 = vsel %vm911, %v1780, %v1727
        %v1782 = vrot.slane %v1727, 4
        %v1783 = vsel %vm911, %v1745, %v1782
        %v1785 = vunpack.c.l.s4 1983009808
        %v1786 = vunpack.c.0.s8 %v1785
        %v1787 = vperm.slane %v1781, %v1786
        %v1789 = vunpack.c.l.s4 1983009808
        %v1790 = vunpack.c.0.s8 %v1789
        %v1791 = vperm.slane %v1783, %v1790
        %v1792 = vrot.slane %v1787, 4
        %v1793 = vsel %vm911, %v1792, %v1775
        %v1794 = vrot.slane %v1775, 4
        %v1795 = vsel %vm911, %v1787, %v1794
        %v1797 = vunpack.c.l.s4 1934713408
        %v1798 = vunpack.c.0.s8 %v1797
        %v1799 = vperm.slane %v1793, %v1798
        %v1801 = vunpack.c.l.s4 1934713408
        %v1802 = vunpack.c.0.s8 %v1801
        %v1803 = vperm.slane %v1795, %v1802
        %v1804 = vrot.slane %v1791, 4
        %v1805 = vsel %vm911, %v1804, %v1779
        %v1806 = vrot.slane %v1779, 4
        %v1807 = vsel %vm911, %v1791, %v1806
        %v1809 = vunpack.c.l.s4 1934713408
        %v1810 = vunpack.c.0.s8 %v1809
        %v1811 = vperm.slane %v1805, %v1810
        %v1813 = vunpack.c.l.s4 1934713408
        %v1814 = vunpack.c.0.s8 %v1813
        %v1815 = vperm.slane %v1807, %v1814
        %v1816 = vrot.slane %v1799, 4
        %v1817 = vsel %vm911, 0.0, %v1816
        %v1818 = vrot.slane %v1803, 4
        %v1819 = vsel %vm911, 0.0, %v1818
        %v1820 = vrot.slane %v1811, 4
        %v1821 = vsel %vm911, 0.0, %v1820
        %v1822 = vrot.slane %v1815, 4
        %v1823 = vsel %vm911, 0.0, %v1822
        %v1824 = vrot.slane %v1738, 4
        %v1825 = vsel %vm911, %v1824, %v1720
        %v1826 = vrot.slane %v1720, 4
        %v1827 = vsel %vm911, %v1738, %v1826
        %v1829 = vunpack.c.l.s4 1983009808
        %v1830 = vunpack.c.0.s8 %v1829
        %v1831 = vperm.slane %v1825, %v1830
        %v1833 = vunpack.c.l.s4 1983009808
        %v1834 = vunpack.c.0.s8 %v1833
        %v1835 = vperm.slane %v1827, %v1834
        %v1836 = vrot.slane %v1747, 4
        %v1837 = vsel %vm911, %v1836, %v1729
        %v1838 = vrot.slane %v1729, 4
        %v1839 = vsel %vm911, %v1747, %v1838
        %v1841 = vunpack.c.l.s4 1983009808
        %v1842 = vunpack.c.0.s8 %v1841
        %v1843 = vperm.slane %v1837, %v1842
        %v1845 = vunpack.c.l.s4 1983009808
        %v1846 = vunpack.c.0.s8 %v1845
        %v1847 = vperm.slane %v1839, %v1846
        %v1848 = vrot.slane %v1843, 4
        %v1849 = vsel %vm911, %v1848, %v1831
        %v1850 = vrot.slane %v1831, 4
        %v1851 = vsel %vm911, %v1843, %v1850
        %v1853 = vunpack.c.l.s4 1934713408
        %v1854 = vunpack.c.0.s8 %v1853
        %v1855 = vperm.slane %v1849, %v1854
        %v1857 = vunpack.c.l.s4 1934713408
        %v1858 = vunpack.c.0.s8 %v1857
        %v1859 = vperm.slane %v1851, %v1858
        %v1860 = vrot.slane %v1847, 4
        %v1861 = vsel %vm911, %v1860, %v1835
        %v1862 = vrot.slane %v1835, 4
        %v1863 = vsel %vm911, %v1847, %v1862
        %v1865 = vunpack.c.l.s4 1934713408
        %v1866 = vunpack.c.0.s8 %v1865
        %v1867 = vperm.slane %v1861, %v1866
        %v1869 = vunpack.c.l.s4 1934713408
        %v1870 = vunpack.c.0.s8 %v1869
        %v1871 = vperm.slane %v1863, %v1870
        %v1872 = vrot.slane %v1855, 4
        %v1873 = vsel %vm911, 0.0, %v1872
        %v1874 = vrot.slane %v1859, 4
        %v1875 = vsel %vm911, 0.0, %v1874
        %v1876 = vrot.slane %v1867, 4
        %v1877 = vsel %vm911, 0.0, %v1876
        %v1878 = vrot.slane %v1871, 4
        %v1879 = vsel %vm911, 0.0, %v1878
        %v1880 = vrot.slane %v1740, 4
        %v1881 = vsel %vm911, %v1880, %v1722
        %v1882 = vrot.slane %v1722, 4
        %v1883 = vsel %vm911, %v1740, %v1882
        %v1885 = vunpack.c.l.s4 1983009808
        %v1886 = vunpack.c.0.s8 %v1885
        %v1887 = vperm.slane %v1881, %v1886
        %v1889 = vunpack.c.l.s4 1983009808
        %v1890 = vunpack.c.0.s8 %v1889
        %v1891 = vperm.slane %v1883, %v1890
        %v1892 = vrot.slane %v1749, 4
        %v1893 = vsel %vm911, %v1892, %v1731
        %v1894 = vrot.slane %v1731, 4
        %v1895 = vsel %vm911, %v1749, %v1894
        %v1897 = vunpack.c.l.s4 1983009808
        %v1898 = vunpack.c.0.s8 %v1897
        %v1899 = vperm.slane %v1893, %v1898
        %v1901 = vunpack.c.l.s4 1983009808
        %v1902 = vunpack.c.0.s8 %v1901
        %v1903 = vperm.slane %v1895, %v1902
        %v1904 = vrot.slane %v1899, 4
        %v1905 = vsel %vm911, %v1904, %v1887
        %v1906 = vrot.slane %v1887, 4
        %v1907 = vsel %vm911, %v1899, %v1906
        %v1909 = vunpack.c.l.s4 1934713408
        %v1910 = vunpack.c.0.s8 %v1909
        %v1911 = vperm.slane %v1905, %v1910
        %v1913 = vunpack.c.l.s4 1934713408
        %v1914 = vunpack.c.0.s8 %v1913
        %v1915 = vperm.slane %v1907, %v1914
        %v1916 = vrot.slane %v1903, 4
        %v1917 = vsel %vm911, %v1916, %v1891
        %v1918 = vrot.slane %v1891, 4
        %v1919 = vsel %vm911, %v1903, %v1918
        %v1921 = vunpack.c.l.s4 1934713408
        %v1922 = vunpack.c.0.s8 %v1921
        %v1923 = vperm.slane %v1917, %v1922
        %v1925 = vunpack.c.l.s4 1934713408
        %v1926 = vunpack.c.0.s8 %v1925
        %v1927 = vperm.slane %v1919, %v1926
        %v1928 = vrot.slane %v1911, 4
        %v1929 = vsel %vm911, 0.0, %v1928
        %v1930 = vrot.slane %v1915, 4
        %v1931 = vsel %vm911, 0.0, %v1930
        %v1932 = vrot.slane %v1923, 4
        %v1933 = vsel %vm911, 0.0, %v1932
        %v1934 = vrot.slane %v1927, 4
        %v1935 = vsel %vm911, 0.0, %v1934
        %v1936 = vrot.slane %v1742, 4
        %v1937 = vsel %vm911, %v1936, %v1724
        %v1938 = vrot.slane %v1724, 4
        %v1939 = vsel %vm911, %v1742, %v1938
        %v1941 = vunpack.c.l.s4 1983009808
        %v1942 = vunpack.c.0.s8 %v1941
        %v1943 = vperm.slane %v1937, %v1942
        %v1945 = vunpack.c.l.s4 1983009808
        %v1946 = vunpack.c.0.s8 %v1945
        %v1947 = vperm.slane %v1939, %v1946
        %v1948 = vrot.slane %v1751, 4
        %v1949 = vsel %vm911, %v1948, %v1733
        %v1950 = vrot.slane %v1733, 4
        %v1951 = vsel %vm911, %v1751, %v1950
        %v1953 = vunpack.c.l.s4 1983009808
        %v1954 = vunpack.c.0.s8 %v1953
        %v1955 = vperm.slane %v1949, %v1954
        %v1957 = vunpack.c.l.s4 1983009808
        %v1958 = vunpack.c.0.s8 %v1957
        %v1959 = vperm.slane %v1951, %v1958
        %v1960 = vrot.slane %v1955, 4
        %v1961 = vsel %vm911, %v1960, %v1943
        %v1962 = vrot.slane %v1943, 4
        %v1963 = vsel %vm911, %v1955, %v1962
        %v1965 = vunpack.c.l.s4 1934713408
        %v1966 = vunpack.c.0.s8 %v1965
        %v1967 = vperm.slane %v1961, %v1966
        %v1969 = vunpack.c.l.s4 1934713408
        %v1970 = vunpack.c.0.s8 %v1969
        %v1971 = vperm.slane %v1963, %v1970
        %v1972 = vrot.slane %v1959, 4
        %v1973 = vsel %vm911, %v1972, %v1947
        %v1974 = vrot.slane %v1947, 4
        %v1975 = vsel %vm911, %v1959, %v1974
        %v1977 = vunpack.c.l.s4 1934713408
        %v1978 = vunpack.c.0.s8 %v1977
        %v1979 = vperm.slane %v1973, %v1978
        %v1981 = vunpack.c.l.s4 1934713408
        %v1982 = vunpack.c.0.s8 %v1981
        %v1983 = vperm.slane %v1975, %v1982
        %v1984 = vrot.slane %v1967, 4
        %v1985 = vsel %vm911, 0.0, %v1984
        %v1986 = vrot.slane %v1971, 4
        %v1987 = vsel %vm911, 0.0, %v1986
        %v1988 = vrot.slane %v1979, 4
        %v1989 = vsel %vm911, 0.0, %v1988
        %v1990 = vrot.slane %v1983, 4
        %v1991 = vsel %vm911, 0.0, %v1990
        %1993 = vrot.lane.b32.xlu0 %v1817, 32
        %v1994 = vpop.permute.xlu0 %1993
        %1997 = vrot.lane.b32.xlu0 %v1803, 64
        %v1998 = vpop.permute.xlu0 %1997
        %2001 = vrot.lane.b32.xlu0 %v1819, 96
        %v2002 = vpop.permute.xlu0 %2001
        %2005 = vrot.lane.b32.xlu0 %v1821, 32
        %v2006 = vpop.permute.xlu0 %2005
        %2009 = vrot.lane.b32.xlu0 %v1815, 64
        %v2010 = vpop.permute.xlu0 %2009
        %2013 = vrot.lane.b32.xlu0 %v1823, 96
        %v2014 = vpop.permute.xlu0 %2013
        %2017 = vrot.lane.b32.xlu0 %v1873, 32
        %v2018 = vpop.permute.xlu0 %2017
        %2021 = vrot.lane.b32.xlu0 %v1859, 64
        %v2022 = vpop.permute.xlu0 %2021
        %2025 = vrot.lane.b32.xlu0 %v1875, 96
        %v2026 = vpop.permute.xlu0 %2025
        %2029 = vrot.lane.b32.xlu0 %v1877, 32
        %v2030 = vpop.permute.xlu0 %2029
        %2033 = vrot.lane.b32.xlu0 %v1871, 64
        %v2034 = vpop.permute.xlu0 %2033
        %2037 = vrot.lane.b32.xlu0 %v1879, 96
        %v2038 = vpop.permute.xlu0 %2037
        %2041 = vrot.lane.b32.xlu0 %v1929, 32
        %v2042 = vpop.permute.xlu0 %2041
        %2045 = vrot.lane.b32.xlu0 %v1915, 64
        %v2046 = vpop.permute.xlu0 %2045
        %2049 = vrot.lane.b32.xlu0 %v1931, 96
        %v2050 = vpop.permute.xlu0 %2049
        %2053 = vrot.lane.b32.xlu0 %v1933, 32
        %v2054 = vpop.permute.xlu0 %2053
        %2057 = vrot.lane.b32.xlu0 %v1927, 64
        %v2058 = vpop.permute.xlu0 %2057
        %2061 = vrot.lane.b32.xlu0 %v1935, 96
        %v2062 = vpop.permute.xlu0 %2061
        %2065 = vrot.lane.b32.xlu0 %v1985, 32
        %v2066 = vpop.permute.xlu0 %2065
        %2069 = vrot.lane.b32.xlu0 %v1971, 64
        %v2070 = vpop.permute.xlu0 %2069
        %2073 = vrot.lane.b32.xlu0 %v1987, 96
        %v2074 = vpop.permute.xlu0 %2073
        %2077 = vrot.lane.b32.xlu0 %v1989, 32
        %v2078 = vpop.permute.xlu0 %2077
        %2081 = vrot.lane.b32.xlu0 %v1983, 64
        %v2082 = vpop.permute.xlu0 %2081
        %2085 = vrot.lane.b32.xlu0 %v1991, 96
        %v2086 = vpop.permute.xlu0 %2085
        %v2088 = vsel %vm1231, %v1799, %v1994
        %v2089 = vsel %vm1233, %v2088, %v1998
        %v2090 = vsel %vm1235, %v2089, %v2002
        %v2091 = vsel %vm1231, %v1811, %v2006
        %v2092 = vsel %vm1233, %v2091, %v2010
        %v2093 = vsel %vm1235, %v2092, %v2014
        %v2094 = vsel %vm1231, %v1855, %v2018
        %v2095 = vsel %vm1233, %v2094, %v2022
        %v2096 = vsel %vm1235, %v2095, %v2026
        %v2097 = vsel %vm1231, %v1867, %v2030
        %v2098 = vsel %vm1233, %v2097, %v2034
        %v2099 = vsel %vm1235, %v2098, %v2038
        %v2100 = vsel %vm1231, %v1911, %v2042
        %v2101 = vsel %vm1233, %v2100, %v2046
        %v2102 = vsel %vm1235, %v2101, %v2050
        %v2103 = vsel %vm1231, %v1923, %v2054
        %v2104 = vsel %vm1233, %v2103, %v2058
        %v2105 = vsel %vm1235, %v2104, %v2062
        %v2106 = vsel %vm1231, %v1967, %v2066
        %v2107 = vsel %vm1233, %v2106, %v2070
        %v2108 = vsel %vm1235, %v2107, %v2074
        %v2109 = vsel %vm1231, %v1979, %v2078
        %v2110 = vsel %vm1233, %v2109, %v2082
        %v2111 = vsel %vm1235, %v2110, %v2086
        %2112 = vst [vmem:[#allocation3 + $0xc0] sm:$0xf] %v2090
        %2113 = vst [vmem:[#allocation3 + $0xc8] sm:$0xf] %v2093
        %2114 = vst [vmem:[#allocation3 + $0xd0] sm:$0xf] %v2096
        %2115 = vst [vmem:[#allocation3 + $0xd8] sm:$0xf] %v2099
        %2116 = vst [vmem:[#allocation3 + $0xe0] sm:$0xf] %v2102
        %2117 = vst [vmem:[#allocation3 + $0xe8] sm:$0xf] %v2105
        %2118 = vst [vmem:[#allocation3 + $0xf0] sm:$0xf] %v2108
        %2119 = vst [vmem:[#allocation3 + $0xf8] sm:$0xf] %v2111
        %v2120 = vld [vmem:[%s889] sm:$0xff]
        %v2121 = vld [vmem:[%s889 + $0x8] sm:$0xff]
        %v2122 = vld [vmem:[%s889 + $0x10] sm:$0xff]
        %v2123 = vld [vmem:[%s889 + $0x18] sm:$0xff]
        %v2124 = vld [vmem:[%s889 + $0x20] sm:$0x3]
        %v2125 = vld [vmem:[%s889 + $0x28] sm:$0xff]
        %v2126 = vld [vmem:[%s889 + $0x30] sm:$0xff]
        %v2127 = vld [vmem:[%s889 + $0x38] sm:$0xff]
        %v2128 = vld [vmem:[%s889 + $0x40] sm:$0xff]
        %v2129 = vld [vmem:[%s889 + $0x48] sm:$0x3]
        %v2130 = vld [vmem:[%s889 + $0x50] sm:$0xff]
        %v2131 = vld [vmem:[%s889 + $0x58] sm:$0xff]
        %v2132 = vld [vmem:[%s889 + $0x60] sm:$0xff]
        %v2133 = vld [vmem:[%s889 + $0x68] sm:$0xff]
        %v2134 = vld [vmem:[%s889 + $0x70] sm:$0x3]
        %v2135 = vld [vmem:[%s889 + $0x78] sm:$0xff]
        %v2136 = vld [vmem:[%s889 + $0x80] sm:$0xff]
        %v2137 = vld [vmem:[%s889 + $0x88] sm:$0xff]
        %v2138 = vld [vmem:[%s889 + $0x90] sm:$0xff]
        %v2139 = vld [vmem:[%s889 + $0x98] sm:$0x3]
        %2156 = vrot.lane.b32.xlu0 %v2120, 127
        %v2157 = vpop.permute.xlu0 %2156
        %2158 = vrot.lane.b32.xlu0 %v2121, 127
        %v2159 = vpop.permute.xlu0 %2158
        %2160 = vrot.lane.b32.xlu0 %v2122, 127
        %v2161 = vpop.permute.xlu0 %2160
        %2162 = vrot.lane.b32.xlu0 %v2123, 127
        %v2163 = vpop.permute.xlu0 %2162
        %2164 = vrot.lane.b32.xlu0 %v2125, 127
        %v2165 = vpop.permute.xlu0 %2164
        %2166 = vrot.lane.b32.xlu0 %v2126, 127
        %v2167 = vpop.permute.xlu0 %2166
        %2168 = vrot.lane.b32.xlu0 %v2127, 127
        %v2169 = vpop.permute.xlu0 %2168
        %2170 = vrot.lane.b32.xlu0 %v2128, 127
        %v2171 = vpop.permute.xlu0 %2170
        %2172 = vrot.lane.b32.xlu0 %v2130, 127
        %v2173 = vpop.permute.xlu0 %2172
        %2174 = vrot.lane.b32.xlu0 %v2131, 127
        %v2175 = vpop.permute.xlu0 %2174
        %2176 = vrot.lane.b32.xlu0 %v2132, 127
        %v2177 = vpop.permute.xlu0 %2176
        %2178 = vrot.lane.b32.xlu0 %v2133, 127
        %v2179 = vpop.permute.xlu0 %2178
        %2180 = vrot.lane.b32.xlu0 %v2135, 127
        %v2181 = vpop.permute.xlu0 %2180
        %2182 = vrot.lane.b32.xlu0 %v2136, 127
        %v2183 = vpop.permute.xlu0 %2182
        %2184 = vrot.lane.b32.xlu0 %v2137, 127
        %v2185 = vpop.permute.xlu0 %2184
        %2186 = vrot.lane.b32.xlu0 %v2138, 127
        %v2187 = vpop.permute.xlu0 %2186
        %v2204 = vrot.slane %v2173, 4
        %v2205 = vsel %vm911, %v2204, %v2157
        %v2206 = vrot.slane %v2157, 4
        %v2207 = vsel %vm911, %v2173, %v2206
        %v2209 = vunpack.c.l.s4 1983009808
        %v2210 = vunpack.c.0.s8 %v2209
        %v2211 = vperm.slane %v2205, %v2210
        %v2213 = vunpack.c.l.s4 1983009808
        %v2214 = vunpack.c.0.s8 %v2213
        %v2215 = vperm.slane %v2207, %v2214
        %v2216 = vrot.slane %v2181, 4
        %v2217 = vsel %vm911, %v2216, %v2165
        %v2218 = vrot.slane %v2165, 4
        %v2219 = vsel %vm911, %v2181, %v2218
        %v2221 = vunpack.c.l.s4 1983009808
        %v2222 = vunpack.c.0.s8 %v2221
        %v2223 = vperm.slane %v2217, %v2222
        %v2225 = vunpack.c.l.s4 1983009808
        %v2226 = vunpack.c.0.s8 %v2225
        %v2227 = vperm.slane %v2219, %v2226
        %v2228 = vrot.slane %v2223, 4
        %v2229 = vsel %vm911, %v2228, %v2211
        %v2230 = vrot.slane %v2211, 4
        %v2231 = vsel %vm911, %v2223, %v2230
        %v2233 = vunpack.c.l.s4 1934713408
        %v2234 = vunpack.c.0.s8 %v2233
        %v2235 = vperm.slane %v2229, %v2234
        %v2237 = vunpack.c.l.s4 1934713408
        %v2238 = vunpack.c.0.s8 %v2237
        %v2239 = vperm.slane %v2231, %v2238
        %v2240 = vrot.slane %v2227, 4
        %v2241 = vsel %vm911, %v2240, %v2215
        %v2242 = vrot.slane %v2215, 4
        %v2243 = vsel %vm911, %v2227, %v2242
        %v2245 = vunpack.c.l.s4 1934713408
        %v2246 = vunpack.c.0.s8 %v2245
        %v2247 = vperm.slane %v2241, %v2246
        %v2249 = vunpack.c.l.s4 1934713408
        %v2250 = vunpack.c.0.s8 %v2249
        %v2251 = vperm.slane %v2243, %v2250
        %v2252 = vrot.slane %v2235, 4
        %v2253 = vsel %vm911, 0.0, %v2252
        %v2254 = vrot.slane %v2239, 4
        %v2255 = vsel %vm911, 0.0, %v2254
        %v2256 = vrot.slane %v2247, 4
        %v2257 = vsel %vm911, 0.0, %v2256
        %v2258 = vrot.slane %v2251, 4
        %v2259 = vsel %vm911, 0.0, %v2258
        %v2260 = vrot.slane %v2175, 4
        %v2261 = vsel %vm911, %v2260, %v2159
        %v2262 = vrot.slane %v2159, 4
        %v2263 = vsel %vm911, %v2175, %v2262
        %v2265 = vunpack.c.l.s4 1983009808
        %v2266 = vunpack.c.0.s8 %v2265
        %v2267 = vperm.slane %v2261, %v2266
        %v2269 = vunpack.c.l.s4 1983009808
        %v2270 = vunpack.c.0.s8 %v2269
        %v2271 = vperm.slane %v2263, %v2270
        %v2272 = vrot.slane %v2183, 4
        %v2273 = vsel %vm911, %v2272, %v2167
        %v2274 = vrot.slane %v2167, 4
        %v2275 = vsel %vm911, %v2183, %v2274
        %v2277 = vunpack.c.l.s4 1983009808
        %v2278 = vunpack.c.0.s8 %v2277
        %v2279 = vperm.slane %v2273, %v2278
        %v2281 = vunpack.c.l.s4 1983009808
        %v2282 = vunpack.c.0.s8 %v2281
        %v2283 = vperm.slane %v2275, %v2282
        %v2284 = vrot.slane %v2279, 4
        %v2285 = vsel %vm911, %v2284, %v2267
        %v2286 = vrot.slane %v2267, 4
        %v2287 = vsel %vm911, %v2279, %v2286
        %v2289 = vunpack.c.l.s4 1934713408
        %v2290 = vunpack.c.0.s8 %v2289
        %v2291 = vperm.slane %v2285, %v2290
        %v2293 = vunpack.c.l.s4 1934713408
        %v2294 = vunpack.c.0.s8 %v2293
        %v2295 = vperm.slane %v2287, %v2294
        %v2296 = vrot.slane %v2283, 4
        %v2297 = vsel %vm911, %v2296, %v2271
        %v2298 = vrot.slane %v2271, 4
        %v2299 = vsel %vm911, %v2283, %v2298
        %v2301 = vunpack.c.l.s4 1934713408
        %v2302 = vunpack.c.0.s8 %v2301
        %v2303 = vperm.slane %v2297, %v2302
        %v2305 = vunpack.c.l.s4 1934713408
        %v2306 = vunpack.c.0.s8 %v2305
        %v2307 = vperm.slane %v2299, %v2306
        %v2308 = vrot.slane %v2291, 4
        %v2309 = vsel %vm911, 0.0, %v2308
        %v2310 = vrot.slane %v2295, 4
        %v2311 = vsel %vm911, 0.0, %v2310
        %v2312 = vrot.slane %v2303, 4
        %v2313 = vsel %vm911, 0.0, %v2312
        %v2314 = vrot.slane %v2307, 4
        %v2315 = vsel %vm911, 0.0, %v2314
        %v2316 = vrot.slane %v2177, 4
        %v2317 = vsel %vm911, %v2316, %v2161
        %v2318 = vrot.slane %v2161, 4
        %v2319 = vsel %vm911, %v2177, %v2318
        %v2321 = vunpack.c.l.s4 1983009808
        %v2322 = vunpack.c.0.s8 %v2321
        %v2323 = vperm.slane %v2317, %v2322
        %v2325 = vunpack.c.l.s4 1983009808
        %v2326 = vunpack.c.0.s8 %v2325
        %v2327 = vperm.slane %v2319, %v2326
        %v2328 = vrot.slane %v2185, 4
        %v2329 = vsel %vm911, %v2328, %v2169
        %v2330 = vrot.slane %v2169, 4
        %v2331 = vsel %vm911, %v2185, %v2330
        %v2333 = vunpack.c.l.s4 1983009808
        %v2334 = vunpack.c.0.s8 %v2333
        %v2335 = vperm.slane %v2329, %v2334
        %v2337 = vunpack.c.l.s4 1983009808
        %v2338 = vunpack.c.0.s8 %v2337
        %v2339 = vperm.slane %v2331, %v2338
        %v2340 = vrot.slane %v2335, 4
        %v2341 = vsel %vm911, %v2340, %v2323
        %v2342 = vrot.slane %v2323, 4
        %v2343 = vsel %vm911, %v2335, %v2342
        %v2345 = vunpack.c.l.s4 1934713408
        %v2346 = vunpack.c.0.s8 %v2345
        %v2347 = vperm.slane %v2341, %v2346
        %v2349 = vunpack.c.l.s4 1934713408
        %v2350 = vunpack.c.0.s8 %v2349
        %v2351 = vperm.slane %v2343, %v2350
        %v2352 = vrot.slane %v2339, 4
        %v2353 = vsel %vm911, %v2352, %v2327
        %v2354 = vrot.slane %v2327, 4
        %v2355 = vsel %vm911, %v2339, %v2354
        %v2357 = vunpack.c.l.s4 1934713408
        %v2358 = vunpack.c.0.s8 %v2357
        %v2359 = vperm.slane %v2353, %v2358
        %v2361 = vunpack.c.l.s4 1934713408
        %v2362 = vunpack.c.0.s8 %v2361
        %v2363 = vperm.slane %v2355, %v2362
        %v2364 = vrot.slane %v2347, 4
        %v2365 = vsel %vm911, 0.0, %v2364
        %v2366 = vrot.slane %v2351, 4
        %v2367 = vsel %vm911, 0.0, %v2366
        %v2368 = vrot.slane %v2359, 4
        %v2369 = vsel %vm911, 0.0, %v2368
        %v2370 = vrot.slane %v2363, 4
        %v2371 = vsel %vm911, 0.0, %v2370
        %v2372 = vrot.slane %v2179, 4
        %v2373 = vsel %vm911, %v2372, %v2163
        %v2374 = vrot.slane %v2163, 4
        %v2375 = vsel %vm911, %v2179, %v2374
        %v2377 = vunpack.c.l.s4 1983009808
        %v2378 = vunpack.c.0.s8 %v2377
        %v2379 = vperm.slane %v2373, %v2378
        %v2381 = vunpack.c.l.s4 1983009808
        %v2382 = vunpack.c.0.s8 %v2381
        %v2383 = vperm.slane %v2375, %v2382
        %v2384 = vrot.slane %v2187, 4
        %v2385 = vsel %vm911, %v2384, %v2171
        %v2386 = vrot.slane %v2171, 4
        %v2387 = vsel %vm911, %v2187, %v2386
        %v2389 = vunpack.c.l.s4 1983009808
        %v2390 = vunpack.c.0.s8 %v2389
        %v2391 = vperm.slane %v2385, %v2390
        %v2393 = vunpack.c.l.s4 1983009808
        %v2394 = vunpack.c.0.s8 %v2393
        %v2395 = vperm.slane %v2387, %v2394
        %v2396 = vrot.slane %v2391, 4
        %v2397 = vsel %vm911, %v2396, %v2379
        %v2398 = vrot.slane %v2379, 4
        %v2399 = vsel %vm911, %v2391, %v2398
        %v2401 = vunpack.c.l.s4 1934713408
        %v2402 = vunpack.c.0.s8 %v2401
        %v2403 = vperm.slane %v2397, %v2402
        %v2405 = vunpack.c.l.s4 1934713408
        %v2406 = vunpack.c.0.s8 %v2405
        %v2407 = vperm.slane %v2399, %v2406
        %v2408 = vrot.slane %v2395, 4
        %v2409 = vsel %vm911, %v2408, %v2383
        %v2410 = vrot.slane %v2383, 4
        %v2411 = vsel %vm911, %v2395, %v2410
        %v2413 = vunpack.c.l.s4 1934713408
        %v2414 = vunpack.c.0.s8 %v2413
        %v2415 = vperm.slane %v2409, %v2414
        %v2417 = vunpack.c.l.s4 1934713408
        %v2418 = vunpack.c.0.s8 %v2417
        %v2419 = vperm.slane %v2411, %v2418
        %v2420 = vrot.slane %v2403, 4
        %v2421 = vsel %vm911, 0.0, %v2420
        %v2422 = vrot.slane %v2407, 4
        %v2423 = vsel %vm911, 0.0, %v2422
        %v2424 = vrot.slane %v2415, 4
        %v2425 = vsel %vm911, 0.0, %v2424
        %v2426 = vrot.slane %v2419, 4
        %v2427 = vsel %vm911, 0.0, %v2426
        %2429 = vrot.lane.b32.xlu0 %v2253, 32
        %v2430 = vpop.permute.xlu0 %2429
        %2433 = vrot.lane.b32.xlu0 %v2239, 64
        %v2434 = vpop.permute.xlu0 %2433
        %2437 = vrot.lane.b32.xlu0 %v2255, 96
        %v2438 = vpop.permute.xlu0 %2437
        %2441 = vrot.lane.b32.xlu0 %v2257, 32
        %v2442 = vpop.permute.xlu0 %2441
        %2445 = vrot.lane.b32.xlu0 %v2251, 64
        %v2446 = vpop.permute.xlu0 %2445
        %2449 = vrot.lane.b32.xlu0 %v2259, 96
        %v2450 = vpop.permute.xlu0 %2449
        %2453 = vrot.lane.b32.xlu0 %v2309, 32
        %v2454 = vpop.permute.xlu0 %2453
        %2457 = vrot.lane.b32.xlu0 %v2295, 64
        %v2458 = vpop.permute.xlu0 %2457
        %2461 = vrot.lane.b32.xlu0 %v2311, 96
        %v2462 = vpop.permute.xlu0 %2461
        %2465 = vrot.lane.b32.xlu0 %v2313, 32
        %v2466 = vpop.permute.xlu0 %2465
        %2469 = vrot.lane.b32.xlu0 %v2307, 64
        %v2470 = vpop.permute.xlu0 %2469
        %2473 = vrot.lane.b32.xlu0 %v2315, 96
        %v2474 = vpop.permute.xlu0 %2473
        %2477 = vrot.lane.b32.xlu0 %v2365, 32
        %v2478 = vpop.permute.xlu0 %2477
        %2481 = vrot.lane.b32.xlu0 %v2351, 64
        %v2482 = vpop.permute.xlu0 %2481
        %2485 = vrot.lane.b32.xlu0 %v2367, 96
        %v2486 = vpop.permute.xlu0 %2485
        %2489 = vrot.lane.b32.xlu0 %v2369, 32
        %v2490 = vpop.permute.xlu0 %2489
        %2493 = vrot.lane.b32.xlu0 %v2363, 64
        %v2494 = vpop.permute.xlu0 %2493
        %2497 = vrot.lane.b32.xlu0 %v2371, 96
        %v2498 = vpop.permute.xlu0 %2497
        %2501 = vrot.lane.b32.xlu0 %v2421, 32
        %v2502 = vpop.permute.xlu0 %2501
        %2505 = vrot.lane.b32.xlu0 %v2407, 64
        %v2506 = vpop.permute.xlu0 %2505
        %2509 = vrot.lane.b32.xlu0 %v2423, 96
        %v2510 = vpop.permute.xlu0 %2509
        %2513 = vrot.lane.b32.xlu0 %v2425, 32
        %v2514 = vpop.permute.xlu0 %2513
        %2517 = vrot.lane.b32.xlu0 %v2419, 64
        %v2518 = vpop.permute.xlu0 %2517
        %2521 = vrot.lane.b32.xlu0 %v2427, 96
        %v2522 = vpop.permute.xlu0 %2521
        %v2524 = vsel %vm1231, %v2235, %v2430
        %v2525 = vsel %vm1233, %v2524, %v2434
        %v2526 = vsel %vm1235, %v2525, %v2438
        %v2527 = vsel %vm1231, %v2247, %v2442
        %v2528 = vsel %vm1233, %v2527, %v2446
        %v2529 = vsel %vm1235, %v2528, %v2450
        %v2530 = vsel %vm1231, %v2291, %v2454
        %v2531 = vsel %vm1233, %v2530, %v2458
        %v2532 = vsel %vm1235, %v2531, %v2462
        %v2533 = vsel %vm1231, %v2303, %v2466
        %v2534 = vsel %vm1233, %v2533, %v2470
        %v2535 = vsel %vm1235, %v2534, %v2474
        %v2536 = vsel %vm1231, %v2347, %v2478
        %v2537 = vsel %vm1233, %v2536, %v2482
        %v2538 = vsel %vm1235, %v2537, %v2486
        %v2539 = vsel %vm1231, %v2359, %v2490
        %v2540 = vsel %vm1233, %v2539, %v2494
        %v2541 = vsel %vm1235, %v2540, %v2498
        %v2542 = vsel %vm1231, %v2403, %v2502
        %v2543 = vsel %vm1233, %v2542, %v2506
        %v2544 = vsel %vm1235, %v2543, %v2510
        %v2545 = vsel %vm1231, %v2415, %v2514
        %v2546 = vsel %vm1233, %v2545, %v2518
        %v2547 = vsel %vm1235, %v2546, %v2522
        %v2556 = vrot.slane %v2526, 4
        %v2557 = vrot.slane %v2529, 4
        %v2558 = vrot.slane %v2532, 4
        %v2559 = vrot.slane %v2535, 4
        %v2560 = vrot.slane %v2538, 4
        %v2561 = vrot.slane %v2541, 4
        %v2562 = vrot.slane %v2544, 4
        %v2563 = vrot.slane %v2547, 4
        %2572 = vst [vmem:[#allocation3] sm:$0xf0] %v2556
        %2573 = vst [vmem:[#allocation3 + $0x8] sm:$0xf0] %v2557
        %2574 = vst [vmem:[#allocation3 + $0x10] sm:$0xf0] %v2558
        %2575 = vst [vmem:[#allocation3 + $0x18] sm:$0xf0] %v2559
        %2576 = vst [vmem:[#allocation3 + $0x20] sm:$0xf0] %v2560
        %2577 = vst [vmem:[#allocation3 + $0x28] sm:$0xf0] %v2561
        %2578 = vst [vmem:[#allocation3 + $0x30] sm:$0xf0] %v2562
        %2579 = vst [vmem:[#allocation3 + $0x38] sm:$0xf0] %v2563
        %v2584 = vrot.slane %v2120, 1
        %v2585 = vrot.slane %v2121, 1
        %v2586 = vsel %vm1286, %v2584, %v2585
        %v2587 = vrot.slane %v2122, 1
        %v2588 = vsel %vm1286, %v2585, %v2587
        %v2589 = vrot.slane %v2123, 1
        %v2590 = vsel %vm1286, %v2587, %v2589
        %v2591 = vrot.slane %v2124, 1
        %v2592 = vsel %vm1286, %v2589, %v2591
        %v2593 = vrot.slane %v2125, 1
        %v2594 = vrot.slane %v2126, 1
        %v2595 = vsel %vm1286, %v2593, %v2594
        %v2596 = vrot.slane %v2127, 1
        %v2597 = vsel %vm1286, %v2594, %v2596
        %v2598 = vrot.slane %v2128, 1
        %v2599 = vsel %vm1286, %v2596, %v2598
        %v2600 = vrot.slane %v2129, 1
        %v2601 = vsel %vm1286, %v2598, %v2600
        %v2602 = vrot.slane %v2130, 1
        %v2603 = vrot.slane %v2131, 1
        %v2604 = vsel %vm1286, %v2602, %v2603
        %v2605 = vrot.slane %v2132, 1
        %v2606 = vsel %vm1286, %v2603, %v2605
        %v2607 = vrot.slane %v2133, 1
        %v2608 = vsel %vm1286, %v2605, %v2607
        %v2609 = vrot.slane %v2134, 1
        %v2610 = vsel %vm1286, %v2607, %v2609
        %v2611 = vrot.slane %v2135, 1
        %v2612 = vrot.slane %v2136, 1
        %v2613 = vsel %vm1286, %v2611, %v2612
        %v2614 = vrot.slane %v2137, 1
        %v2615 = vsel %vm1286, %v2612, %v2614
        %v2616 = vrot.slane %v2138, 1
        %v2617 = vsel %vm1286, %v2614, %v2616
        %v2618 = vrot.slane %v2139, 1
        %v2619 = vsel %vm1286, %v2616, %v2618
        %2620 = vrot.lane.b32.xlu0 %v2586, 127
        %v2621 = vpop.permute.xlu0 %2620
        %2622 = vrot.lane.b32.xlu0 %v2588, 127
        %v2623 = vpop.permute.xlu0 %2622
        %2624 = vrot.lane.b32.xlu0 %v2590, 127
        %v2625 = vpop.permute.xlu0 %2624
        %2626 = vrot.lane.b32.xlu0 %v2592, 127
        %v2627 = vpop.permute.xlu0 %2626
        %2628 = vrot.lane.b32.xlu0 %v2595, 127
        %v2629 = vpop.permute.xlu0 %2628
        %2630 = vrot.lane.b32.xlu0 %v2597, 127
        %v2631 = vpop.permute.xlu0 %2630
        %2632 = vrot.lane.b32.xlu0 %v2599, 127
        %v2633 = vpop.permute.xlu0 %2632
        %2634 = vrot.lane.b32.xlu0 %v2601, 127
        %v2635 = vpop.permute.xlu0 %2634
        %2636 = vrot.lane.b32.xlu0 %v2604, 127
        %v2637 = vpop.permute.xlu0 %2636
        %2638 = vrot.lane.b32.xlu0 %v2606, 127
        %v2639 = vpop.permute.xlu0 %2638
        %2640 = vrot.lane.b32.xlu0 %v2608, 127
        %v2641 = vpop.permute.xlu0 %2640
        %2642 = vrot.lane.b32.xlu0 %v2610, 127
        %v2643 = vpop.permute.xlu0 %2642
        %2644 = vrot.lane.b32.xlu0 %v2613, 127
        %v2645 = vpop.permute.xlu0 %2644
        %2646 = vrot.lane.b32.xlu0 %v2615, 127
        %v2647 = vpop.permute.xlu0 %2646
        %2648 = vrot.lane.b32.xlu0 %v2617, 127
        %v2649 = vpop.permute.xlu0 %2648
        %2650 = vrot.lane.b32.xlu0 %v2619, 127
        %v2651 = vpop.permute.xlu0 %2650
        %v2668 = vrot.slane %v2637, 4
        %v2669 = vsel %vm911, %v2668, %v2621
        %v2670 = vrot.slane %v2621, 4
        %v2671 = vsel %vm911, %v2637, %v2670
        %v2673 = vunpack.c.l.s4 1983009808
        %v2674 = vunpack.c.0.s8 %v2673
        %v2675 = vperm.slane %v2669, %v2674
        %v2677 = vunpack.c.l.s4 1983009808
        %v2678 = vunpack.c.0.s8 %v2677
        %v2679 = vperm.slane %v2671, %v2678
        %v2680 = vrot.slane %v2645, 4
        %v2681 = vsel %vm911, %v2680, %v2629
        %v2682 = vrot.slane %v2629, 4
        %v2683 = vsel %vm911, %v2645, %v2682
        %v2685 = vunpack.c.l.s4 1983009808
        %v2686 = vunpack.c.0.s8 %v2685
        %v2687 = vperm.slane %v2681, %v2686
        %v2689 = vunpack.c.l.s4 1983009808
        %v2690 = vunpack.c.0.s8 %v2689
        %v2691 = vperm.slane %v2683, %v2690
        %v2692 = vrot.slane %v2687, 4
        %v2693 = vsel %vm911, %v2692, %v2675
        %v2694 = vrot.slane %v2675, 4
        %v2695 = vsel %vm911, %v2687, %v2694
        %v2697 = vunpack.c.l.s4 1934713408
        %v2698 = vunpack.c.0.s8 %v2697
        %v2699 = vperm.slane %v2693, %v2698
        %v2701 = vunpack.c.l.s4 1934713408
        %v2702 = vunpack.c.0.s8 %v2701
        %v2703 = vperm.slane %v2695, %v2702
        %v2704 = vrot.slane %v2691, 4
        %v2705 = vsel %vm911, %v2704, %v2679
        %v2706 = vrot.slane %v2679, 4
        %v2707 = vsel %vm911, %v2691, %v2706
        %v2709 = vunpack.c.l.s4 1934713408
        %v2710 = vunpack.c.0.s8 %v2709
        %v2711 = vperm.slane %v2705, %v2710
        %v2713 = vunpack.c.l.s4 1934713408
        %v2714 = vunpack.c.0.s8 %v2713
        %v2715 = vperm.slane %v2707, %v2714
        %v2716 = vrot.slane %v2699, 4
        %v2717 = vsel %vm911, 0.0, %v2716
        %v2718 = vrot.slane %v2703, 4
        %v2719 = vsel %vm911, 0.0, %v2718
        %v2720 = vrot.slane %v2711, 4
        %v2721 = vsel %vm911, 0.0, %v2720
        %v2722 = vrot.slane %v2715, 4
        %v2723 = vsel %vm911, 0.0, %v2722
        %v2724 = vrot.slane %v2639, 4
        %v2725 = vsel %vm911, %v2724, %v2623
        %v2726 = vrot.slane %v2623, 4
        %v2727 = vsel %vm911, %v2639, %v2726
        %v2729 = vunpack.c.l.s4 1983009808
        %v2730 = vunpack.c.0.s8 %v2729
        %v2731 = vperm.slane %v2725, %v2730
        %v2733 = vunpack.c.l.s4 1983009808
        %v2734 = vunpack.c.0.s8 %v2733
        %v2735 = vperm.slane %v2727, %v2734
        %v2736 = vrot.slane %v2647, 4
        %v2737 = vsel %vm911, %v2736, %v2631
        %v2738 = vrot.slane %v2631, 4
        %v2739 = vsel %vm911, %v2647, %v2738
        %v2741 = vunpack.c.l.s4 1983009808
        %v2742 = vunpack.c.0.s8 %v2741
        %v2743 = vperm.slane %v2737, %v2742
        %v2745 = vunpack.c.l.s4 1983009808
        %v2746 = vunpack.c.0.s8 %v2745
        %v2747 = vperm.slane %v2739, %v2746
        %v2748 = vrot.slane %v2743, 4
        %v2749 = vsel %vm911, %v2748, %v2731
        %v2750 = vrot.slane %v2731, 4
        %v2751 = vsel %vm911, %v2743, %v2750
        %v2753 = vunpack.c.l.s4 1934713408
        %v2754 = vunpack.c.0.s8 %v2753
        %v2755 = vperm.slane %v2749, %v2754
        %v2757 = vunpack.c.l.s4 1934713408
        %v2758 = vunpack.c.0.s8 %v2757
        %v2759 = vperm.slane %v2751, %v2758
        %v2760 = vrot.slane %v2747, 4
        %v2761 = vsel %vm911, %v2760, %v2735
        %v2762 = vrot.slane %v2735, 4
        %v2763 = vsel %vm911, %v2747, %v2762
        %v2765 = vunpack.c.l.s4 1934713408
        %v2766 = vunpack.c.0.s8 %v2765
        %v2767 = vperm.slane %v2761, %v2766
        %v2769 = vunpack.c.l.s4 1934713408
        %v2770 = vunpack.c.0.s8 %v2769
        %v2771 = vperm.slane %v2763, %v2770
        %v2772 = vrot.slane %v2755, 4
        %v2773 = vsel %vm911, 0.0, %v2772
        %v2774 = vrot.slane %v2759, 4
        %v2775 = vsel %vm911, 0.0, %v2774
        %v2776 = vrot.slane %v2767, 4
        %v2777 = vsel %vm911, 0.0, %v2776
        %v2778 = vrot.slane %v2771, 4
        %v2779 = vsel %vm911, 0.0, %v2778
        %v2780 = vrot.slane %v2641, 4
        %v2781 = vsel %vm911, %v2780, %v2625
        %v2782 = vrot.slane %v2625, 4
        %v2783 = vsel %vm911, %v2641, %v2782
        %v2785 = vunpack.c.l.s4 1983009808
        %v2786 = vunpack.c.0.s8 %v2785
        %v2787 = vperm.slane %v2781, %v2786
        %v2789 = vunpack.c.l.s4 1983009808
        %v2790 = vunpack.c.0.s8 %v2789
        %v2791 = vperm.slane %v2783, %v2790
        %v2792 = vrot.slane %v2649, 4
        %v2793 = vsel %vm911, %v2792, %v2633
        %v2794 = vrot.slane %v2633, 4
        %v2795 = vsel %vm911, %v2649, %v2794
        %v2797 = vunpack.c.l.s4 1983009808
        %v2798 = vunpack.c.0.s8 %v2797
        %v2799 = vperm.slane %v2793, %v2798
        %v2801 = vunpack.c.l.s4 1983009808
        %v2802 = vunpack.c.0.s8 %v2801
        %v2803 = vperm.slane %v2795, %v2802
        %v2804 = vrot.slane %v2799, 4
        %v2805 = vsel %vm911, %v2804, %v2787
        %v2806 = vrot.slane %v2787, 4
        %v2807 = vsel %vm911, %v2799, %v2806
        %v2809 = vunpack.c.l.s4 1934713408
        %v2810 = vunpack.c.0.s8 %v2809
        %v2811 = vperm.slane %v2805, %v2810
        %v2813 = vunpack.c.l.s4 1934713408
        %v2814 = vunpack.c.0.s8 %v2813
        %v2815 = vperm.slane %v2807, %v2814
        %v2816 = vrot.slane %v2803, 4
        %v2817 = vsel %vm911, %v2816, %v2791
        %v2818 = vrot.slane %v2791, 4
        %v2819 = vsel %vm911, %v2803, %v2818
        %v2821 = vunpack.c.l.s4 1934713408
        %v2822 = vunpack.c.0.s8 %v2821
        %v2823 = vperm.slane %v2817, %v2822
        %v2825 = vunpack.c.l.s4 1934713408
        %v2826 = vunpack.c.0.s8 %v2825
        %v2827 = vperm.slane %v2819, %v2826
        %v2828 = vrot.slane %v2811, 4
        %v2829 = vsel %vm911, 0.0, %v2828
        %v2830 = vrot.slane %v2815, 4
        %v2831 = vsel %vm911, 0.0, %v2830
        %v2832 = vrot.slane %v2823, 4
        %v2833 = vsel %vm911, 0.0, %v2832
        %v2834 = vrot.slane %v2827, 4
        %v2835 = vsel %vm911, 0.0, %v2834
        %v2836 = vrot.slane %v2643, 4
        %v2837 = vsel %vm911, %v2836, %v2627
        %v2838 = vrot.slane %v2627, 4
        %v2839 = vsel %vm911, %v2643, %v2838
        %v2841 = vunpack.c.l.s4 1983009808
        %v2842 = vunpack.c.0.s8 %v2841
        %v2843 = vperm.slane %v2837, %v2842
        %v2845 = vunpack.c.l.s4 1983009808
        %v2846 = vunpack.c.0.s8 %v2845
        %v2847 = vperm.slane %v2839, %v2846
        %v2848 = vrot.slane %v2651, 4
        %v2849 = vsel %vm911, %v2848, %v2635
        %v2850 = vrot.slane %v2635, 4
        %v2851 = vsel %vm911, %v2651, %v2850
        %v2853 = vunpack.c.l.s4 1983009808
        %v2854 = vunpack.c.0.s8 %v2853
        %v2855 = vperm.slane %v2849, %v2854
        %v2857 = vunpack.c.l.s4 1983009808
        %v2858 = vunpack.c.0.s8 %v2857
        %v2859 = vperm.slane %v2851, %v2858
        %v2860 = vrot.slane %v2855, 4
        %v2861 = vsel %vm911, %v2860, %v2843
        %v2862 = vrot.slane %v2843, 4
        %v2863 = vsel %vm911, %v2855, %v2862
        %v2865 = vunpack.c.l.s4 1934713408
        %v2866 = vunpack.c.0.s8 %v2865
        %v2867 = vperm.slane %v2861, %v2866
        %v2869 = vunpack.c.l.s4 1934713408
        %v2870 = vunpack.c.0.s8 %v2869
        %v2871 = vperm.slane %v2863, %v2870
        %v2872 = vrot.slane %v2859, 4
        %v2873 = vsel %vm911, %v2872, %v2847
        %v2874 = vrot.slane %v2847, 4
        %v2875 = vsel %vm911, %v2859, %v2874
        %v2877 = vunpack.c.l.s4 1934713408
        %v2878 = vunpack.c.0.s8 %v2877
        %v2879 = vperm.slane %v2873, %v2878
        %v2881 = vunpack.c.l.s4 1934713408
        %v2882 = vunpack.c.0.s8 %v2881
        %v2883 = vperm.slane %v2875, %v2882
        %v2884 = vrot.slane %v2867, 4
        %v2885 = vsel %vm911, 0.0, %v2884
        %v2886 = vrot.slane %v2871, 4
        %v2887 = vsel %vm911, 0.0, %v2886
        %v2888 = vrot.slane %v2879, 4
        %v2889 = vsel %vm911, 0.0, %v2888
        %v2890 = vrot.slane %v2883, 4
        %v2891 = vsel %vm911, 0.0, %v2890
        %2893 = vrot.lane.b32.xlu0 %v2717, 32
        %v2894 = vpop.permute.xlu0 %2893
        %2897 = vrot.lane.b32.xlu0 %v2703, 64
        %v2898 = vpop.permute.xlu0 %2897
        %2901 = vrot.lane.b32.xlu0 %v2719, 96
        %v2902 = vpop.permute.xlu0 %2901
        %2905 = vrot.lane.b32.xlu0 %v2721, 32
        %v2906 = vpop.permute.xlu0 %2905
        %2909 = vrot.lane.b32.xlu0 %v2715, 64
        %v2910 = vpop.permute.xlu0 %2909
        %2913 = vrot.lane.b32.xlu0 %v2723, 96
        %v2914 = vpop.permute.xlu0 %2913
        %2917 = vrot.lane.b32.xlu0 %v2773, 32
        %v2918 = vpop.permute.xlu0 %2917
        %2921 = vrot.lane.b32.xlu0 %v2759, 64
        %v2922 = vpop.permute.xlu0 %2921
        %2925 = vrot.lane.b32.xlu0 %v2775, 96
        %v2926 = vpop.permute.xlu0 %2925
        %2929 = vrot.lane.b32.xlu0 %v2777, 32
        %v2930 = vpop.permute.xlu0 %2929
        %2933 = vrot.lane.b32.xlu0 %v2771, 64
        %v2934 = vpop.permute.xlu0 %2933
        %2937 = vrot.lane.b32.xlu0 %v2779, 96
        %v2938 = vpop.permute.xlu0 %2937
        %2941 = vrot.lane.b32.xlu0 %v2829, 32
        %v2942 = vpop.permute.xlu0 %2941
        %2945 = vrot.lane.b32.xlu0 %v2815, 64
        %v2946 = vpop.permute.xlu0 %2945
        %2949 = vrot.lane.b32.xlu0 %v2831, 96
        %v2950 = vpop.permute.xlu0 %2949
        %2953 = vrot.lane.b32.xlu0 %v2833, 32
        %v2954 = vpop.permute.xlu0 %2953
        %2957 = vrot.lane.b32.xlu0 %v2827, 64
        %v2958 = vpop.permute.xlu0 %2957
        %2961 = vrot.lane.b32.xlu0 %v2835, 96
        %v2962 = vpop.permute.xlu0 %2961
        %2965 = vrot.lane.b32.xlu0 %v2885, 32
        %v2966 = vpop.permute.xlu0 %2965
        %2969 = vrot.lane.b32.xlu0 %v2871, 64
        %v2970 = vpop.permute.xlu0 %2969
        %2973 = vrot.lane.b32.xlu0 %v2887, 96
        %v2974 = vpop.permute.xlu0 %2973
        %2977 = vrot.lane.b32.xlu0 %v2889, 32
        %v2978 = vpop.permute.xlu0 %2977
        %2981 = vrot.lane.b32.xlu0 %v2883, 64
        %v2982 = vpop.permute.xlu0 %2981
        %2985 = vrot.lane.b32.xlu0 %v2891, 96
        %v2986 = vpop.permute.xlu0 %2985
        %v2988 = vsel %vm1231, %v2699, %v2894
        %v2989 = vsel %vm1233, %v2988, %v2898
        %v2990 = vsel %vm1235, %v2989, %v2902
        %v2991 = vsel %vm1231, %v2711, %v2906
        %v2992 = vsel %vm1233, %v2991, %v2910
        %v2993 = vsel %vm1235, %v2992, %v2914
        %v2994 = vsel %vm1231, %v2755, %v2918
        %v2995 = vsel %vm1233, %v2994, %v2922
        %v2996 = vsel %vm1235, %v2995, %v2926
        %v2997 = vsel %vm1231, %v2767, %v2930
        %v2998 = vsel %vm1233, %v2997, %v2934
        %v2999 = vsel %vm1235, %v2998, %v2938
        %v3000 = vsel %vm1231, %v2811, %v2942
        %v3001 = vsel %vm1233, %v3000, %v2946
        %v3002 = vsel %vm1235, %v3001, %v2950
        %v3003 = vsel %vm1231, %v2823, %v2954
        %v3004 = vsel %vm1233, %v3003, %v2958
        %v3005 = vsel %vm1235, %v3004, %v2962
        %v3006 = vsel %vm1231, %v2867, %v2966
        %v3007 = vsel %vm1233, %v3006, %v2970
        %v3008 = vsel %vm1235, %v3007, %v2974
        %v3009 = vsel %vm1231, %v2879, %v2978
        %v3010 = vsel %vm1233, %v3009, %v2982
        %v3011 = vsel %vm1235, %v3010, %v2986
        %3012 = vst [vmem:[#allocation3 + $0x80] sm:$0xf] %v2990
        %3013 = vst [vmem:[#allocation3 + $0x88] sm:$0xf] %v2993
        %3014 = vst [vmem:[#allocation3 + $0x90] sm:$0xf] %v2996
        %3015 = vst [vmem:[#allocation3 + $0x98] sm:$0xf] %v2999
        %3016 = vst [vmem:[#allocation3 + $0xa0] sm:$0xf] %v3002
        %3017 = vst [vmem:[#allocation3 + $0xa8] sm:$0xf] %v3005
        %3018 = vst [vmem:[#allocation3 + $0xb0] sm:$0xf] %v3008
        %3019 = vst [vmem:[#allocation3 + $0xb8] sm:$0xf] %v3011
        %v3020 = vrot.slane %v2120, 2
        %v3021 = vrot.slane %v2121, 2
        %v3022 = vsel %vm1715, %v3020, %v3021
        %v3023 = vrot.slane %v2122, 2
        %v3024 = vsel %vm1715, %v3021, %v3023
        %v3025 = vrot.slane %v2123, 2
        %v3026 = vsel %vm1715, %v3023, %v3025
        %v3027 = vrot.slane %v2124, 2
        %v3028 = vsel %vm1715, %v3025, %v3027
        %v3029 = vrot.slane %v2125, 2
        %v3030 = vrot.slane %v2126, 2
        %v3031 = vsel %vm1715, %v3029, %v3030
        %v3032 = vrot.slane %v2127, 2
        %v3033 = vsel %vm1715, %v3030, %v3032
        %v3034 = vrot.slane %v2128, 2
        %v3035 = vsel %vm1715, %v3032, %v3034
        %v3036 = vrot.slane %v2129, 2
        %v3037 = vsel %vm1715, %v3034, %v3036
        %v3038 = vrot.slane %v2130, 2
        %v3039 = vrot.slane %v2131, 2
        %v3040 = vsel %vm1715, %v3038, %v3039
        %v3041 = vrot.slane %v2132, 2
        %v3042 = vsel %vm1715, %v3039, %v3041
        %v3043 = vrot.slane %v2133, 2
        %v3044 = vsel %vm1715, %v3041, %v3043
        %v3045 = vrot.slane %v2134, 2
        %v3046 = vsel %vm1715, %v3043, %v3045
        %v3047 = vrot.slane %v2135, 2
        %v3048 = vrot.slane %v2136, 2
        %v3049 = vsel %vm1715, %v3047, %v3048
        %v3050 = vrot.slane %v2137, 2
        %v3051 = vsel %vm1715, %v3048, %v3050
        %v3052 = vrot.slane %v2138, 2
        %v3053 = vsel %vm1715, %v3050, %v3052
        %v3054 = vrot.slane %v2139, 2
        %v3055 = vsel %vm1715, %v3052, %v3054
        %3056 = vrot.lane.b32.xlu0 %v3022, 127
        %v3057 = vpop.permute.xlu0 %3056
        %3058 = vrot.lane.b32.xlu0 %v3024, 127
        %v3059 = vpop.permute.xlu0 %3058
        %3060 = vrot.lane.b32.xlu0 %v3026, 127
        %v3061 = vpop.permute.xlu0 %3060
        %3062 = vrot.lane.b32.xlu0 %v3028, 127
        %v3063 = vpop.permute.xlu0 %3062
        %3064 = vrot.lane.b32.xlu0 %v3031, 127
        %v3065 = vpop.permute.xlu0 %3064
        %3066 = vrot.lane.b32.xlu0 %v3033, 127
        %v3067 = vpop.permute.xlu0 %3066
        %3068 = vrot.lane.b32.xlu0 %v3035, 127
        %v3069 = vpop.permute.xlu0 %3068
        %3070 = vrot.lane.b32.xlu0 %v3037, 127
        %v3071 = vpop.permute.xlu0 %3070
        %3072 = vrot.lane.b32.xlu0 %v3040, 127
        %v3073 = vpop.permute.xlu0 %3072
        %3074 = vrot.lane.b32.xlu0 %v3042, 127
        %v3075 = vpop.permute.xlu0 %3074
        %3076 = vrot.lane.b32.xlu0 %v3044, 127
        %v3077 = vpop.permute.xlu0 %3076
        %3078 = vrot.lane.b32.xlu0 %v3046, 127
        %v3079 = vpop.permute.xlu0 %3078
        %3080 = vrot.lane.b32.xlu0 %v3049, 127
        %v3081 = vpop.permute.xlu0 %3080
        %3082 = vrot.lane.b32.xlu0 %v3051, 127
        %v3083 = vpop.permute.xlu0 %3082
        %3084 = vrot.lane.b32.xlu0 %v3053, 127
        %v3085 = vpop.permute.xlu0 %3084
        %3086 = vrot.lane.b32.xlu0 %v3055, 127
        %v3087 = vpop.permute.xlu0 %3086
        %v3104 = vrot.slane %v3073, 4
        %v3105 = vsel %vm911, %v3104, %v3057
        %v3106 = vrot.slane %v3057, 4
        %v3107 = vsel %vm911, %v3073, %v3106
        %v3109 = vunpack.c.l.s4 1983009808
        %v3110 = vunpack.c.0.s8 %v3109
        %v3111 = vperm.slane %v3105, %v3110
        %v3113 = vunpack.c.l.s4 1983009808
        %v3114 = vunpack.c.0.s8 %v3113
        %v3115 = vperm.slane %v3107, %v3114
        %v3116 = vrot.slane %v3081, 4
        %v3117 = vsel %vm911, %v3116, %v3065
        %v3118 = vrot.slane %v3065, 4
        %v3119 = vsel %vm911, %v3081, %v3118
        %v3121 = vunpack.c.l.s4 1983009808
        %v3122 = vunpack.c.0.s8 %v3121
        %v3123 = vperm.slane %v3117, %v3122
        %v3125 = vunpack.c.l.s4 1983009808
        %v3126 = vunpack.c.0.s8 %v3125
        %v3127 = vperm.slane %v3119, %v3126
        %v3128 = vrot.slane %v3123, 4
        %v3129 = vsel %vm911, %v3128, %v3111
        %v3130 = vrot.slane %v3111, 4
        %v3131 = vsel %vm911, %v3123, %v3130
        %v3133 = vunpack.c.l.s4 1934713408
        %v3134 = vunpack.c.0.s8 %v3133
        %v3135 = vperm.slane %v3129, %v3134
        %v3137 = vunpack.c.l.s4 1934713408
        %v3138 = vunpack.c.0.s8 %v3137
        %v3139 = vperm.slane %v3131, %v3138
        %v3140 = vrot.slane %v3127, 4
        %v3141 = vsel %vm911, %v3140, %v3115
        %v3142 = vrot.slane %v3115, 4
        %v3143 = vsel %vm911, %v3127, %v3142
        %v3145 = vunpack.c.l.s4 1934713408
        %v3146 = vunpack.c.0.s8 %v3145
        %v3147 = vperm.slane %v3141, %v3146
        %v3149 = vunpack.c.l.s4 1934713408
        %v3150 = vunpack.c.0.s8 %v3149
        %v3151 = vperm.slane %v3143, %v3150
        %v3152 = vrot.slane %v3135, 4
        %v3153 = vsel %vm911, 0.0, %v3152
        %v3154 = vrot.slane %v3139, 4
        %v3155 = vsel %vm911, 0.0, %v3154
        %v3156 = vrot.slane %v3147, 4
        %v3157 = vsel %vm911, 0.0, %v3156
        %v3158 = vrot.slane %v3151, 4
        %v3159 = vsel %vm911, 0.0, %v3158
        %v3160 = vrot.slane %v3075, 4
        %v3161 = vsel %vm911, %v3160, %v3059
        %v3162 = vrot.slane %v3059, 4
        %v3163 = vsel %vm911, %v3075, %v3162
        %v3165 = vunpack.c.l.s4 1983009808
        %v3166 = vunpack.c.0.s8 %v3165
        %v3167 = vperm.slane %v3161, %v3166
        %v3169 = vunpack.c.l.s4 1983009808
        %v3170 = vunpack.c.0.s8 %v3169
        %v3171 = vperm.slane %v3163, %v3170
        %v3172 = vrot.slane %v3083, 4
        %v3173 = vsel %vm911, %v3172, %v3067
        %v3174 = vrot.slane %v3067, 4
        %v3175 = vsel %vm911, %v3083, %v3174
        %v3177 = vunpack.c.l.s4 1983009808
        %v3178 = vunpack.c.0.s8 %v3177
        %v3179 = vperm.slane %v3173, %v3178
        %v3181 = vunpack.c.l.s4 1983009808
        %v3182 = vunpack.c.0.s8 %v3181
        %v3183 = vperm.slane %v3175, %v3182
        %v3184 = vrot.slane %v3179, 4
        %v3185 = vsel %vm911, %v3184, %v3167
        %v3186 = vrot.slane %v3167, 4
        %v3187 = vsel %vm911, %v3179, %v3186
        %v3189 = vunpack.c.l.s4 1934713408
        %v3190 = vunpack.c.0.s8 %v3189
        %v3191 = vperm.slane %v3185, %v3190
        %v3193 = vunpack.c.l.s4 1934713408
        %v3194 = vunpack.c.0.s8 %v3193
        %v3195 = vperm.slane %v3187, %v3194
        %v3196 = vrot.slane %v3183, 4
        %v3197 = vsel %vm911, %v3196, %v3171
        %v3198 = vrot.slane %v3171, 4
        %v3199 = vsel %vm911, %v3183, %v3198
        %v3201 = vunpack.c.l.s4 1934713408
        %v3202 = vunpack.c.0.s8 %v3201
        %v3203 = vperm.slane %v3197, %v3202
        %v3205 = vunpack.c.l.s4 1934713408
        %v3206 = vunpack.c.0.s8 %v3205
        %v3207 = vperm.slane %v3199, %v3206
        %v3208 = vrot.slane %v3191, 4
        %v3209 = vsel %vm911, 0.0, %v3208
        %v3210 = vrot.slane %v3195, 4
        %v3211 = vsel %vm911, 0.0, %v3210
        %v3212 = vrot.slane %v3203, 4
        %v3213 = vsel %vm911, 0.0, %v3212
        %v3214 = vrot.slane %v3207, 4
        %v3215 = vsel %vm911, 0.0, %v3214
        %v3216 = vrot.slane %v3077, 4
        %v3217 = vsel %vm911, %v3216, %v3061
        %v3218 = vrot.slane %v3061, 4
        %v3219 = vsel %vm911, %v3077, %v3218
        %v3221 = vunpack.c.l.s4 1983009808
        %v3222 = vunpack.c.0.s8 %v3221
        %v3223 = vperm.slane %v3217, %v3222
        %v3225 = vunpack.c.l.s4 1983009808
        %v3226 = vunpack.c.0.s8 %v3225
        %v3227 = vperm.slane %v3219, %v3226
        %v3228 = vrot.slane %v3085, 4
        %v3229 = vsel %vm911, %v3228, %v3069
        %v3230 = vrot.slane %v3069, 4
        %v3231 = vsel %vm911, %v3085, %v3230
        %v3233 = vunpack.c.l.s4 1983009808
        %v3234 = vunpack.c.0.s8 %v3233
        %v3235 = vperm.slane %v3229, %v3234
        %v3237 = vunpack.c.l.s4 1983009808
        %v3238 = vunpack.c.0.s8 %v3237
        %v3239 = vperm.slane %v3231, %v3238
        %v3240 = vrot.slane %v3235, 4
        %v3241 = vsel %vm911, %v3240, %v3223
        %v3242 = vrot.slane %v3223, 4
        %v3243 = vsel %vm911, %v3235, %v3242
        %v3245 = vunpack.c.l.s4 1934713408
        %v3246 = vunpack.c.0.s8 %v3245
        %v3247 = vperm.slane %v3241, %v3246
        %v3249 = vunpack.c.l.s4 1934713408
        %v3250 = vunpack.c.0.s8 %v3249
        %v3251 = vperm.slane %v3243, %v3250
        %v3252 = vrot.slane %v3239, 4
        %v3253 = vsel %vm911, %v3252, %v3227
        %v3254 = vrot.slane %v3227, 4
        %v3255 = vsel %vm911, %v3239, %v3254
        %v3257 = vunpack.c.l.s4 1934713408
        %v3258 = vunpack.c.0.s8 %v3257
        %v3259 = vperm.slane %v3253, %v3258
        %v3261 = vunpack.c.l.s4 1934713408
        %v3262 = vunpack.c.0.s8 %v3261
        %v3263 = vperm.slane %v3255, %v3262
        %v3264 = vrot.slane %v3247, 4
        %v3265 = vsel %vm911, 0.0, %v3264
        %v3266 = vrot.slane %v3251, 4
        %v3267 = vsel %vm911, 0.0, %v3266
        %v3268 = vrot.slane %v3259, 4
        %v3269 = vsel %vm911, 0.0, %v3268
        %v3270 = vrot.slane %v3263, 4
        %v3271 = vsel %vm911, 0.0, %v3270
        %v3272 = vrot.slane %v3079, 4
        %v3273 = vsel %vm911, %v3272, %v3063
        %v3274 = vrot.slane %v3063, 4
        %v3275 = vsel %vm911, %v3079, %v3274
        %v3277 = vunpack.c.l.s4 1983009808
        %v3278 = vunpack.c.0.s8 %v3277
        %v3279 = vperm.slane %v3273, %v3278
        %v3281 = vunpack.c.l.s4 1983009808
        %v3282 = vunpack.c.0.s8 %v3281
        %v3283 = vperm.slane %v3275, %v3282
        %v3284 = vrot.slane %v3087, 4
        %v3285 = vsel %vm911, %v3284, %v3071
        %v3286 = vrot.slane %v3071, 4
        %v3287 = vsel %vm911, %v3087, %v3286
        %v3289 = vunpack.c.l.s4 1983009808
        %v3290 = vunpack.c.0.s8 %v3289
        %v3291 = vperm.slane %v3285, %v3290
        %v3293 = vunpack.c.l.s4 1983009808
        %v3294 = vunpack.c.0.s8 %v3293
        %v3295 = vperm.slane %v3287, %v3294
        %v3296 = vrot.slane %v3291, 4
        %v3297 = vsel %vm911, %v3296, %v3279
        %v3298 = vrot.slane %v3279, 4
        %v3299 = vsel %vm911, %v3291, %v3298
        %v3301 = vunpack.c.l.s4 1934713408
        %v3302 = vunpack.c.0.s8 %v3301
        %v3303 = vperm.slane %v3297, %v3302
        %v3305 = vunpack.c.l.s4 1934713408
        %v3306 = vunpack.c.0.s8 %v3305
        %v3307 = vperm.slane %v3299, %v3306
        %v3308 = vrot.slane %v3295, 4
        %v3309 = vsel %vm911, %v3308, %v3283
        %v3310 = vrot.slane %v3283, 4
        %v3311 = vsel %vm911, %v3295, %v3310
        %v3313 = vunpack.c.l.s4 1934713408
        %v3314 = vunpack.c.0.s8 %v3313
        %v3315 = vperm.slane %v3309, %v3314
        %v3317 = vunpack.c.l.s4 1934713408
        %v3318 = vunpack.c.0.s8 %v3317
        %v3319 = vperm.slane %v3311, %v3318
        %v3320 = vrot.slane %v3303, 4
        %v3321 = vsel %vm911, 0.0, %v3320
        %v3322 = vrot.slane %v3307, 4
        %v3323 = vsel %vm911, 0.0, %v3322
        %v3324 = vrot.slane %v3315, 4
        %v3325 = vsel %vm911, 0.0, %v3324
        %v3326 = vrot.slane %v3319, 4
        %v3327 = vsel %vm911, 0.0, %v3326
        %3329 = vrot.lane.b32.xlu0 %v3153, 32
        %v3330 = vpop.permute.xlu0 %3329
        %3333 = vrot.lane.b32.xlu0 %v3139, 64
        %v3334 = vpop.permute.xlu0 %3333
        %3337 = vrot.lane.b32.xlu0 %v3155, 96
        %v3338 = vpop.permute.xlu0 %3337
        %3341 = vrot.lane.b32.xlu0 %v3157, 32
        %v3342 = vpop.permute.xlu0 %3341
        %3345 = vrot.lane.b32.xlu0 %v3151, 64
        %v3346 = vpop.permute.xlu0 %3345
        %3349 = vrot.lane.b32.xlu0 %v3159, 96
        %v3350 = vpop.permute.xlu0 %3349
        %3353 = vrot.lane.b32.xlu0 %v3209, 32
        %v3354 = vpop.permute.xlu0 %3353
        %3357 = vrot.lane.b32.xlu0 %v3195, 64
        %v3358 = vpop.permute.xlu0 %3357
        %3361 = vrot.lane.b32.xlu0 %v3211, 96
        %v3362 = vpop.permute.xlu0 %3361
        %3365 = vrot.lane.b32.xlu0 %v3213, 32
        %v3366 = vpop.permute.xlu0 %3365
        %3369 = vrot.lane.b32.xlu0 %v3207, 64
        %v3370 = vpop.permute.xlu0 %3369
        %3373 = vrot.lane.b32.xlu0 %v3215, 96
        %v3374 = vpop.permute.xlu0 %3373
        %3377 = vrot.lane.b32.xlu0 %v3265, 32
        %v3378 = vpop.permute.xlu0 %3377
        %3381 = vrot.lane.b32.xlu0 %v3251, 64
        %v3382 = vpop.permute.xlu0 %3381
        %3385 = vrot.lane.b32.xlu0 %v3267, 96
        %v3386 = vpop.permute.xlu0 %3385
        %3389 = vrot.lane.b32.xlu0 %v3269, 32
        %v3390 = vpop.permute.xlu0 %3389
        %3393 = vrot.lane.b32.xlu0 %v3263, 64
        %v3394 = vpop.permute.xlu0 %3393
        %3397 = vrot.lane.b32.xlu0 %v3271, 96
        %v3398 = vpop.permute.xlu0 %3397
        %3401 = vrot.lane.b32.xlu0 %v3321, 32
        %v3402 = vpop.permute.xlu0 %3401
        %3405 = vrot.lane.b32.xlu0 %v3307, 64
        %v3406 = vpop.permute.xlu0 %3405
        %3409 = vrot.lane.b32.xlu0 %v3323, 96
        %v3410 = vpop.permute.xlu0 %3409
        %3413 = vrot.lane.b32.xlu0 %v3325, 32
        %v3414 = vpop.permute.xlu0 %3413
        %3417 = vrot.lane.b32.xlu0 %v3319, 64
        %v3418 = vpop.permute.xlu0 %3417
        %3421 = vrot.lane.b32.xlu0 %v3327, 96
        %v3422 = vpop.permute.xlu0 %3421
        %v3424 = vsel %vm1231, %v3135, %v3330
        %v3425 = vsel %vm1233, %v3424, %v3334
        %v3426 = vsel %vm1235, %v3425, %v3338
        %v3427 = vsel %vm1231, %v3147, %v3342
        %v3428 = vsel %vm1233, %v3427, %v3346
        %v3429 = vsel %vm1235, %v3428, %v3350
        %v3430 = vsel %vm1231, %v3191, %v3354
        %v3431 = vsel %vm1233, %v3430, %v3358
        %v3432 = vsel %vm1235, %v3431, %v3362
        %v3433 = vsel %vm1231, %v3203, %v3366
        %v3434 = vsel %vm1233, %v3433, %v3370
        %v3435 = vsel %vm1235, %v3434, %v3374
        %v3436 = vsel %vm1231, %v3247, %v3378
        %v3437 = vsel %vm1233, %v3436, %v3382
        %v3438 = vsel %vm1235, %v3437, %v3386
        %v3439 = vsel %vm1231, %v3259, %v3390
        %v3440 = vsel %vm1233, %v3439, %v3394
        %v3441 = vsel %vm1235, %v3440, %v3398
        %v3442 = vsel %vm1231, %v3303, %v3402
        %v3443 = vsel %vm1233, %v3442, %v3406
        %v3444 = vsel %vm1235, %v3443, %v3410
        %v3445 = vsel %vm1231, %v3315, %v3414
        %v3446 = vsel %vm1233, %v3445, %v3418
        %v3447 = vsel %vm1235, %v3446, %v3422
        %v3456 = vrot.slane %v3426, 4
        %v3457 = vrot.slane %v3429, 4
        %v3458 = vrot.slane %v3432, 4
        %v3459 = vrot.slane %v3435, 4
        %v3460 = vrot.slane %v3438, 4
        %v3461 = vrot.slane %v3441, 4
        %v3462 = vrot.slane %v3444, 4
        %v3463 = vrot.slane %v3447, 4
        %3472 = vst [vmem:[#allocation3 + $0xc0] sm:$0xf0] %v3456
        %3473 = vst [vmem:[#allocation3 + $0xc8] sm:$0xf0] %v3457
        %3474 = vst [vmem:[#allocation3 + $0xd0] sm:$0xf0] %v3458
        %3475 = vst [vmem:[#allocation3 + $0xd8] sm:$0xf0] %v3459
        %3476 = vst [vmem:[#allocation3 + $0xe0] sm:$0xf0] %v3460
        %3477 = vst [vmem:[#allocation3 + $0xe8] sm:$0xf0] %v3461
        %3478 = vst [vmem:[#allocation3 + $0xf0] sm:$0xf0] %v3462
        %3479 = vst [vmem:[#allocation3 + $0xf8] sm:$0xf0] %v3463
        %v3480 = vld [vmem:[%s889] sm:$0xff]
        %v3481 = vld [vmem:[%s889 + $0x8] sm:$0xff]
        %v3482 = vld [vmem:[%s889 + $0x10] sm:$0xff]
        %v3483 = vld [vmem:[%s889 + $0x18] sm:$0xff]
        %v3484 = vld [vmem:[%s889 + $0x20] sm:$0x3]
        %v3485 = vld [vmem:[%s889 + $0x28] sm:$0xff]
        %v3486 = vld [vmem:[%s889 + $0x30] sm:$0xff]
        %v3487 = vld [vmem:[%s889 + $0x38] sm:$0xff]
        %v3488 = vld [vmem:[%s889 + $0x40] sm:$0xff]
        %v3489 = vld [vmem:[%s889 + $0x48] sm:$0x3]
        %v3490 = vld [vmem:[%s889 + $0x50] sm:$0xff]
        %v3491 = vld [vmem:[%s889 + $0x58] sm:$0xff]
        %v3492 = vld [vmem:[%s889 + $0x60] sm:$0xff]
        %v3493 = vld [vmem:[%s889 + $0x68] sm:$0xff]
        %v3494 = vld [vmem:[%s889 + $0x70] sm:$0x3]
        %v3495 = vld [vmem:[%s889 + $0x78] sm:$0xff]
        %v3496 = vld [vmem:[%s889 + $0x80] sm:$0xff]
        %v3497 = vld [vmem:[%s889 + $0x88] sm:$0xff]
        %v3498 = vld [vmem:[%s889 + $0x90] sm:$0xff]
        %v3499 = vld [vmem:[%s889 + $0x98] sm:$0x3]
        %3516 = vrot.lane.b32.xlu0 %v3480, 126
        %v3517 = vpop.permute.xlu0 %3516
        %3518 = vrot.lane.b32.xlu0 %v3481, 126
        %v3519 = vpop.permute.xlu0 %3518
        %3520 = vrot.lane.b32.xlu0 %v3482, 126
        %v3521 = vpop.permute.xlu0 %3520
        %3522 = vrot.lane.b32.xlu0 %v3483, 126
        %v3523 = vpop.permute.xlu0 %3522
        %3524 = vrot.lane.b32.xlu0 %v3485, 126
        %v3525 = vpop.permute.xlu0 %3524
        %3526 = vrot.lane.b32.xlu0 %v3486, 126
        %v3527 = vpop.permute.xlu0 %3526
        %3528 = vrot.lane.b32.xlu0 %v3487, 126
        %v3529 = vpop.permute.xlu0 %3528
        %3530 = vrot.lane.b32.xlu0 %v3488, 126
        %v3531 = vpop.permute.xlu0 %3530
        %3532 = vrot.lane.b32.xlu0 %v3490, 126
        %v3533 = vpop.permute.xlu0 %3532
        %3534 = vrot.lane.b32.xlu0 %v3491, 126
        %v3535 = vpop.permute.xlu0 %3534
        %3536 = vrot.lane.b32.xlu0 %v3492, 126
        %v3537 = vpop.permute.xlu0 %3536
        %3538 = vrot.lane.b32.xlu0 %v3493, 126
        %v3539 = vpop.permute.xlu0 %3538
        %3540 = vrot.lane.b32.xlu0 %v3495, 126
        %v3541 = vpop.permute.xlu0 %3540
        %3542 = vrot.lane.b32.xlu0 %v3496, 126
        %v3543 = vpop.permute.xlu0 %3542
        %3544 = vrot.lane.b32.xlu0 %v3497, 126
        %v3545 = vpop.permute.xlu0 %3544
        %3546 = vrot.lane.b32.xlu0 %v3498, 126
        %v3547 = vpop.permute.xlu0 %3546
        %v3564 = vrot.slane %v3533, 4
        %v3565 = vsel %vm911, %v3564, %v3517
        %v3566 = vrot.slane %v3517, 4
        %v3567 = vsel %vm911, %v3533, %v3566
        %v3569 = vunpack.c.l.s4 1983009808
        %v3570 = vunpack.c.0.s8 %v3569
        %v3571 = vperm.slane %v3565, %v3570
        %v3573 = vunpack.c.l.s4 1983009808
        %v3574 = vunpack.c.0.s8 %v3573
        %v3575 = vperm.slane %v3567, %v3574
        %v3576 = vrot.slane %v3541, 4
        %v3577 = vsel %vm911, %v3576, %v3525
        %v3578 = vrot.slane %v3525, 4
        %v3579 = vsel %vm911, %v3541, %v3578
        %v3581 = vunpack.c.l.s4 1983009808
        %v3582 = vunpack.c.0.s8 %v3581
        %v3583 = vperm.slane %v3577, %v3582
        %v3585 = vunpack.c.l.s4 1983009808
        %v3586 = vunpack.c.0.s8 %v3585
        %v3587 = vperm.slane %v3579, %v3586
        %v3588 = vrot.slane %v3583, 4
        %v3589 = vsel %vm911, %v3588, %v3571
        %v3590 = vrot.slane %v3571, 4
        %v3591 = vsel %vm911, %v3583, %v3590
        %v3593 = vunpack.c.l.s4 1934713408
        %v3594 = vunpack.c.0.s8 %v3593
        %v3595 = vperm.slane %v3589, %v3594
        %v3597 = vunpack.c.l.s4 1934713408
        %v3598 = vunpack.c.0.s8 %v3597
        %v3599 = vperm.slane %v3591, %v3598
        %v3600 = vrot.slane %v3587, 4
        %v3601 = vsel %vm911, %v3600, %v3575
        %v3602 = vrot.slane %v3575, 4
        %v3603 = vsel %vm911, %v3587, %v3602
        %v3605 = vunpack.c.l.s4 1934713408
        %v3606 = vunpack.c.0.s8 %v3605
        %v3607 = vperm.slane %v3601, %v3606
        %v3609 = vunpack.c.l.s4 1934713408
        %v3610 = vunpack.c.0.s8 %v3609
        %v3611 = vperm.slane %v3603, %v3610
        %v3612 = vrot.slane %v3595, 4
        %v3613 = vsel %vm911, 0.0, %v3612
        %v3614 = vrot.slane %v3599, 4
        %v3615 = vsel %vm911, 0.0, %v3614
        %v3616 = vrot.slane %v3607, 4
        %v3617 = vsel %vm911, 0.0, %v3616
        %v3618 = vrot.slane %v3611, 4
        %v3619 = vsel %vm911, 0.0, %v3618
        %v3620 = vrot.slane %v3535, 4
        %v3621 = vsel %vm911, %v3620, %v3519
        %v3622 = vrot.slane %v3519, 4
        %v3623 = vsel %vm911, %v3535, %v3622
        %v3625 = vunpack.c.l.s4 1983009808
        %v3626 = vunpack.c.0.s8 %v3625
        %v3627 = vperm.slane %v3621, %v3626
        %v3629 = vunpack.c.l.s4 1983009808
        %v3630 = vunpack.c.0.s8 %v3629
        %v3631 = vperm.slane %v3623, %v3630
        %v3632 = vrot.slane %v3543, 4
        %v3633 = vsel %vm911, %v3632, %v3527
        %v3634 = vrot.slane %v3527, 4
        %v3635 = vsel %vm911, %v3543, %v3634
        %v3637 = vunpack.c.l.s4 1983009808
        %v3638 = vunpack.c.0.s8 %v3637
        %v3639 = vperm.slane %v3633, %v3638
        %v3641 = vunpack.c.l.s4 1983009808
        %v3642 = vunpack.c.0.s8 %v3641
        %v3643 = vperm.slane %v3635, %v3642
        %v3644 = vrot.slane %v3639, 4
        %v3645 = vsel %vm911, %v3644, %v3627
        %v3646 = vrot.slane %v3627, 4
        %v3647 = vsel %vm911, %v3639, %v3646
        %v3649 = vunpack.c.l.s4 1934713408
        %v3650 = vunpack.c.0.s8 %v3649
        %v3651 = vperm.slane %v3645, %v3650
        %v3653 = vunpack.c.l.s4 1934713408
        %v3654 = vunpack.c.0.s8 %v3653
        %v3655 = vperm.slane %v3647, %v3654
        %v3656 = vrot.slane %v3643, 4
        %v3657 = vsel %vm911, %v3656, %v3631
        %v3658 = vrot.slane %v3631, 4
        %v3659 = vsel %vm911, %v3643, %v3658
        %v3661 = vunpack.c.l.s4 1934713408
        %v3662 = vunpack.c.0.s8 %v3661
        %v3663 = vperm.slane %v3657, %v3662
        %v3665 = vunpack.c.l.s4 1934713408
        %v3666 = vunpack.c.0.s8 %v3665
        %v3667 = vperm.slane %v3659, %v3666
        %v3668 = vrot.slane %v3651, 4
        %v3669 = vsel %vm911, 0.0, %v3668
        %v3670 = vrot.slane %v3655, 4
        %v3671 = vsel %vm911, 0.0, %v3670
        %v3672 = vrot.slane %v3663, 4
        %v3673 = vsel %vm911, 0.0, %v3672
        %v3674 = vrot.slane %v3667, 4
        %v3675 = vsel %vm911, 0.0, %v3674
        %v3676 = vrot.slane %v3537, 4
        %v3677 = vsel %vm911, %v3676, %v3521
        %v3678 = vrot.slane %v3521, 4
        %v3679 = vsel %vm911, %v3537, %v3678
        %v3681 = vunpack.c.l.s4 1983009808
        %v3682 = vunpack.c.0.s8 %v3681
        %v3683 = vperm.slane %v3677, %v3682
        %v3685 = vunpack.c.l.s4 1983009808
        %v3686 = vunpack.c.0.s8 %v3685
        %v3687 = vperm.slane %v3679, %v3686
        %v3688 = vrot.slane %v3545, 4
        %v3689 = vsel %vm911, %v3688, %v3529
        %v3690 = vrot.slane %v3529, 4
        %v3691 = vsel %vm911, %v3545, %v3690
        %v3693 = vunpack.c.l.s4 1983009808
        %v3694 = vunpack.c.0.s8 %v3693
        %v3695 = vperm.slane %v3689, %v3694
        %v3697 = vunpack.c.l.s4 1983009808
        %v3698 = vunpack.c.0.s8 %v3697
        %v3699 = vperm.slane %v3691, %v3698
        %v3700 = vrot.slane %v3695, 4
        %v3701 = vsel %vm911, %v3700, %v3683
        %v3702 = vrot.slane %v3683, 4
        %v3703 = vsel %vm911, %v3695, %v3702
        %v3705 = vunpack.c.l.s4 1934713408
        %v3706 = vunpack.c.0.s8 %v3705
        %v3707 = vperm.slane %v3701, %v3706
        %v3709 = vunpack.c.l.s4 1934713408
        %v3710 = vunpack.c.0.s8 %v3709
        %v3711 = vperm.slane %v3703, %v3710
        %v3712 = vrot.slane %v3699, 4
        %v3713 = vsel %vm911, %v3712, %v3687
        %v3714 = vrot.slane %v3687, 4
        %v3715 = vsel %vm911, %v3699, %v3714
        %v3717 = vunpack.c.l.s4 1934713408
        %v3718 = vunpack.c.0.s8 %v3717
        %v3719 = vperm.slane %v3713, %v3718
        %v3721 = vunpack.c.l.s4 1934713408
        %v3722 = vunpack.c.0.s8 %v3721
        %v3723 = vperm.slane %v3715, %v3722
        %v3724 = vrot.slane %v3707, 4
        %v3725 = vsel %vm911, 0.0, %v3724
        %v3726 = vrot.slane %v3711, 4
        %v3727 = vsel %vm911, 0.0, %v3726
        %v3728 = vrot.slane %v3719, 4
        %v3729 = vsel %vm911, 0.0, %v3728
        %v3730 = vrot.slane %v3723, 4
        %v3731 = vsel %vm911, 0.0, %v3730
        %v3732 = vrot.slane %v3539, 4
        %v3733 = vsel %vm911, %v3732, %v3523
        %v3734 = vrot.slane %v3523, 4
        %v3735 = vsel %vm911, %v3539, %v3734
        %v3737 = vunpack.c.l.s4 1983009808
        %v3738 = vunpack.c.0.s8 %v3737
        %v3739 = vperm.slane %v3733, %v3738
        %v3741 = vunpack.c.l.s4 1983009808
        %v3742 = vunpack.c.0.s8 %v3741
        %v3743 = vperm.slane %v3735, %v3742
        %v3744 = vrot.slane %v3547, 4
        %v3745 = vsel %vm911, %v3744, %v3531
        %v3746 = vrot.slane %v3531, 4
        %v3747 = vsel %vm911, %v3547, %v3746
        %v3749 = vunpack.c.l.s4 1983009808
        %v3750 = vunpack.c.0.s8 %v3749
        %v3751 = vperm.slane %v3745, %v3750
        %v3753 = vunpack.c.l.s4 1983009808
        %v3754 = vunpack.c.0.s8 %v3753
        %v3755 = vperm.slane %v3747, %v3754
        %v3756 = vrot.slane %v3751, 4
        %v3757 = vsel %vm911, %v3756, %v3739
        %v3758 = vrot.slane %v3739, 4
        %v3759 = vsel %vm911, %v3751, %v3758
        %v3761 = vunpack.c.l.s4 1934713408
        %v3762 = vunpack.c.0.s8 %v3761
        %v3763 = vperm.slane %v3757, %v3762
        %v3765 = vunpack.c.l.s4 1934713408
        %v3766 = vunpack.c.0.s8 %v3765
        %v3767 = vperm.slane %v3759, %v3766
        %v3768 = vrot.slane %v3755, 4
        %v3769 = vsel %vm911, %v3768, %v3743
        %v3770 = vrot.slane %v3743, 4
        %v3771 = vsel %vm911, %v3755, %v3770
        %v3773 = vunpack.c.l.s4 1934713408
        %v3774 = vunpack.c.0.s8 %v3773
        %v3775 = vperm.slane %v3769, %v3774
        %v3777 = vunpack.c.l.s4 1934713408
        %v3778 = vunpack.c.0.s8 %v3777
        %v3779 = vperm.slane %v3771, %v3778
        %v3780 = vrot.slane %v3763, 4
        %v3781 = vsel %vm911, 0.0, %v3780
        %v3782 = vrot.slane %v3767, 4
        %v3783 = vsel %vm911, 0.0, %v3782
        %v3784 = vrot.slane %v3775, 4
        %v3785 = vsel %vm911, 0.0, %v3784
        %v3786 = vrot.slane %v3779, 4
        %v3787 = vsel %vm911, 0.0, %v3786
        %3789 = vrot.lane.b32.xlu0 %v3613, 32
        %v3790 = vpop.permute.xlu0 %3789
        %3793 = vrot.lane.b32.xlu0 %v3599, 64
        %v3794 = vpop.permute.xlu0 %3793
        %3797 = vrot.lane.b32.xlu0 %v3615, 96
        %v3798 = vpop.permute.xlu0 %3797
        %3801 = vrot.lane.b32.xlu0 %v3617, 32
        %v3802 = vpop.permute.xlu0 %3801
        %3805 = vrot.lane.b32.xlu0 %v3611, 64
        %v3806 = vpop.permute.xlu0 %3805
        %3809 = vrot.lane.b32.xlu0 %v3619, 96
        %v3810 = vpop.permute.xlu0 %3809
        %3813 = vrot.lane.b32.xlu0 %v3669, 32
        %v3814 = vpop.permute.xlu0 %3813
        %3817 = vrot.lane.b32.xlu0 %v3655, 64
        %v3818 = vpop.permute.xlu0 %3817
        %3821 = vrot.lane.b32.xlu0 %v3671, 96
        %v3822 = vpop.permute.xlu0 %3821
        %3825 = vrot.lane.b32.xlu0 %v3673, 32
        %v3826 = vpop.permute.xlu0 %3825
        %3829 = vrot.lane.b32.xlu0 %v3667, 64
        %v3830 = vpop.permute.xlu0 %3829
        %3833 = vrot.lane.b32.xlu0 %v3675, 96
        %v3834 = vpop.permute.xlu0 %3833
        %3837 = vrot.lane.b32.xlu0 %v3725, 32
        %v3838 = vpop.permute.xlu0 %3837
        %3841 = vrot.lane.b32.xlu0 %v3711, 64
        %v3842 = vpop.permute.xlu0 %3841
        %3845 = vrot.lane.b32.xlu0 %v3727, 96
        %v3846 = vpop.permute.xlu0 %3845
        %3849 = vrot.lane.b32.xlu0 %v3729, 32
        %v3850 = vpop.permute.xlu0 %3849
        %3853 = vrot.lane.b32.xlu0 %v3723, 64
        %v3854 = vpop.permute.xlu0 %3853
        %3857 = vrot.lane.b32.xlu0 %v3731, 96
        %v3858 = vpop.permute.xlu0 %3857
        %3861 = vrot.lane.b32.xlu0 %v3781, 32
        %v3862 = vpop.permute.xlu0 %3861
        %3865 = vrot.lane.b32.xlu0 %v3767, 64
        %v3866 = vpop.permute.xlu0 %3865
        %3869 = vrot.lane.b32.xlu0 %v3783, 96
        %v3870 = vpop.permute.xlu0 %3869
        %3873 = vrot.lane.b32.xlu0 %v3785, 32
        %v3874 = vpop.permute.xlu0 %3873
        %3877 = vrot.lane.b32.xlu0 %v3779, 64
        %v3878 = vpop.permute.xlu0 %3877
        %3881 = vrot.lane.b32.xlu0 %v3787, 96
        %v3882 = vpop.permute.xlu0 %3881
        %v3884 = vsel %vm1231, %v3595, %v3790
        %v3885 = vsel %vm1233, %v3884, %v3794
        %v3886 = vsel %vm1235, %v3885, %v3798
        %v3887 = vsel %vm1231, %v3607, %v3802
        %v3888 = vsel %vm1233, %v3887, %v3806
        %v3889 = vsel %vm1235, %v3888, %v3810
        %v3890 = vsel %vm1231, %v3651, %v3814
        %v3891 = vsel %vm1233, %v3890, %v3818
        %v3892 = vsel %vm1235, %v3891, %v3822
        %v3893 = vsel %vm1231, %v3663, %v3826
        %v3894 = vsel %vm1233, %v3893, %v3830
        %v3895 = vsel %vm1235, %v3894, %v3834
        %v3896 = vsel %vm1231, %v3707, %v3838
        %v3897 = vsel %vm1233, %v3896, %v3842
        %v3898 = vsel %vm1235, %v3897, %v3846
        %v3899 = vsel %vm1231, %v3719, %v3850
        %v3900 = vsel %vm1233, %v3899, %v3854
        %v3901 = vsel %vm1235, %v3900, %v3858
        %v3902 = vsel %vm1231, %v3763, %v3862
        %v3903 = vsel %vm1233, %v3902, %v3866
        %v3904 = vsel %vm1235, %v3903, %v3870
        %v3905 = vsel %vm1231, %v3775, %v3874
        %v3906 = vsel %vm1233, %v3905, %v3878
        %v3907 = vsel %vm1235, %v3906, %v3882
        %3908 = vst [vmem:[#allocation3 + $0x40] sm:$0xf] %v3886
        %3909 = vst [vmem:[#allocation3 + $0x48] sm:$0xf] %v3889
        %3910 = vst [vmem:[#allocation3 + $0x50] sm:$0xf] %v3892
        %3911 = vst [vmem:[#allocation3 + $0x58] sm:$0xf] %v3895
        %3912 = vst [vmem:[#allocation3 + $0x60] sm:$0xf] %v3898
        %3913 = vst [vmem:[#allocation3 + $0x68] sm:$0xf] %v3901
        %3914 = vst [vmem:[#allocation3 + $0x70] sm:$0xf] %v3904
        %3915 = vst [vmem:[#allocation3 + $0x78] sm:$0xf] %v3907
        %v3920 = vrot.slane %v3480, 1
        %v3921 = vrot.slane %v3481, 1
        %v3922 = vsel %vm1286, %v3920, %v3921
        %v3923 = vrot.slane %v3482, 1
        %v3924 = vsel %vm1286, %v3921, %v3923
        %v3925 = vrot.slane %v3483, 1
        %v3926 = vsel %vm1286, %v3923, %v3925
        %v3927 = vrot.slane %v3484, 1
        %v3928 = vsel %vm1286, %v3925, %v3927
        %v3929 = vrot.slane %v3485, 1
        %v3930 = vrot.slane %v3486, 1
        %v3931 = vsel %vm1286, %v3929, %v3930
        %v3932 = vrot.slane %v3487, 1
        %v3933 = vsel %vm1286, %v3930, %v3932
        %v3934 = vrot.slane %v3488, 1
        %v3935 = vsel %vm1286, %v3932, %v3934
        %v3936 = vrot.slane %v3489, 1
        %v3937 = vsel %vm1286, %v3934, %v3936
        %v3938 = vrot.slane %v3490, 1
        %v3939 = vrot.slane %v3491, 1
        %v3940 = vsel %vm1286, %v3938, %v3939
        %v3941 = vrot.slane %v3492, 1
        %v3942 = vsel %vm1286, %v3939, %v3941
        %v3943 = vrot.slane %v3493, 1
        %v3944 = vsel %vm1286, %v3941, %v3943
        %v3945 = vrot.slane %v3494, 1
        %v3946 = vsel %vm1286, %v3943, %v3945
        %v3947 = vrot.slane %v3495, 1
        %v3948 = vrot.slane %v3496, 1
        %v3949 = vsel %vm1286, %v3947, %v3948
        %v3950 = vrot.slane %v3497, 1
        %v3951 = vsel %vm1286, %v3948, %v3950
        %v3952 = vrot.slane %v3498, 1
        %v3953 = vsel %vm1286, %v3950, %v3952
        %v3954 = vrot.slane %v3499, 1
        %v3955 = vsel %vm1286, %v3952, %v3954
        %3956 = vrot.lane.b32.xlu0 %v3922, 126
        %v3957 = vpop.permute.xlu0 %3956
        %3958 = vrot.lane.b32.xlu0 %v3924, 126
        %v3959 = vpop.permute.xlu0 %3958
        %3960 = vrot.lane.b32.xlu0 %v3926, 126
        %v3961 = vpop.permute.xlu0 %3960
        %3962 = vrot.lane.b32.xlu0 %v3928, 126
        %v3963 = vpop.permute.xlu0 %3962
        %3964 = vrot.lane.b32.xlu0 %v3931, 126
        %v3965 = vpop.permute.xlu0 %3964
        %3966 = vrot.lane.b32.xlu0 %v3933, 126
        %v3967 = vpop.permute.xlu0 %3966
        %3968 = vrot.lane.b32.xlu0 %v3935, 126
        %v3969 = vpop.permute.xlu0 %3968
        %3970 = vrot.lane.b32.xlu0 %v3937, 126
        %v3971 = vpop.permute.xlu0 %3970
        %3972 = vrot.lane.b32.xlu0 %v3940, 126
        %v3973 = vpop.permute.xlu0 %3972
        %3974 = vrot.lane.b32.xlu0 %v3942, 126
        %v3975 = vpop.permute.xlu0 %3974
        %3976 = vrot.lane.b32.xlu0 %v3944, 126
        %v3977 = vpop.permute.xlu0 %3976
        %3978 = vrot.lane.b32.xlu0 %v3946, 126
        %v3979 = vpop.permute.xlu0 %3978
        %3980 = vrot.lane.b32.xlu0 %v3949, 126
        %v3981 = vpop.permute.xlu0 %3980
        %3982 = vrot.lane.b32.xlu0 %v3951, 126
        %v3983 = vpop.permute.xlu0 %3982
        %3984 = vrot.lane.b32.xlu0 %v3953, 126
        %v3985 = vpop.permute.xlu0 %3984
        %3986 = vrot.lane.b32.xlu0 %v3955, 126
        %v3987 = vpop.permute.xlu0 %3986
        %v4004 = vrot.slane %v3973, 4
        %v4005 = vsel %vm911, %v4004, %v3957
        %v4006 = vrot.slane %v3957, 4
        %v4007 = vsel %vm911, %v3973, %v4006
        %v4009 = vunpack.c.l.s4 1983009808
        %v4010 = vunpack.c.0.s8 %v4009
        %v4011 = vperm.slane %v4005, %v4010
        %v4013 = vunpack.c.l.s4 1983009808
        %v4014 = vunpack.c.0.s8 %v4013
        %v4015 = vperm.slane %v4007, %v4014
        %v4016 = vrot.slane %v3981, 4
        %v4017 = vsel %vm911, %v4016, %v3965
        %v4018 = vrot.slane %v3965, 4
        %v4019 = vsel %vm911, %v3981, %v4018
        %v4021 = vunpack.c.l.s4 1983009808
        %v4022 = vunpack.c.0.s8 %v4021
        %v4023 = vperm.slane %v4017, %v4022
        %v4025 = vunpack.c.l.s4 1983009808
        %v4026 = vunpack.c.0.s8 %v4025
        %v4027 = vperm.slane %v4019, %v4026
        %v4028 = vrot.slane %v4023, 4
        %v4029 = vsel %vm911, %v4028, %v4011
        %v4030 = vrot.slane %v4011, 4
        %v4031 = vsel %vm911, %v4023, %v4030
        %v4033 = vunpack.c.l.s4 1934713408
        %v4034 = vunpack.c.0.s8 %v4033
        %v4035 = vperm.slane %v4029, %v4034
        %v4037 = vunpack.c.l.s4 1934713408
        %v4038 = vunpack.c.0.s8 %v4037
        %v4039 = vperm.slane %v4031, %v4038
        %v4040 = vrot.slane %v4027, 4
        %v4041 = vsel %vm911, %v4040, %v4015
        %v4042 = vrot.slane %v4015, 4
        %v4043 = vsel %vm911, %v4027, %v4042
        %v4045 = vunpack.c.l.s4 1934713408
        %v4046 = vunpack.c.0.s8 %v4045
        %v4047 = vperm.slane %v4041, %v4046
        %v4049 = vunpack.c.l.s4 1934713408
        %v4050 = vunpack.c.0.s8 %v4049
        %v4051 = vperm.slane %v4043, %v4050
        %v4052 = vrot.slane %v4035, 4
        %v4053 = vsel %vm911, 0.0, %v4052
        %v4054 = vrot.slane %v4039, 4
        %v4055 = vsel %vm911, 0.0, %v4054
        %v4056 = vrot.slane %v4047, 4
        %v4057 = vsel %vm911, 0.0, %v4056
        %v4058 = vrot.slane %v4051, 4
        %v4059 = vsel %vm911, 0.0, %v4058
        %v4060 = vrot.slane %v3975, 4
        %v4061 = vsel %vm911, %v4060, %v3959
        %v4062 = vrot.slane %v3959, 4
        %v4063 = vsel %vm911, %v3975, %v4062
        %v4065 = vunpack.c.l.s4 1983009808
        %v4066 = vunpack.c.0.s8 %v4065
        %v4067 = vperm.slane %v4061, %v4066
        %v4069 = vunpack.c.l.s4 1983009808
        %v4070 = vunpack.c.0.s8 %v4069
        %v4071 = vperm.slane %v4063, %v4070
        %v4072 = vrot.slane %v3983, 4
        %v4073 = vsel %vm911, %v4072, %v3967
        %v4074 = vrot.slane %v3967, 4
        %v4075 = vsel %vm911, %v3983, %v4074
        %v4077 = vunpack.c.l.s4 1983009808
        %v4078 = vunpack.c.0.s8 %v4077
        %v4079 = vperm.slane %v4073, %v4078
        %v4081 = vunpack.c.l.s4 1983009808
        %v4082 = vunpack.c.0.s8 %v4081
        %v4083 = vperm.slane %v4075, %v4082
        %v4084 = vrot.slane %v4079, 4
        %v4085 = vsel %vm911, %v4084, %v4067
        %v4086 = vrot.slane %v4067, 4
        %v4087 = vsel %vm911, %v4079, %v4086
        %v4089 = vunpack.c.l.s4 1934713408
        %v4090 = vunpack.c.0.s8 %v4089
        %v4091 = vperm.slane %v4085, %v4090
        %v4093 = vunpack.c.l.s4 1934713408
        %v4094 = vunpack.c.0.s8 %v4093
        %v4095 = vperm.slane %v4087, %v4094
        %v4096 = vrot.slane %v4083, 4
        %v4097 = vsel %vm911, %v4096, %v4071
        %v4098 = vrot.slane %v4071, 4
        %v4099 = vsel %vm911, %v4083, %v4098
        %v4101 = vunpack.c.l.s4 1934713408
        %v4102 = vunpack.c.0.s8 %v4101
        %v4103 = vperm.slane %v4097, %v4102
        %v4105 = vunpack.c.l.s4 1934713408
        %v4106 = vunpack.c.0.s8 %v4105
        %v4107 = vperm.slane %v4099, %v4106
        %v4108 = vrot.slane %v4091, 4
        %v4109 = vsel %vm911, 0.0, %v4108
        %v4110 = vrot.slane %v4095, 4
        %v4111 = vsel %vm911, 0.0, %v4110
        %v4112 = vrot.slane %v4103, 4
        %v4113 = vsel %vm911, 0.0, %v4112
        %v4114 = vrot.slane %v4107, 4
        %v4115 = vsel %vm911, 0.0, %v4114
        %v4116 = vrot.slane %v3977, 4
        %v4117 = vsel %vm911, %v4116, %v3961
        %v4118 = vrot.slane %v3961, 4
        %v4119 = vsel %vm911, %v3977, %v4118
        %v4121 = vunpack.c.l.s4 1983009808
        %v4122 = vunpack.c.0.s8 %v4121
        %v4123 = vperm.slane %v4117, %v4122
        %v4125 = vunpack.c.l.s4 1983009808
        %v4126 = vunpack.c.0.s8 %v4125
        %v4127 = vperm.slane %v4119, %v4126
        %v4128 = vrot.slane %v3985, 4
        %v4129 = vsel %vm911, %v4128, %v3969
        %v4130 = vrot.slane %v3969, 4
        %v4131 = vsel %vm911, %v3985, %v4130
        %v4133 = vunpack.c.l.s4 1983009808
        %v4134 = vunpack.c.0.s8 %v4133
        %v4135 = vperm.slane %v4129, %v4134
        %v4137 = vunpack.c.l.s4 1983009808
        %v4138 = vunpack.c.0.s8 %v4137
        %v4139 = vperm.slane %v4131, %v4138
        %v4140 = vrot.slane %v4135, 4
        %v4141 = vsel %vm911, %v4140, %v4123
        %v4142 = vrot.slane %v4123, 4
        %v4143 = vsel %vm911, %v4135, %v4142
        %v4145 = vunpack.c.l.s4 1934713408
        %v4146 = vunpack.c.0.s8 %v4145
        %v4147 = vperm.slane %v4141, %v4146
        %v4149 = vunpack.c.l.s4 1934713408
        %v4150 = vunpack.c.0.s8 %v4149
        %v4151 = vperm.slane %v4143, %v4150
        %v4152 = vrot.slane %v4139, 4
        %v4153 = vsel %vm911, %v4152, %v4127
        %v4154 = vrot.slane %v4127, 4
        %v4155 = vsel %vm911, %v4139, %v4154
        %v4157 = vunpack.c.l.s4 1934713408
        %v4158 = vunpack.c.0.s8 %v4157
        %v4159 = vperm.slane %v4153, %v4158
        %v4161 = vunpack.c.l.s4 1934713408
        %v4162 = vunpack.c.0.s8 %v4161
        %v4163 = vperm.slane %v4155, %v4162
        %v4164 = vrot.slane %v4147, 4
        %v4165 = vsel %vm911, 0.0, %v4164
        %v4166 = vrot.slane %v4151, 4
        %v4167 = vsel %vm911, 0.0, %v4166
        %v4168 = vrot.slane %v4159, 4
        %v4169 = vsel %vm911, 0.0, %v4168
        %v4170 = vrot.slane %v4163, 4
        %v4171 = vsel %vm911, 0.0, %v4170
        %v4172 = vrot.slane %v3979, 4
        %v4173 = vsel %vm911, %v4172, %v3963
        %v4174 = vrot.slane %v3963, 4
        %v4175 = vsel %vm911, %v3979, %v4174
        %v4177 = vunpack.c.l.s4 1983009808
        %v4178 = vunpack.c.0.s8 %v4177
        %v4179 = vperm.slane %v4173, %v4178
        %v4181 = vunpack.c.l.s4 1983009808
        %v4182 = vunpack.c.0.s8 %v4181
        %v4183 = vperm.slane %v4175, %v4182
        %v4184 = vrot.slane %v3987, 4
        %v4185 = vsel %vm911, %v4184, %v3971
        %v4186 = vrot.slane %v3971, 4
        %v4187 = vsel %vm911, %v3987, %v4186
        %v4189 = vunpack.c.l.s4 1983009808
        %v4190 = vunpack.c.0.s8 %v4189
        %v4191 = vperm.slane %v4185, %v4190
        %v4193 = vunpack.c.l.s4 1983009808
        %v4194 = vunpack.c.0.s8 %v4193
        %v4195 = vperm.slane %v4187, %v4194
        %v4196 = vrot.slane %v4191, 4
        %v4197 = vsel %vm911, %v4196, %v4179
        %v4198 = vrot.slane %v4179, 4
        %v4199 = vsel %vm911, %v4191, %v4198
        %v4201 = vunpack.c.l.s4 1934713408
        %v4202 = vunpack.c.0.s8 %v4201
        %v4203 = vperm.slane %v4197, %v4202
        %v4205 = vunpack.c.l.s4 1934713408
        %v4206 = vunpack.c.0.s8 %v4205
        %v4207 = vperm.slane %v4199, %v4206
        %v4208 = vrot.slane %v4195, 4
        %v4209 = vsel %vm911, %v4208, %v4183
        %v4210 = vrot.slane %v4183, 4
        %v4211 = vsel %vm911, %v4195, %v4210
        %v4213 = vunpack.c.l.s4 1934713408
        %v4214 = vunpack.c.0.s8 %v4213
        %v4215 = vperm.slane %v4209, %v4214
        %v4217 = vunpack.c.l.s4 1934713408
        %v4218 = vunpack.c.0.s8 %v4217
        %v4219 = vperm.slane %v4211, %v4218
        %v4220 = vrot.slane %v4203, 4
        %v4221 = vsel %vm911, 0.0, %v4220
        %v4222 = vrot.slane %v4207, 4
        %v4223 = vsel %vm911, 0.0, %v4222
        %v4224 = vrot.slane %v4215, 4
        %v4225 = vsel %vm911, 0.0, %v4224
        %v4226 = vrot.slane %v4219, 4
        %v4227 = vsel %vm911, 0.0, %v4226
        %4229 = vrot.lane.b32.xlu0 %v4053, 32
        %v4230 = vpop.permute.xlu0 %4229
        %4233 = vrot.lane.b32.xlu0 %v4039, 64
        %v4234 = vpop.permute.xlu0 %4233
        %4237 = vrot.lane.b32.xlu0 %v4055, 96
        %v4238 = vpop.permute.xlu0 %4237
        %4241 = vrot.lane.b32.xlu0 %v4057, 32
        %v4242 = vpop.permute.xlu0 %4241
        %4245 = vrot.lane.b32.xlu0 %v4051, 64
        %v4246 = vpop.permute.xlu0 %4245
        %4249 = vrot.lane.b32.xlu0 %v4059, 96
        %v4250 = vpop.permute.xlu0 %4249
        %4253 = vrot.lane.b32.xlu0 %v4109, 32
        %v4254 = vpop.permute.xlu0 %4253
        %4257 = vrot.lane.b32.xlu0 %v4095, 64
        %v4258 = vpop.permute.xlu0 %4257
        %4261 = vrot.lane.b32.xlu0 %v4111, 96
        %v4262 = vpop.permute.xlu0 %4261
        %4265 = vrot.lane.b32.xlu0 %v4113, 32
        %v4266 = vpop.permute.xlu0 %4265
        %4269 = vrot.lane.b32.xlu0 %v4107, 64
        %v4270 = vpop.permute.xlu0 %4269
        %4273 = vrot.lane.b32.xlu0 %v4115, 96
        %v4274 = vpop.permute.xlu0 %4273
        %4277 = vrot.lane.b32.xlu0 %v4165, 32
        %v4278 = vpop.permute.xlu0 %4277
        %4281 = vrot.lane.b32.xlu0 %v4151, 64
        %v4282 = vpop.permute.xlu0 %4281
        %4285 = vrot.lane.b32.xlu0 %v4167, 96
        %v4286 = vpop.permute.xlu0 %4285
        %4289 = vrot.lane.b32.xlu0 %v4169, 32
        %v4290 = vpop.permute.xlu0 %4289
        %4293 = vrot.lane.b32.xlu0 %v4163, 64
        %v4294 = vpop.permute.xlu0 %4293
        %4297 = vrot.lane.b32.xlu0 %v4171, 96
        %v4298 = vpop.permute.xlu0 %4297
        %4301 = vrot.lane.b32.xlu0 %v4221, 32
        %v4302 = vpop.permute.xlu0 %4301
        %4305 = vrot.lane.b32.xlu0 %v4207, 64
        %v4306 = vpop.permute.xlu0 %4305
        %4309 = vrot.lane.b32.xlu0 %v4223, 96
        %v4310 = vpop.permute.xlu0 %4309
        %4313 = vrot.lane.b32.xlu0 %v4225, 32
        %v4314 = vpop.permute.xlu0 %4313
        %4317 = vrot.lane.b32.xlu0 %v4219, 64
        %v4318 = vpop.permute.xlu0 %4317
        %4321 = vrot.lane.b32.xlu0 %v4227, 96
        %v4322 = vpop.permute.xlu0 %4321
        %v4324 = vsel %vm1231, %v4035, %v4230
        %v4325 = vsel %vm1233, %v4324, %v4234
        %v4326 = vsel %vm1235, %v4325, %v4238
        %v4327 = vsel %vm1231, %v4047, %v4242
        %v4328 = vsel %vm1233, %v4327, %v4246
        %v4329 = vsel %vm1235, %v4328, %v4250
        %v4330 = vsel %vm1231, %v4091, %v4254
        %v4331 = vsel %vm1233, %v4330, %v4258
        %v4332 = vsel %vm1235, %v4331, %v4262
        %v4333 = vsel %vm1231, %v4103, %v4266
        %v4334 = vsel %vm1233, %v4333, %v4270
        %v4335 = vsel %vm1235, %v4334, %v4274
        %v4336 = vsel %vm1231, %v4147, %v4278
        %v4337 = vsel %vm1233, %v4336, %v4282
        %v4338 = vsel %vm1235, %v4337, %v4286
        %v4339 = vsel %vm1231, %v4159, %v4290
        %v4340 = vsel %vm1233, %v4339, %v4294
        %v4341 = vsel %vm1235, %v4340, %v4298
        %v4342 = vsel %vm1231, %v4203, %v4302
        %v4343 = vsel %vm1233, %v4342, %v4306
        %v4344 = vsel %vm1235, %v4343, %v4310
        %v4345 = vsel %vm1231, %v4215, %v4314
        %v4346 = vsel %vm1233, %v4345, %v4318
        %v4347 = vsel %vm1235, %v4346, %v4322
        %v4356 = vrot.slane %v4326, 4
        %v4357 = vrot.slane %v4329, 4
        %v4358 = vrot.slane %v4332, 4
        %v4359 = vrot.slane %v4335, 4
        %v4360 = vrot.slane %v4338, 4
        %v4361 = vrot.slane %v4341, 4
        %v4362 = vrot.slane %v4344, 4
        %v4363 = vrot.slane %v4347, 4
        %4372 = vst [vmem:[#allocation3 + $0x80] sm:$0xf0] %v4356
        %4373 = vst [vmem:[#allocation3 + $0x88] sm:$0xf0] %v4357
        %4374 = vst [vmem:[#allocation3 + $0x90] sm:$0xf0] %v4358
        %4375 = vst [vmem:[#allocation3 + $0x98] sm:$0xf0] %v4359
        %4376 = vst [vmem:[#allocation3 + $0xa0] sm:$0xf0] %v4360
        %4377 = vst [vmem:[#allocation3 + $0xa8] sm:$0xf0] %v4361
        %4378 = vst [vmem:[#allocation3 + $0xb0] sm:$0xf0] %v4362
        %4379 = vst [vmem:[#allocation3 + $0xb8] sm:$0xf0] %v4363
        %v4380 = vrot.slane %v3480, 2
        %v4381 = vrot.slane %v3481, 2
        %v4382 = vsel %vm1715, %v4380, %v4381
        %v4383 = vrot.slane %v3482, 2
        %v4384 = vsel %vm1715, %v4381, %v4383
        %v4385 = vrot.slane %v3483, 2
        %v4386 = vsel %vm1715, %v4383, %v4385
        %v4387 = vrot.slane %v3484, 2
        %v4388 = vsel %vm1715, %v4385, %v4387
        %v4389 = vrot.slane %v3485, 2
        %v4390 = vrot.slane %v3486, 2
        %v4391 = vsel %vm1715, %v4389, %v4390
        %v4392 = vrot.slane %v3487, 2
        %v4393 = vsel %vm1715, %v4390, %v4392
        %v4394 = vrot.slane %v3488, 2
        %v4395 = vsel %vm1715, %v4392, %v4394
        %v4396 = vrot.slane %v3489, 2
        %v4397 = vsel %vm1715, %v4394, %v4396
        %v4398 = vrot.slane %v3490, 2
        %v4399 = vrot.slane %v3491, 2
        %v4400 = vsel %vm1715, %v4398, %v4399
        %v4401 = vrot.slane %v3492, 2
        %v4402 = vsel %vm1715, %v4399, %v4401
        %v4403 = vrot.slane %v3493, 2
        %v4404 = vsel %vm1715, %v4401, %v4403
        %v4405 = vrot.slane %v3494, 2
        %v4406 = vsel %vm1715, %v4403, %v4405
        %v4407 = vrot.slane %v3495, 2
        %v4408 = vrot.slane %v3496, 2
        %v4409 = vsel %vm1715, %v4407, %v4408
        %v4410 = vrot.slane %v3497, 2
        %v4411 = vsel %vm1715, %v4408, %v4410
        %v4412 = vrot.slane %v3498, 2
        %v4413 = vsel %vm1715, %v4410, %v4412
        %v4414 = vrot.slane %v3499, 2
        %v4415 = vsel %vm1715, %v4412, %v4414
        %4416 = vrot.lane.b32.xlu0 %v4382, 126
        %v4417 = vpop.permute.xlu0 %4416
        %4418 = vrot.lane.b32.xlu0 %v4384, 126
        %v4419 = vpop.permute.xlu0 %4418
        %4420 = vrot.lane.b32.xlu0 %v4386, 126
        %v4421 = vpop.permute.xlu0 %4420
        %4422 = vrot.lane.b32.xlu0 %v4388, 126
        %v4423 = vpop.permute.xlu0 %4422
        %4424 = vrot.lane.b32.xlu0 %v4391, 126
        %v4425 = vpop.permute.xlu0 %4424
        %4426 = vrot.lane.b32.xlu0 %v4393, 126
        %v4427 = vpop.permute.xlu0 %4426
        %4428 = vrot.lane.b32.xlu0 %v4395, 126
        %v4429 = vpop.permute.xlu0 %4428
        %4430 = vrot.lane.b32.xlu0 %v4397, 126
        %v4431 = vpop.permute.xlu0 %4430
        %4432 = vrot.lane.b32.xlu0 %v4400, 126
        %v4433 = vpop.permute.xlu0 %4432
        %4434 = vrot.lane.b32.xlu0 %v4402, 126
        %v4435 = vpop.permute.xlu0 %4434
        %4436 = vrot.lane.b32.xlu0 %v4404, 126
        %v4437 = vpop.permute.xlu0 %4436
        %4438 = vrot.lane.b32.xlu0 %v4406, 126
        %v4439 = vpop.permute.xlu0 %4438
        %4440 = vrot.lane.b32.xlu0 %v4409, 126
        %v4441 = vpop.permute.xlu0 %4440
        %4442 = vrot.lane.b32.xlu0 %v4411, 126
        %v4443 = vpop.permute.xlu0 %4442
        %4444 = vrot.lane.b32.xlu0 %v4413, 126
        %v4445 = vpop.permute.xlu0 %4444
        %4446 = vrot.lane.b32.xlu0 %v4415, 126
        %v4447 = vpop.permute.xlu0 %4446
        %v4464 = vrot.slane %v4433, 4
        %v4465 = vsel %vm911, %v4464, %v4417
        %v4466 = vrot.slane %v4417, 4
        %v4467 = vsel %vm911, %v4433, %v4466
        %v4469 = vunpack.c.l.s4 1983009808
        %v4470 = vunpack.c.0.s8 %v4469
        %v4471 = vperm.slane %v4465, %v4470
        %v4473 = vunpack.c.l.s4 1983009808
        %v4474 = vunpack.c.0.s8 %v4473
        %v4475 = vperm.slane %v4467, %v4474
        %v4476 = vrot.slane %v4441, 4
        %v4477 = vsel %vm911, %v4476, %v4425
        %v4478 = vrot.slane %v4425, 4
        %v4479 = vsel %vm911, %v4441, %v4478
        %v4481 = vunpack.c.l.s4 1983009808
        %v4482 = vunpack.c.0.s8 %v4481
        %v4483 = vperm.slane %v4477, %v4482
        %v4485 = vunpack.c.l.s4 1983009808
        %v4486 = vunpack.c.0.s8 %v4485
        %v4487 = vperm.slane %v4479, %v4486
        %v4488 = vrot.slane %v4483, 4
        %v4489 = vsel %vm911, %v4488, %v4471
        %v4490 = vrot.slane %v4471, 4
        %v4491 = vsel %vm911, %v4483, %v4490
        %v4493 = vunpack.c.l.s4 1934713408
        %v4494 = vunpack.c.0.s8 %v4493
        %v4495 = vperm.slane %v4489, %v4494
        %v4497 = vunpack.c.l.s4 1934713408
        %v4498 = vunpack.c.0.s8 %v4497
        %v4499 = vperm.slane %v4491, %v4498
        %v4500 = vrot.slane %v4487, 4
        %v4501 = vsel %vm911, %v4500, %v4475
        %v4502 = vrot.slane %v4475, 4
        %v4503 = vsel %vm911, %v4487, %v4502
        %v4505 = vunpack.c.l.s4 1934713408
        %v4506 = vunpack.c.0.s8 %v4505
        %v4507 = vperm.slane %v4501, %v4506
        %v4509 = vunpack.c.l.s4 1934713408
        %v4510 = vunpack.c.0.s8 %v4509
        %v4511 = vperm.slane %v4503, %v4510
        %v4512 = vrot.slane %v4495, 4
        %v4513 = vsel %vm911, 0.0, %v4512
        %v4514 = vrot.slane %v4499, 4
        %v4515 = vsel %vm911, 0.0, %v4514
        %v4516 = vrot.slane %v4507, 4
        %v4517 = vsel %vm911, 0.0, %v4516
        %v4518 = vrot.slane %v4511, 4
        %v4519 = vsel %vm911, 0.0, %v4518
        %v4520 = vrot.slane %v4435, 4
        %v4521 = vsel %vm911, %v4520, %v4419
        %v4522 = vrot.slane %v4419, 4
        %v4523 = vsel %vm911, %v4435, %v4522
        %v4525 = vunpack.c.l.s4 1983009808
        %v4526 = vunpack.c.0.s8 %v4525
        %v4527 = vperm.slane %v4521, %v4526
        %v4529 = vunpack.c.l.s4 1983009808
        %v4530 = vunpack.c.0.s8 %v4529
        %v4531 = vperm.slane %v4523, %v4530
        %v4532 = vrot.slane %v4443, 4
        %v4533 = vsel %vm911, %v4532, %v4427
        %v4534 = vrot.slane %v4427, 4
        %v4535 = vsel %vm911, %v4443, %v4534
        %v4537 = vunpack.c.l.s4 1983009808
        %v4538 = vunpack.c.0.s8 %v4537
        %v4539 = vperm.slane %v4533, %v4538
        %v4541 = vunpack.c.l.s4 1983009808
        %v4542 = vunpack.c.0.s8 %v4541
        %v4543 = vperm.slane %v4535, %v4542
        %v4544 = vrot.slane %v4539, 4
        %v4545 = vsel %vm911, %v4544, %v4527
        %v4546 = vrot.slane %v4527, 4
        %v4547 = vsel %vm911, %v4539, %v4546
        %v4549 = vunpack.c.l.s4 1934713408
        %v4550 = vunpack.c.0.s8 %v4549
        %v4551 = vperm.slane %v4545, %v4550
        %v4553 = vunpack.c.l.s4 1934713408
        %v4554 = vunpack.c.0.s8 %v4553
        %v4555 = vperm.slane %v4547, %v4554
        %v4556 = vrot.slane %v4543, 4
        %v4557 = vsel %vm911, %v4556, %v4531
        %v4558 = vrot.slane %v4531, 4
        %v4559 = vsel %vm911, %v4543, %v4558
        %v4561 = vunpack.c.l.s4 1934713408
        %v4562 = vunpack.c.0.s8 %v4561
        %v4563 = vperm.slane %v4557, %v4562
        %v4565 = vunpack.c.l.s4 1934713408
        %v4566 = vunpack.c.0.s8 %v4565
        %v4567 = vperm.slane %v4559, %v4566
        %v4568 = vrot.slane %v4551, 4
        %v4569 = vsel %vm911, 0.0, %v4568
        %v4570 = vrot.slane %v4555, 4
        %v4571 = vsel %vm911, 0.0, %v4570
        %v4572 = vrot.slane %v4563, 4
        %v4573 = vsel %vm911, 0.0, %v4572
        %v4574 = vrot.slane %v4567, 4
        %v4575 = vsel %vm911, 0.0, %v4574
        %v4576 = vrot.slane %v4437, 4
        %v4577 = vsel %vm911, %v4576, %v4421
        %v4578 = vrot.slane %v4421, 4
        %v4579 = vsel %vm911, %v4437, %v4578
        %v4581 = vunpack.c.l.s4 1983009808
        %v4582 = vunpack.c.0.s8 %v4581
        %v4583 = vperm.slane %v4577, %v4582
        %v4585 = vunpack.c.l.s4 1983009808
        %v4586 = vunpack.c.0.s8 %v4585
        %v4587 = vperm.slane %v4579, %v4586
        %v4588 = vrot.slane %v4445, 4
        %v4589 = vsel %vm911, %v4588, %v4429
        %v4590 = vrot.slane %v4429, 4
        %v4591 = vsel %vm911, %v4445, %v4590
        %v4593 = vunpack.c.l.s4 1983009808
        %v4594 = vunpack.c.0.s8 %v4593
        %v4595 = vperm.slane %v4589, %v4594
        %v4597 = vunpack.c.l.s4 1983009808
        %v4598 = vunpack.c.0.s8 %v4597
        %v4599 = vperm.slane %v4591, %v4598
        %v4600 = vrot.slane %v4595, 4
        %v4601 = vsel %vm911, %v4600, %v4583
        %v4602 = vrot.slane %v4583, 4
        %v4603 = vsel %vm911, %v4595, %v4602
        %v4605 = vunpack.c.l.s4 1934713408
        %v4606 = vunpack.c.0.s8 %v4605
        %v4607 = vperm.slane %v4601, %v4606
        %v4609 = vunpack.c.l.s4 1934713408
        %v4610 = vunpack.c.0.s8 %v4609
        %v4611 = vperm.slane %v4603, %v4610
        %v4612 = vrot.slane %v4599, 4
        %v4613 = vsel %vm911, %v4612, %v4587
        %v4614 = vrot.slane %v4587, 4
        %v4615 = vsel %vm911, %v4599, %v4614
        %v4617 = vunpack.c.l.s4 1934713408
        %v4618 = vunpack.c.0.s8 %v4617
        %v4619 = vperm.slane %v4613, %v4618
        %v4621 = vunpack.c.l.s4 1934713408
        %v4622 = vunpack.c.0.s8 %v4621
        %v4623 = vperm.slane %v4615, %v4622
        %v4624 = vrot.slane %v4607, 4
        %v4625 = vsel %vm911, 0.0, %v4624
        %v4626 = vrot.slane %v4611, 4
        %v4627 = vsel %vm911, 0.0, %v4626
        %v4628 = vrot.slane %v4619, 4
        %v4629 = vsel %vm911, 0.0, %v4628
        %v4630 = vrot.slane %v4623, 4
        %v4631 = vsel %vm911, 0.0, %v4630
        %v4632 = vrot.slane %v4439, 4
        %v4633 = vsel %vm911, %v4632, %v4423
        %v4634 = vrot.slane %v4423, 4
        %v4635 = vsel %vm911, %v4439, %v4634
        %v4637 = vunpack.c.l.s4 1983009808
        %v4638 = vunpack.c.0.s8 %v4637
        %v4639 = vperm.slane %v4633, %v4638
        %v4641 = vunpack.c.l.s4 1983009808
        %v4642 = vunpack.c.0.s8 %v4641
        %v4643 = vperm.slane %v4635, %v4642
        %v4644 = vrot.slane %v4447, 4
        %v4645 = vsel %vm911, %v4644, %v4431
        %v4646 = vrot.slane %v4431, 4
        %v4647 = vsel %vm911, %v4447, %v4646
        %v4649 = vunpack.c.l.s4 1983009808
        %v4650 = vunpack.c.0.s8 %v4649
        %v4651 = vperm.slane %v4645, %v4650
        %v4653 = vunpack.c.l.s4 1983009808
        %v4654 = vunpack.c.0.s8 %v4653
        %v4655 = vperm.slane %v4647, %v4654
        %v4656 = vrot.slane %v4651, 4
        %v4657 = vsel %vm911, %v4656, %v4639
        %v4658 = vrot.slane %v4639, 4
        %v4659 = vsel %vm911, %v4651, %v4658
        %v4661 = vunpack.c.l.s4 1934713408
        %v4662 = vunpack.c.0.s8 %v4661
        %v4663 = vperm.slane %v4657, %v4662
        %v4665 = vunpack.c.l.s4 1934713408
        %v4666 = vunpack.c.0.s8 %v4665
        %v4667 = vperm.slane %v4659, %v4666
        %v4668 = vrot.slane %v4655, 4
        %v4669 = vsel %vm911, %v4668, %v4643
        %v4670 = vrot.slane %v4643, 4
        %v4671 = vsel %vm911, %v4655, %v4670
        %v4673 = vunpack.c.l.s4 1934713408
        %v4674 = vunpack.c.0.s8 %v4673
        %v4675 = vperm.slane %v4669, %v4674
        %v4677 = vunpack.c.l.s4 1934713408
        %v4678 = vunpack.c.0.s8 %v4677
        %v4679 = vperm.slane %v4671, %v4678
        %v4680 = vrot.slane %v4663, 4
        %v4681 = vsel %vm911, 0.0, %v4680
        %v4682 = vrot.slane %v4667, 4
        %v4683 = vsel %vm911, 0.0, %v4682
        %v4684 = vrot.slane %v4675, 4
        %v4685 = vsel %vm911, 0.0, %v4684
        %v4686 = vrot.slane %v4679, 4
        %v4687 = vsel %vm911, 0.0, %v4686
        %4689 = vrot.lane.b32.xlu0 %v4513, 32
        %v4690 = vpop.permute.xlu0 %4689
        %4693 = vrot.lane.b32.xlu0 %v4499, 64
        %v4694 = vpop.permute.xlu0 %4693
        %4697 = vrot.lane.b32.xlu0 %v4515, 96
        %v4698 = vpop.permute.xlu0 %4697
        %4701 = vrot.lane.b32.xlu0 %v4517, 32
        %v4702 = vpop.permute.xlu0 %4701
        %4705 = vrot.lane.b32.xlu0 %v4511, 64
        %v4706 = vpop.permute.xlu0 %4705
        %4709 = vrot.lane.b32.xlu0 %v4519, 96
        %v4710 = vpop.permute.xlu0 %4709
        %4713 = vrot.lane.b32.xlu0 %v4569, 32
        %v4714 = vpop.permute.xlu0 %4713
        %4717 = vrot.lane.b32.xlu0 %v4555, 64
        %v4718 = vpop.permute.xlu0 %4717
        %4721 = vrot.lane.b32.xlu0 %v4571, 96
        %v4722 = vpop.permute.xlu0 %4721
        %4725 = vrot.lane.b32.xlu0 %v4573, 32
        %v4726 = vpop.permute.xlu0 %4725
        %4729 = vrot.lane.b32.xlu0 %v4567, 64
        %v4730 = vpop.permute.xlu0 %4729
        %4733 = vrot.lane.b32.xlu0 %v4575, 96
        %v4734 = vpop.permute.xlu0 %4733
        %4737 = vrot.lane.b32.xlu0 %v4625, 32
        %v4738 = vpop.permute.xlu0 %4737
        %4741 = vrot.lane.b32.xlu0 %v4611, 64
        %v4742 = vpop.permute.xlu0 %4741
        %4745 = vrot.lane.b32.xlu0 %v4627, 96
        %v4746 = vpop.permute.xlu0 %4745
        %4749 = vrot.lane.b32.xlu0 %v4629, 32
        %v4750 = vpop.permute.xlu0 %4749
        %4753 = vrot.lane.b32.xlu0 %v4623, 64
        %v4754 = vpop.permute.xlu0 %4753
        %4757 = vrot.lane.b32.xlu0 %v4631, 96
        %v4758 = vpop.permute.xlu0 %4757
        %4761 = vrot.lane.b32.xlu0 %v4681, 32
        %v4762 = vpop.permute.xlu0 %4761
        %4765 = vrot.lane.b32.xlu0 %v4667, 64
        %v4766 = vpop.permute.xlu0 %4765
        %4769 = vrot.lane.b32.xlu0 %v4683, 96
        %v4770 = vpop.permute.xlu0 %4769
        %4773 = vrot.lane.b32.xlu0 %v4685, 32
        %v4774 = vpop.permute.xlu0 %4773
        %4777 = vrot.lane.b32.xlu0 %v4679, 64
        %v4778 = vpop.permute.xlu0 %4777
        %4781 = vrot.lane.b32.xlu0 %v4687, 96
        %v4782 = vpop.permute.xlu0 %4781
        %v4784 = vsel %vm1231, %v4495, %v4690
        %v4785 = vsel %vm1233, %v4784, %v4694
        %v4786 = vsel %vm1235, %v4785, %v4698
        %v4787 = vsel %vm1231, %v4507, %v4702
        %v4788 = vsel %vm1233, %v4787, %v4706
        %v4789 = vsel %vm1235, %v4788, %v4710
        %v4790 = vsel %vm1231, %v4551, %v4714
        %v4791 = vsel %vm1233, %v4790, %v4718
        %v4792 = vsel %vm1235, %v4791, %v4722
        %v4793 = vsel %vm1231, %v4563, %v4726
        %v4794 = vsel %vm1233, %v4793, %v4730
        %v4795 = vsel %vm1235, %v4794, %v4734
        %v4796 = vsel %vm1231, %v4607, %v4738
        %v4797 = vsel %vm1233, %v4796, %v4742
        %v4798 = vsel %vm1235, %v4797, %v4746
        %v4799 = vsel %vm1231, %v4619, %v4750
        %v4800 = vsel %vm1233, %v4799, %v4754
        %v4801 = vsel %vm1235, %v4800, %v4758
        %v4802 = vsel %vm1231, %v4663, %v4762
        %v4803 = vsel %vm1233, %v4802, %v4766
        %v4804 = vsel %vm1235, %v4803, %v4770
        %v4805 = vsel %vm1231, %v4675, %v4774
        %v4806 = vsel %vm1233, %v4805, %v4778
        %v4807 = vsel %vm1235, %v4806, %v4782
        %4808 = vst [vmem:[#allocation3 + $0x100] sm:$0xf] %v4786
        %4809 = vst [vmem:[#allocation3 + $0x108] sm:$0xf] %v4789
        %4810 = vst [vmem:[#allocation3 + $0x110] sm:$0xf] %v4792
        %4811 = vst [vmem:[#allocation3 + $0x118] sm:$0xf] %v4795
        %4812 = vst [vmem:[#allocation3 + $0x120] sm:$0xf] %v4798
        %4813 = vst [vmem:[#allocation3 + $0x128] sm:$0xf] %v4801
        %4814 = vst [vmem:[#allocation3 + $0x130] sm:$0xf] %v4804
        %4815 = vst [vmem:[#allocation3 + $0x138] sm:$0xf] %v4807
        %v4816 = vld [vmem:[%s1] sm:$0xff]
        %v4817 = vld [vmem:[#allocation3] sm:$0xff]
        %v4818 = vld [vmem:[#allocation3 + $0x8] sm:$0xff]
        %v4819 = vld [vmem:[#allocation3 + $0x10] sm:$0xff]
        %v4820 = vld [vmem:[#allocation3 + $0x18] sm:$0xff]
        %v4821 = vld [vmem:[#allocation3 + $0x20] sm:$0xff]
        %v4822 = vld [vmem:[#allocation3 + $0x28] sm:$0xff]
        %v4823 = vld [vmem:[#allocation3 + $0x30] sm:$0xff]
        %v4824 = vld [vmem:[#allocation3 + $0x38] sm:$0xff]
        %v4825 = vld [vmem:[#allocation3 + $0x40] sm:$0xff]
        %v4826 = vld [vmem:[#allocation3 + $0x48] sm:$0xff]
        %v4827 = vld [vmem:[#allocation3 + $0x50] sm:$0xff]
        %v4828 = vld [vmem:[#allocation3 + $0x58] sm:$0xff]
        %v4829 = vld [vmem:[#allocation3 + $0x60] sm:$0xff]
        %v4830 = vld [vmem:[#allocation3 + $0x68] sm:$0xff]
        %v4831 = vld [vmem:[#allocation3 + $0x70] sm:$0xff]
        %v4832 = vld [vmem:[#allocation3 + $0x78] sm:$0xff]
        %v4833 = vld [vmem:[#allocation3 + $0x80] sm:$0xff]
        %v4834 = vld [vmem:[#allocation3 + $0x88] sm:$0xff]
        %v4835 = vld [vmem:[#allocation3 + $0x90] sm:$0xff]
        %v4836 = vld [vmem:[#allocation3 + $0x98] sm:$0xff]
        %v4837 = vld [vmem:[#allocation3 + $0xa0] sm:$0xff]
        %v4838 = vld [vmem:[#allocation3 + $0xa8] sm:$0xff]
        %v4839 = vld [vmem:[#allocation3 + $0xb0] sm:$0xff]
        %v4840 = vld [vmem:[#allocation3 + $0xb8] sm:$0xff]
        %v4841 = vld [vmem:[#allocation3 + $0xc0] sm:$0xff]
        %v4842 = vld [vmem:[#allocation3 + $0xc8] sm:$0xff]
        %v4843 = vld [vmem:[#allocation3 + $0xd0] sm:$0xff]
        %v4844 = vld [vmem:[#allocation3 + $0xd8] sm:$0xff]
        %v4845 = vld [vmem:[#allocation3 + $0xe0] sm:$0xff]
        %v4846 = vld [vmem:[#allocation3 + $0xe8] sm:$0xff]
        %v4847 = vld [vmem:[#allocation3 + $0xf0] sm:$0xff]
        %v4848 = vld [vmem:[#allocation3 + $0xf8] sm:$0xff]
        %v4849 = vld [vmem:[#allocation3 + $0x100] sm:$0xf]
        %v4850 = vld [vmem:[#allocation3 + $0x108] sm:$0xf]
        %v4851 = vld [vmem:[#allocation3 + $0x110] sm:$0xf]
        %v4852 = vld [vmem:[#allocation3 + $0x118] sm:$0xf]
        %v4853 = vld [vmem:[#allocation3 + $0x120] sm:$0xf]
        %v4854 = vld [vmem:[#allocation3 + $0x128] sm:$0xf]
        %v4855 = vld [vmem:[#allocation3 + $0x130] sm:$0xf]
        %v4856 = vld [vmem:[#allocation3 + $0x138] sm:$0xf]
        %v4857 = vld [vmem:[%s2] sm:$0xff]
        %4859 = vset.pattern.permute.xlu0 0
        %4860 = vperm.xlu0 %4859, %v4857
        %v4861 = vpop.permute.xlu0 %4860
        %vm4863 = vcmask 293888
        %v4865 = vsel %vm4863, %v4816, 0
        %vm4867 = vcmask 1043456
        %v4869 = vsel %vm4867, %v4849, 0
        %v4872 = vsel %vm4867, %v4850, 0
        %v4875 = vsel %vm4867, %v4851, 0
        %v4878 = vsel %vm4867, %v4852, 0
        %v4881 = vsel %vm4867, %v4853, 0
        %v4884 = vsel %vm4867, %v4854, 0
        %v4887 = vsel %vm4867, %v4855, 0
        %v4890 = vsel %vm4867, %v4856, 0
        %4892 = vmatpush.msra.mxu0 0.0
        %4893 = vmatpush.msra.mxu0 0.0
        %4894 = vmatpush.msra.mxu0 0.0
        %4895 = vmatpush.msra.mxu0 0.0
        %4896 = vmatpush.msra.mxu0 0.0
        %4897 = vmatpush.msra.mxu0 0.0
        %4898 = vmatpush.msra.mxu0 0.0
        %4899 = vmatpush.msra.mxu0 0.0
        %4900 = vmatpush.msra.mxu0 0.0
        %4901 = vmatpush.msra.mxu0 0.0
        %4902 = vmatpush.msra.mxu0 0.0
        %4903 = vmatpush.msra.mxu0 %v4869
        %4904 = vmatpush.msra.mxu0 %v4841
        %4905 = vmatpush.msra.mxu0 %v4833
        %4906 = vmatpush.msra.mxu0 %v4825
        %4907 = vmatpush.msra.mxu0 %v4817
        %4908 = vmatmul.f32.gmra.mxu0 %v4865
        %v4909 = vpop.f32.mrf.mxu0
        %v4910 = vadd.f32 %v4861, %v4909
        %4911 = vdwg.mxu0
        %4912 = vmatpush.msra.mxu0 0.0
        %4913 = vmatpush.msra.mxu0 0.0
        %4914 = vmatpush.msra.mxu0 0.0
        %4915 = vmatpush.msra.mxu0 0.0
        %4916 = vmatpush.msra.mxu0 0.0
        %4917 = vmatpush.msra.mxu0 0.0
        %4918 = vmatpush.msra.mxu0 0.0
        %4919 = vmatpush.msra.mxu0 0.0
        %4920 = vmatpush.msra.mxu0 0.0
        %4921 = vmatpush.msra.mxu0 0.0
        %4922 = vmatpush.msra.mxu0 0.0
        %4923 = vmatpush.msra.mxu0 %v4872
        %4924 = vmatpush.msra.mxu0 %v4842
        %4925 = vmatpush.msra.mxu0 %v4834
        %4926 = vmatpush.msra.mxu0 %v4826
        %4927 = vmatpush.msra.mxu0 %v4818
        %4928 = vmatmul.f32.gmra.mxu0 %v4865
        %v4929 = vpop.f32.mrf.mxu0
        %v4930 = vadd.f32 %v4861, %v4929
        %4931 = vdwg.mxu0
        %4932 = vmatpush.msra.mxu0 0.0
        %4933 = vmatpush.msra.mxu0 0.0
        %4934 = vmatpush.msra.mxu0 0.0
        %4935 = vmatpush.msra.mxu0 0.0
        %4936 = vmatpush.msra.mxu0 0.0
        %4937 = vmatpush.msra.mxu0 0.0
        %4938 = vmatpush.msra.mxu0 0.0
        %4939 = vmatpush.msra.mxu0 0.0
        %4940 = vmatpush.msra.mxu0 0.0
        %4941 = vmatpush.msra.mxu0 0.0
        %4942 = vmatpush.msra.mxu0 0.0
        %4943 = vmatpush.msra.mxu0 %v4875
        %4944 = vmatpush.msra.mxu0 %v4843
        %4945 = vmatpush.msra.mxu0 %v4835
        %4946 = vmatpush.msra.mxu0 %v4827
        %4947 = vmatpush.msra.mxu0 %v4819
        %4948 = vmatmul.f32.gmra.mxu0 %v4865
        %v4949 = vpop.f32.mrf.mxu0
        %v4950 = vadd.f32 %v4861, %v4949
        %4951 = vdwg.mxu0
        %4952 = vmatpush.msra.mxu0 0.0
        %4953 = vmatpush.msra.mxu0 0.0
        %4954 = vmatpush.msra.mxu0 0.0
        %4955 = vmatpush.msra.mxu0 0.0
        %4956 = vmatpush.msra.mxu0 0.0
        %4957 = vmatpush.msra.mxu0 0.0
        %4958 = vmatpush.msra.mxu0 0.0
        %4959 = vmatpush.msra.mxu0 0.0
        %4960 = vmatpush.msra.mxu0 0.0
        %4961 = vmatpush.msra.mxu0 0.0
        %4962 = vmatpush.msra.mxu0 0.0
        %4963 = vmatpush.msra.mxu0 %v4878
        %4964 = vmatpush.msra.mxu0 %v4844
        %4965 = vmatpush.msra.mxu0 %v4836
        %4966 = vmatpush.msra.mxu0 %v4828
        %4967 = vmatpush.msra.mxu0 %v4820
        %4968 = vmatmul.f32.gmra.mxu0 %v4865
        %v4969 = vpop.f32.mrf.mxu0
        %v4970 = vadd.f32 %v4861, %v4969
        %4971 = vdwg.mxu0
        %4972 = vmatpush.msra.mxu0 0.0
        %4973 = vmatpush.msra.mxu0 0.0
        %4974 = vmatpush.msra.mxu0 0.0
        %4975 = vmatpush.msra.mxu0 0.0
        %4976 = vmatpush.msra.mxu0 0.0
        %4977 = vmatpush.msra.mxu0 0.0
        %4978 = vmatpush.msra.mxu0 0.0
        %4979 = vmatpush.msra.mxu0 0.0
        %4980 = vmatpush.msra.mxu0 0.0
        %4981 = vmatpush.msra.mxu0 0.0
        %4982 = vmatpush.msra.mxu0 0.0
        %4983 = vmatpush.msra.mxu0 %v4881
        %4984 = vmatpush.msra.mxu0 %v4845
        %4985 = vmatpush.msra.mxu0 %v4837
        %4986 = vmatpush.msra.mxu0 %v4829
        %4987 = vmatpush.msra.mxu0 %v4821
        %4988 = vmatmul.f32.gmra.mxu0 %v4865
        %v4989 = vpop.f32.mrf.mxu0
        %v4990 = vadd.f32 %v4861, %v4989
        %4991 = vdwg.mxu0
        %4992 = vmatpush.msra.mxu0 0.0
        %4993 = vmatpush.msra.mxu0 0.0
        %4994 = vmatpush.msra.mxu0 0.0
        %4995 = vmatpush.msra.mxu0 0.0
        %4996 = vmatpush.msra.mxu0 0.0
        %4997 = vmatpush.msra.mxu0 0.0
        %4998 = vmatpush.msra.mxu0 0.0
        %4999 = vmatpush.msra.mxu0 0.0
        %5000 = vmatpush.msra.mxu0 0.0
        %5001 = vmatpush.msra.mxu0 0.0
        %5002 = vmatpush.msra.mxu0 0.0
        %5003 = vmatpush.msra.mxu0 %v4884
        %5004 = vmatpush.msra.mxu0 %v4846
        %5005 = vmatpush.msra.mxu0 %v4838
        %5006 = vmatpush.msra.mxu0 %v4830
        %5007 = vmatpush.msra.mxu0 %v4822
        %5008 = vmatmul.f32.gmra.mxu0 %v4865
        %v5009 = vpop.f32.mrf.mxu0
        %v5010 = vadd.f32 %v4861, %v5009
        %5011 = vdwg.mxu0
        %5012 = vmatpush.msra.mxu0 0.0
        %5013 = vmatpush.msra.mxu0 0.0
        %5014 = vmatpush.msra.mxu0 0.0
        %5015 = vmatpush.msra.mxu0 0.0
        %5016 = vmatpush.msra.mxu0 0.0
        %5017 = vmatpush.msra.mxu0 0.0
        %5018 = vmatpush.msra.mxu0 0.0
        %5019 = vmatpush.msra.mxu0 0.0
        %5020 = vmatpush.msra.mxu0 0.0
        %5021 = vmatpush.msra.mxu0 0.0
        %5022 = vmatpush.msra.mxu0 0.0
        %5023 = vmatpush.msra.mxu0 %v4887
        %5024 = vmatpush.msra.mxu0 %v4847
        %5025 = vmatpush.msra.mxu0 %v4839
        %5026 = vmatpush.msra.mxu0 %v4831
        %5027 = vmatpush.msra.mxu0 %v4823
        %5028 = vmatmul.f32.gmra.mxu0 %v4865
        %v5029 = vpop.f32.mrf.mxu0
        %v5030 = vadd.f32 %v4861, %v5029
        %5031 = vdwg.mxu0
        %5032 = vmatpush.msra.mxu0 0.0
        %5033 = vmatpush.msra.mxu0 0.0
        %5034 = vmatpush.msra.mxu0 0.0
        %5035 = vmatpush.msra.mxu0 0.0
        %5036 = vmatpush.msra.mxu0 0.0
        %5037 = vmatpush.msra.mxu0 0.0
        %5038 = vmatpush.msra.mxu0 0.0
        %5039 = vmatpush.msra.mxu0 0.0
        %5040 = vmatpush.msra.mxu0 0.0
        %5041 = vmatpush.msra.mxu0 0.0
        %5042 = vmatpush.msra.mxu0 0.0
        %5043 = vmatpush.msra.mxu0 %v4890
        %5044 = vmatpush.msra.mxu0 %v4848
        %5045 = vmatpush.msra.mxu0 %v4840
        %5046 = vmatpush.msra.mxu0 %v4832
        %5047 = vmatpush.msra.mxu0 %v4824
        %5048 = vmatmul.f32.gmra.mxu0 %v4865
        %v5049 = vpop.f32.mrf.mxu0
        %v5050 = vadd.f32 %v4861, %v5049
        %5051 = vdwg.mxu0
        %5052 = vst [vmem:[%s248] sm:$0xff] %v4910
        %5053 = vst [vmem:[%s248 + $0x8] sm:$0xff] %v4930
        %5054 = vst [vmem:[%s248 + $0x10] sm:$0xff] %v4950
        %5055 = vst [vmem:[%s248 + $0x18] sm:$0xff] %v4970
        %5056 = vst [vmem:[%s248 + $0x20] sm:$0xff] %v4990
        %5057 = vst [vmem:[%s248 + $0x28] sm:$0xff] %v5010
        %5058 = vst [vmem:[%s248 + $0x30] sm:$0xff] %v5030
        %5059 = vst [vmem:[%s248 + $0x38] sm:$0xff] %v5050
        %s5060 = sand.u32 %s133, 1
        %s5061 = scalar_lea.sflag [#allocation6], %s5060
        %s5062 = sand.u32 %s133, 1
        %s5063 = smul.addr %s5062, 64
        %s5064 = scalar_lea.vmem [#allocation9], %s5063
        // Predicated region
        $region49: #{tpu_custom_call.1} parent=35 // pred_check
          %p5065 = pneg %p143
        $region50: #{tpu_custom_call.1} parent=35 // pred_check_branch
          %5067 = sbr.rel (%p5065) target = $region52
        $region51: #{tpu_custom_call.1} parent=35 // pred_region
          %s5068 = smul.u32 8, %s27
          %5070 = vsyncadd %s5061, 0
          %s5071 = smul.addr %s26, 8
          %s5072 = sadd.s32 %s5068, %s5071
          %s5073 = smul.addr %s5072, 8
          %s5074 = scalar_lea.hbm %s4, %s5073
          %s5076 = sshll.u32 %s5064, 4
          %s5077 = int_to_ptr.vmem [resolvable:$true] %s5076
          %s5078 = sshll.u32 %s5074, 4
          %s5079 = int_to_ptr.hbm [resolvable:$true] %s5078
          %5081 = dma.vmem_to_hbm [thread:$0]  %s5077, 1024, %s5079, %s5061
        $region52: #{tpu_custom_call.1} parent=35 // pred_fallthru
          _
      $region36: #{tpu_custom_call.1} parent=5 // pred_fallthru
        _
      %p5082 = scmp.le.s32.totalorder 2, %s17
      // Predicated region
      $region53: #{tpu_custom_call.1} parent=5 // pred_check
        %p5083 = pneg %p5082
      $region54: #{tpu_custom_call.1} parent=5 // pred_check_branch
        %5085 = sbr.rel (%p5083) target = $region56
      $region55: #{tpu_custom_call.1} parent=5 // pred_region
        %s5086 = ssub.s32 %s17, 2
        // Predicated region
        $region57: #{tpu_custom_call.1} parent=55 // pred_check
          %p5087 = pneg %p149
        $region58: #{tpu_custom_call.1} parent=55 // pred_check_branch
          %5089 = sbr.rel (%p5087) target = $region60
        $region59: #{tpu_custom_call.1} parent=55 // pred_region
          %s5090 = sand.u32 %s134, 1
          %s5091 = scalar_lea.sflag [#allocation6], %s5090
          %s5092 = sand.u32 %s134, 1
          %s5093 = smul.addr %s5092, 64
          %s5094 = scalar_lea.vmem [#allocation9], %s5093
          %5096 = dma.done %s5091, 1024
        $region60: #{tpu_custom_call.1} parent=55 // pred_fallthru
          _
      $region56: #{tpu_custom_call.1} parent=5 // pred_fallthru
        _
    $region6: #{tpu_custom_call.1} parent=1 // loop_footer
      %s21 = sadd.s32 1, %s17
    $region7: #{tpu_custom_call.1} parent=1 // loop_footer_branch
      %16 = sbr.rel target = $region3
    $region8: #{tpu_custom_call.1} parent=1 // loop_exit
      _
    %5097 = vsyncpa [#allocation5], 1
    %s5098 = scalar_lea.sflag [#allocation5], 1
    %5099 = vsyncpa %s5098, 1
    %5100 = vsyncpa [#allocation8], 1
    %5101 = vsyncpa [#allocation6], 1
    %s5102 = scalar_lea.sflag [#allocation6], 1
    %5103 = vsyncpa %s5102, 1

</llo_original>
